<compile_context>
chip_gen: v7x
topology: tpu7x:2x2x1
jax: 0.10.0
libtpu: 0.0.40
codegen_flags: <defaults>
</compile_context>

<pallas_src>
import jax
import jax.numpy as jnp
from jax import lax
from jax.experimental import pallas as pl
from jax.experimental.pallas import tpu as pltpu

C_PAD = 128  # lane-dense padded class dimension


def _make_kernel(b_tile, s_tile, vocab):
    """Fused: (gather -> masked sum) accumulated over seq, then pooler + head."""

    def kernel(lens_ref,          # VMEM  [b_tile, 1]          int32
               ids_ref,           # VMEM  [b_tile, s_tile]     int32
               sel_ref,           # VMEM  [b_tile, b_tile*s_tile] bf16 (resident)
               table_ref,         # VMEM  [V, H]               bf16 (resident)
               wp_ref, bp_ref,    # VMEM  [H, H], [1, H]       f32  (resident)
               wo_ref, bo_ref,    # VMEM  [H, C_PAD], [1, C_PAD] f32 (resident)
               out_ref,           # VMEM  [b_tile, C_PAD]      f32
               acc_ref,           # VMEM scratch [b_tile, H]   f32
               cnt_ref):          # VMEM scratch [b_tile, 1]   f32
        s_idx = pl.program_id(1)

        @pl.when(s_idx == 0)
        def _init():
            acc_ref[...] = jnp.zeros_like(acc_ref)
            cnt_ref[...] = jnp.zeros_like(cnt_ref)

        # Vectorized prefix-mask rebuild: one broadcast compare against the
        # [b_tile,1] length block (no per-row loop / concatenate).
        col = lax.broadcasted_iota(jnp.int32, (b_tile, s_tile), 1) + s_idx * s_tile
        valid = col < lens_ref[...]                              # [b_tile, s_tile] bool

        # Invalid positions -> id -1 (matches no vocab row => zero one-hot row).
        # TODO(synk): malformed ids (>= vocab or negative) silently map to a
        # zero embedding here; a real lookup would gather arbitrary rows.
        ids = jnp.where(valid, ids_ref[...], -1)                 # [b_tile, s_tile]

        # One-hot in the table's storage dtype (bf16), laid out [(b*s), V].
        # Lane-iota only ([1,1,V]); the reshape merges leading dims and leaves
        # the lane dim untouched, so it is a free relayout.
        vocab_iota = lax.broadcasted_iota(jnp.int32, (1, 1, vocab), 2)
        onehot = (ids[:, :, None] == vocab_iota).astype(table_ref.dtype)
        onehot = onehot.reshape(b_tile * s_tile, vocab)          # [(b*s), V]

        # Per-row token counts via MXU block-diagonal contraction (replaces the
        # former 3-D sublane/XLU reduce).  0/1 operands, f32 accumulation -> exact.
        counts = jnp.dot(sel_ref[...], onehot,
                         preferred_element_type=jnp.float32)     # [b_tile, V]

        if s_tile <= 256:
            # Integer counts <= 256 are exact in bf16 -> pure-bf16 MXU pass.
            acc_ref[...] += jnp.dot(counts.astype(table_ref.dtype), table_ref[...],
                                    preferred_element_type=jnp.float32)
        else:
            # Keep counts exact in f32 when a token could repeat > 256 times.
            acc_ref[...] += jnp.dot(counts, table_ref[...].astype(jnp.float32),
                                    preferred_element_type=jnp.float32)
        cnt_ref[...] += jnp.sum(valid.astype(jnp.float32), axis=1, keepdims=True)

        @pl.when(s_idx == pl.num_programs(1) - 1)
        def _finalize():
            denom = jnp.maximum(cnt_ref[...], 1.0)
            pooled = acc_ref[...] / denom                        # exact divide, once/tile
            # BERT pooler: tanh(pooled @ Wp + bp)
            h = jnp.tanh(
                jnp.dot(pooled, wp_ref[...], preferred_element_type=jnp.float32)
                + bp_ref[...])
            # dropout(p=0.3): identity in eval mode.
            # TODO(synk): train-mode dropout needs pltpu.prng_seed/prng_random_bits.
            out_ref[...] = (
                jnp.dot(h, wo_ref[...], preferred_element_type=jnp.float32)
                + bo_ref[...])

    return kernel


def text_classifier_forward(input_ids, attention_mask, params, *,
                            b_tile=None, s_tile=None,
                            vmem_limit_bytes=32 * 1024 * 1024):
    """Forward pass of TextClassifier with the hot path fused in one Pallas kernel."""
    B, S = input_ids.shape
    V, H = params["emb_table"].shape
    C = params["b_out"].shape[-1]

    if b_tile is None:
        # Fill the MXU M dimension; on v7x prefer b_tile <= B // 2 (when B >= 16)
        # so the "parallel" batch axis has >= 2 steps for both TensorCores.
        b_tile = min(B, 128)
    if s_tile is None:
        s_tile = min(S, 512)

    assert B % b_tile == 0 and S % s_tile == 0, "shapes must tile evenly"
    assert b_tile % 8 == 0 and s_tile % 128 == 0 and H % 128 == 0
    assert C <= C_PAD

    # Per-row valid-token counts (standard right-padded prefix masks assumed),
    # passed as a [B, 1] int32 VMEM input (no [B, S] mask tensor streamed).
    lens = jnp.sum(attention_mask.astype(jnp.int32), axis=1).reshape(B, 1)

    table = params["emb_table"]                                   # [V, H] bf16
    wp = params["w_pool"].astype(jnp.float32)                     # [H, H]
    bp = params["b_pool"].astype(jnp.float32).reshape(1, H)       # [1, H]
    # Lane-dense classifier head: zero-pad n_classes -> C_PAD.
    wo = jnp.zeros((H, C_PAD), jnp.float32).at[:, :C].set(params["w_out"])
    bo = jnp.zeros((1, C_PAD), jnp.float32).at[:, :C].set(params["b_out"][None, :])

    # Host-built block-diagonal selector (grid-step invariant -> VMEM resident).
    sel = (jnp.arange(b_tile)[:, None]
           == (jnp.arange(b_tile * s_tile)[None, :] // s_tile)).astype(table.dtype)

    kernel = _make_kernel(b_tile, s_tile, V)
    grid = (B // b_tile, S // s_tile)

    out_padded = pl.pallas_call(
        kernel,
        out_shape=jax.ShapeDtypeStruct((B, C_PAD), jnp.float32),
        grid_spec=pltpu.PrefetchScalarGridSpec(
            num_scalar_prefetch=0,
            grid=grid,
            in_specs=[
                pl.BlockSpec((b_tile, 1),       lambda b, s: (b, 0)),   # lens
                pl.BlockSpec((b_tile, s_tile),  lambda b, s: (b, s)),   # ids
                pl.BlockSpec((b_tile, b_tile * s_tile),
                             lambda b, s: (0, 0)),                      # selector
                pl.BlockSpec((V, H),            lambda b, s: (0, 0)),   # table
                pl.BlockSpec((H, H),            lambda b, s: (0, 0)),   # w_pool
                pl.BlockSpec((1, H),            lambda b, s: (0, 0)),   # b_pool
                pl.BlockSpec((H, C_PAD),        lambda b, s: (0, 0)),   # w_out
                pl.BlockSpec((1, C_PAD),        lambda b, s: (0, 0)),   # b_out
            ],
            out_specs=pl.BlockSpec((b_tile, C_PAD), lambda b, s: (b, 0)),
            scratch_shapes=[
                pltpu.VMEM((b_tile, H), jnp.float32),   # masked-sum accumulator
                pltpu.VMEM((b_tile, 1), jnp.float32),   # valid-token counter
            ],
        ),
        compiler_params=pltpu.CompilerParams(
            dimension_semantics=("parallel", "arbitrary"),
            vmem_limit_bytes=vmem_limit_bytes,
        ),
    )(lens, input_ids.astype(jnp.int32), sel, table, wp, bp, wo, bo)

    return out_padded[:, :C]


if __name__ == "__main__":
    # Small but hardware-aligned shapes (sublane=8, lane=128 multiples).
    B, S = 16, 512         # batch, sequence length
    V, H = 512, 128        # vocab size, hidden size
    C = 4                  # n_classes

    key = jax.random.PRNGKey(0)
    k_emb, k_wp, k_bp, k_wo, k_bo, k_ids, k_len = jax.random.split(key, 7)

    params = {
        "emb_table": (0.02 * jax.random.normal(k_emb, (V, H), jnp.float32)
                      ).astype(jnp.bfloat16),
        "w_pool":    0.02 * jax.random.normal(k_wp, (H, H), jnp.float32),
        "b_pool":    0.02 * jax.random.normal(k_bp, (H,), jnp.float32),
        "w_out":     0.02 * jax.random.normal(k_wo, (H, C), jnp.float32),
        "b_out":     0.02 * jax.random.normal(k_bo, (C,), jnp.float32),
    }

    input_ids = jax.random.randint(k_ids, (B, S), 0, V, dtype=jnp.int32)
    # attention_mask: first `len` tokens valid per row (right padding).
    lens = jax.random.randint(k_len, (B,), 1, S + 1, dtype=jnp.int32)
    attention_mask = (jnp.arange(S)[None, :] < lens[:, None]).astype(jnp.int32)

    # b_tile=8, s_tile=256 -> grid (2, 2): two "parallel" batch steps (keeps both
    # v7x TensorCores busy) and two seq steps (exercises the accumulator path).
    logits = text_classifier_forward(input_ids, attention_mask, params,
                                     b_tile=8, s_tile=256)
    jax.block_until_ready(logits)

    # Pure-JAX reference (gather + masked mean + tanh pooler + linear head).
    table_f32 = params["emb_table"].astype(jnp.float32)
    emb = table_f32[input_ids]
    m = attention_mask.astype(jnp.float32)
    pooled = (emb * m[:, :, None]).sum(1) / jnp.maximum(m.sum(1, keepdims=True), 1.0)
    h = jnp.tanh(pooled @ params["w_pool"] + params["b_pool"])
    ref = h @ params["w_out"] + params["b_out"]

    assert logits.shape == (B, C)
    # Tolerance tightened now that the mean-pool divide is exact.
    assert jnp.allclose(logits, ref, atol=3e-4, rtol=3e-3), \
        float(jnp.max(jnp.abs(logits - ref)))

    print("KERNEL_OK")
</pallas_src>

<mosaic_0001>
module attributes {stable_mosaic.version = 11 : i64} {
  func.func @kernel(%arg0: i32, %arg1: i32, %arg2: memref<8x1xi32, #tpu.memory_space<vmem>>, %arg3: memref<8x256xi32, #tpu.memory_space<vmem>>, %arg4: memref<8x2048xbf16, #tpu.memory_space<vmem>>, %arg5: memref<512x128xbf16, #tpu.memory_space<vmem>>, %arg6: memref<128x128xf32, #tpu.memory_space<vmem>>, %arg7: memref<1x128xf32, #tpu.memory_space<vmem>>, %arg8: memref<128x128xf32, #tpu.memory_space<vmem>>, %arg9: memref<1x128xf32, #tpu.memory_space<vmem>>, %arg10: memref<8x128xf32, #tpu.memory_space<vmem>>, %arg11: memref<8x128xf32, #tpu.memory_space<vmem>>, %arg12: memref<8x1xf32, #tpu.memory_space<vmem>>) attributes {dimension_semantics = [#tpu.dimension_semantics<parallel>, #tpu.dimension_semantics<arbitrary>], iteration_bounds = array<i64: 2, 2>, scalar_prefetch = 0 : i64, scratch_operands = 2 : i64, tpu.core_type = #tpu.core_type<tc>, window_params = [{transform_indices = @transform_0, window_bounds = array<i64: 8, 1>}, {transform_indices = @transform_1, window_bounds = array<i64: 8, 256>}, {pipeline_mode = #tpu.pipeline_mode<synchronous>, transform_indices = @transform_2, window_bounds = array<i64: 8, 2048>}, {pipeline_mode = #tpu.pipeline_mode<synchronous>, transform_indices = @transform_3, window_bounds = array<i64: 512, 128>}, {pipeline_mode = #tpu.pipeline_mode<synchronous>, transform_indices = @transform_4, window_bounds = array<i64: 128, 128>}, {pipeline_mode = #tpu.pipeline_mode<synchronous>, transform_indices = @transform_5, window_bounds = array<i64: 1, 128>}, {pipeline_mode = #tpu.pipeline_mode<synchronous>, transform_indices = @transform_6, window_bounds = array<i64: 128, 128>}, {pipeline_mode = #tpu.pipeline_mode<synchronous>, transform_indices = @transform_7, window_bounds = array<i64: 1, 128>}, {transform_indices = @transform_8, window_bounds = array<i64: 8, 128>}]} {
    %c0_i32 = arith.constant 0 : i32
    %0 = arith.cmpi eq, %arg1, %c0_i32 : i32
    %1 = arith.extui %0 : i1 to i32
    %c0_i32_0 = arith.constant 0 : i32
    %2 = arith.cmpi ne, %1, %c0_i32_0 : i32
    scf.if %2 {
      %cst_19 = arith.constant 0.000000e+00 : f32
      %40 = vector.broadcast %cst_19 : f32 to vector<8x128xf32>
      %c0_20 = arith.constant 0 : index
      %c0_21 = arith.constant 0 : index
      %41 = vector.load %arg11[%c0_20, %c0_21] : memref<8x128xf32, #tpu.memory_space<vmem>>, vector<8x128xf32>
      tpu.vector_store %arg11[%c0_20, %c0_21], %40 {strides = array<i32>} : memref<8x128xf32, #tpu.memory_space<vmem>>, vector<8x128xf32>,
      %cst_22 = arith.constant 0.000000e+00 : f32
      %42 = vector.broadcast %cst_22 : f32 to vector<8x1xf32>
      %c0_23 = arith.constant 0 : index
      %c0_24 = arith.constant 0 : index
      %43 = vector.load %arg12[%c0_23, %c0_24] : memref<8x1xf32, #tpu.memory_space<vmem>>, vector<8x1xf32>
      tpu.vector_store %arg12[%c0_23, %c0_24], %42 {strides = array<i32>} : memref<8x1xf32, #tpu.memory_space<vmem>>, vector<8x1xf32>,
    } else {
    }
    %3 = tpu.iota {dimensions = array<i32: 1>} : vector<8x256xi32>
    %c256_i32 = arith.constant 256 : i32
    %4 = arith.muli %arg1, %c256_i32 : i32
    %5 = vector.broadcast %4 : i32 to vector<8x256xi32>
    %6 = arith.addi %3, %5 : vector<8x256xi32>
    %c0 = arith.constant 0 : index
    %c0_1 = arith.constant 0 : index
    %7 = vector.load %arg2[%c0, %c0_1] : memref<8x1xi32, #tpu.memory_space<vmem>>, vector<8x1xi32>
    %8 = vector.broadcast %7 : vector<8x1xi32> to vector<8x256xi32>
    %9 = arith.cmpi slt, %6, %8 : vector<8x256xi32>
    %c0_2 = arith.constant 0 : index
    %c0_3 = arith.constant 0 : index
    %10 = vector.load %arg3[%c0_2, %c0_3] : memref<8x256xi32, #tpu.memory_space<vmem>>, vector<8x256xi32>
    %c-1_i32 = arith.constant -1 : i32
    %11 = vector.broadcast %c-1_i32 : i32 to vector<8x256xi32>
    %12 = arith.select %9, %10, %11 : vector<8x256xi1>, vector<8x256xi32>
    %13 = tpu.iota {dimensions = array<i32: 2>} : vector<1x1x512xi32>
    %14 = vector.shape_cast %12 : vector<8x256xi32> to vector<8x256x1xi32>
    %15 = vector.broadcast %14 : vector<8x256x1xi32> to vector<8x256x512xi32>
    %16 = vector.broadcast %13 : vector<1x1x512xi32> to vector<8x256x512xi32>
    %17 = arith.cmpi eq, %15, %16 : vector<8x256x512xi32>
    %18 = arith.extui %17 : vector<8x256x512xi1> to vector<8x256x512xi32>
    %19 = arith.sitofp %18 : vector<8x256x512xi32> to vector<8x256x512xf32>
    %20 = arith.truncf %19 : vector<8x256x512xf32> to vector<8x256x512xbf16>
    %21 = vector.shape_cast %20 : vector<8x256x512xbf16> to vector<2048x512xbf16>
    %c0_4 = arith.constant 0 : index
    %c0_5 = arith.constant 0 : index
    %22 = vector.load %arg4[%c0_4, %c0_5] : memref<8x2048xbf16, #tpu.memory_space<vmem>>, vector<8x2048xbf16>
    %cst = arith.constant dense<0.000000e+00> : vector<8x512xf32>
    %23 = tpu.matmul %22, %21, %cst {dimension_numbers = #tpu.dot_dimension_numbers<[1], [0], [0], [1], [0, 0, 1, 1], [], []>} : vector<8x2048xbf16>, vector<2048x512xbf16>, vector<8x512xf32> -> vector<8x512xf32>
    %c0_6 = arith.constant 0 : index
    %c0_7 = arith.constant 0 : index
    %24 = vector.load %arg11[%c0_6, %c0_7] : memref<8x128xf32, #tpu.memory_space<vmem>>, vector<8x128xf32>
    %25 = arith.truncf %23 : vector<8x512xf32> to vector<8x512xbf16>
    %c0_8 = arith.constant 0 : index
    %c0_9 = arith.constant 0 : index
    %26 = vector.load %arg5[%c0_8, %c0_9] : memref<512x128xbf16, #tpu.memory_space<vmem>>, vector<512x128xbf16>
    %cst_10 = arith.constant dense<0.000000e+00> : vector<8x128xf32>
    %27 = tpu.matmul %25, %26, %cst_10 {dimension_numbers = #tpu.dot_dimension_numbers<[1], [0], [0], [1], [0, 0, 1, 1], [], []>} : vector<8x512xbf16>, vector<512x128xbf16>, vector<8x128xf32> -> vector<8x128xf32>
    %28 = arith.addf %24, %27 : vector<8x128xf32>
    %c0_11 = arith.constant 0 : index
    %c0_12 = arith.constant 0 : index
    %29 = vector.load %arg11[%c0_11, %c0_12] : memref<8x128xf32, #tpu.memory_space<vmem>>, vector<8x128xf32>
    tpu.vector_store %arg11[%c0_11, %c0_12], %28 {strides = array<i32>} : memref<8x128xf32, #tpu.memory_space<vmem>>, vector<8x128xf32>,
    %c0_13 = arith.constant 0 : index
    %c0_14 = arith.constant 0 : index
    %30 = vector.load %arg12[%c0_13, %c0_14] : memref<8x1xf32, #tpu.memory_space<vmem>>, vector<8x1xf32>
    %31 = arith.extui %9 : vector<8x256xi1> to vector<8x256xi32>
    %32 = arith.sitofp %31 : vector<8x256xi32> to vector<8x256xf32>
    %cst_15 = arith.constant dense<0.000000e+00> : vector<8xf32>
    %33 = vector.multi_reduction <add>, %32, %cst_15 [1] : vector<8x256xf32> to vector<8xf32>
    %34 = vector.shape_cast %33 : vector<8xf32> to vector<8x1xf32>
    %35 = arith.addf %30, %34 : vector<8x1xf32>
    %c0_16 = arith.constant 0 : index
    %c0_17 = arith.constant 0 : index
    %36 = vector.load %arg12[%c0_16, %c0_17] : memref<8x1xf32, #tpu.memory_space<vmem>>, vector<8x1xf32>
    tpu.vector_store %arg12[%c0_16, %c0_17], %35 {strides = array<i32>} : memref<8x1xf32, #tpu.memory_space<vmem>>, vector<8x1xf32>,
    %c1_i32 = arith.constant 1 : i32
    %37 = arith.cmpi eq, %arg1, %c1_i32 : i32
    %38 = arith.extui %37 : i1 to i32
    %c0_i32_18 = arith.constant 0 : i32
    %39 = arith.cmpi ne, %38, %c0_i32_18 : i32
    scf.if %39 {
      %c0_19 = arith.constant 0 : index
      %c0_20 = arith.constant 0 : index
      %40 = vector.load %arg12[%c0_19, %c0_20] : memref<8x1xf32, #tpu.memory_space<vmem>>, vector<8x1xf32>
      %cst_21 = arith.constant 1.000000e+00 : f32
      %41 = vector.broadcast %cst_21 : f32 to vector<8x1xf32>
      %42 = arith.maximumf %40, %41 : vector<8x1xf32>
      %c0_22 = arith.constant 0 : index
      %c0_23 = arith.constant 0 : index
      %43 = vector.load %arg11[%c0_22, %c0_23] : memref<8x128xf32, #tpu.memory_space<vmem>>, vector<8x128xf32>
      %44 = vector.broadcast %42 : vector<8x1xf32> to vector<8x128xf32>
      %45 = arith.divf %43, %44 : vector<8x128xf32>
      %c0_24 = arith.constant 0 : index
      %c0_25 = arith.constant 0 : index
      %46 = vector.load %arg6[%c0_24, %c0_25] : memref<128x128xf32, #tpu.memory_space<vmem>>, vector<128x128xf32>
      %cst_26 = arith.constant dense<0.000000e+00> : vector<8x128xf32>
      %47 = tpu.matmul %45, %46, %cst_26 {dimension_numbers = #tpu.dot_dimension_numbers<[1], [0], [0], [1], [0, 0, 1, 1], [], []>} : vector<8x128xf32>, vector<128x128xf32>, vector<8x128xf32> -> vector<8x128xf32>
      %c0_27 = arith.constant 0 : index
      %c0_28 = arith.constant 0 : index
      %48 = vector.load %arg7[%c0_27, %c0_28] : memref<1x128xf32, #tpu.memory_space<vmem>>, vector<1x128xf32>
      %49 = vector.broadcast %48 : vector<1x128xf32> to vector<8x128xf32>
      %50 = arith.addf %47, %49 : vector<8x128xf32>
      %51 = math.tanh %50 : vector<8x128xf32>
      %c0_29 = arith.constant 0 : index
      %c0_30 = arith.constant 0 : index
      %52 = vector.load %arg8[%c0_29, %c0_30] : memref<128x128xf32, #tpu.memory_space<vmem>>, vector<128x128xf32>
      %cst_31 = arith.constant dense<0.000000e+00> : vector<8x128xf32>
      %53 = tpu.matmul %51, %52, %cst_31 {dimension_numbers = #tpu.dot_dimension_numbers<[1], [0], [0], [1], [0, 0, 1, 1], [], []>} : vector<8x128xf32>, vector<128x128xf32>, vector<8x128xf32> -> vector<8x128xf32>
      %c0_32 = arith.constant 0 : index
      %c0_33 = arith.constant 0 : index
      %54 = vector.load %arg9[%c0_32, %c0_33] : memref<1x128xf32, #tpu.memory_space<vmem>>, vector<1x128xf32>
      %55 = vector.broadcast %54 : vector<1x128xf32> to vector<8x128xf32>
      %56 = arith.addf %53, %55 : vector<8x128xf32>
      %c0_34 = arith.constant 0 : index
      %c0_35 = arith.constant 0 : index
      %57 = vector.load %arg10[%c0_34, %c0_35] : memref<8x128xf32, #tpu.memory_space<vmem>>, vector<8x128xf32>
      tpu.vector_store %arg10[%c0_34, %c0_35], %56 {strides = array<i32>} : memref<8x128xf32, #tpu.memory_space<vmem>>, vector<8x128xf32>,
    } else {
    }
    return
  }
  func.func @transform_0(%arg0: i32, %arg1: i32) -> (i32, i32) {
    %c0_i32 = arith.constant 0 : i32
    %c0_i32_0 = arith.constant 0 : i32
    return %arg0, %c0_i32 : i32, i32
  }
  func.func @transform_1(%arg0: i32, %arg1: i32) -> (i32, i32) {
    %c0_i32 = arith.constant 0 : i32
    return %arg0, %arg1 : i32, i32
  }
  func.func @transform_2(%arg0: i32, %arg1: i32) -> (i32, i32) {
    %c0_i32 = arith.constant 0 : i32
    %c0_i32_0 = arith.constant 0 : i32
    %c0_i32_1 = arith.constant 0 : i32
    return %c0_i32, %c0_i32_0 : i32, i32
  }
  func.func @transform_3(%arg0: i32, %arg1: i32) -> (i32, i32) {
    %c0_i32 = arith.constant 0 : i32
    %c0_i32_0 = arith.constant 0 : i32
    %c0_i32_1 = arith.constant 0 : i32
    return %c0_i32, %c0_i32_0 : i32, i32
  }
  func.func @transform_4(%arg0: i32, %arg1: i32) -> (i32, i32) {
    %c0_i32 = arith.constant 0 : i32
    %c0_i32_0 = arith.constant 0 : i32
    %c0_i32_1 = arith.constant 0 : i32
    return %c0_i32, %c0_i32_0 : i32, i32
  }
  func.func @transform_5(%arg0: i32, %arg1: i32) -> (i32, i32) {
    %c0_i32 = arith.constant 0 : i32
    %c0_i32_0 = arith.constant 0 : i32
    %c0_i32_1 = arith.constant 0 : i32
    return %c0_i32, %c0_i32_0 : i32, i32
  }
  func.func @transform_6(%arg0: i32, %arg1: i32) -> (i32, i32) {
    %c0_i32 = arith.constant 0 : i32
    %c0_i32_0 = arith.constant 0 : i32
    %c0_i32_1 = arith.constant 0 : i32
    return %c0_i32, %c0_i32_0 : i32, i32
  }
  func.func @transform_7(%arg0: i32, %arg1: i32) -> (i32, i32) {
    %c0_i32 = arith.constant 0 : i32
    %c0_i32_0 = arith.constant 0 : i32
    %c0_i32_1 = arith.constant 0 : i32
    return %c0_i32, %c0_i32_0 : i32, i32
  }
  func.func @transform_8(%arg0: i32, %arg1: i32) -> (i32, i32) {
    %c0_i32 = arith.constant 0 : i32
    %c0_i32_0 = arith.constant 0 : i32
    return %arg0, %c0_i32 : i32, i32
  }
}

</mosaic_0001>

<llo_original>
// kernel: tpu_custom_call.1
$region0: #{tpu_custom_call.1}
  #allocation0 [shape = 'u32[]', space=smem, size = 0x4, offset = 0x4, fixed_abs, tag = 'smem constant byte address 0x4 - core index']
  #allocation1 [shape = 'u32[144,128]{1,0:T(1,128)}', space=vmem, size = 0x12000, scoped, tag = 'internal scratch']
  #allocation2 [shape = 'f32[8,128]{1,0:T(8,128)}', space=vmem, size = 0x1000, scoped, tag = 'scratch operand']
  #allocation3 [shape = 'f32[8,1]{1,0:T(8,128)}', space=vmem, size = 0x1000, scoped, tag = 'scratch operand']
  %s0 = inlined_call_operand.vmem [shape: s32[16,1], index: 0, kind: input, shape index: {}]
  %s1 = inlined_call_operand.hbm [shape: s32[16,512], index: 1, kind: input, shape index: {}]
  %s2 = inlined_call_operand.hbm [shape: bf16[8,2048], index: 2, kind: input, shape index: {}]
  %s3 = inlined_call_operand.hbm [shape: bf16[512,128], index: 3, kind: input, shape index: {}]
  %s4 = inlined_call_operand.hbm [shape: f32[128,128], index: 4, kind: input, shape index: {}]
  %s5 = inlined_call_operand.vmem [shape: f32[1,128], index: 5, kind: input, shape index: {}]
  %s6 = inlined_call_operand.hbm [shape: f32[128,128], index: 6, kind: input, shape index: {}]
  %s7 = inlined_call_operand.vmem [shape: f32[1,128], index: 7, kind: input, shape index: {}]
  %s8 = inlined_call_operand.hbm [shape: f32[16,128], index: 8, kind: output, shape index: {}]
  %s9 = sld [smem:[#allocation0]]
  $region93: #{tpu_custom_call.1} parent=0
    _
  %s11 = ssub.s32 1, %s9
  %s12 = scalar_select 0, %s11, %s9
  $region1: #{tpu_custom_call.1} parent=0
    #allocation4 [shape = 'u8[16384]{0}', space=vmem, size = 0x4000, scoped, tag = 'input window, operand 1']
    #allocation5 [shape = 's32[2]{0}', space=sflag, size = 0x8, scoped, tag = 'scoped memory for tpu_custom_call.1']
    #allocation6 [shape = 's32[2]{0}', space=sflag, size = 0x8, scoped, tag = 'scoped memory for tpu_custom_call.1']
    #allocation7 [shape = 'u8[32768]{0}', space=vmem, size = 0x8000, scoped, tag = 'input window, operand 2, single buffered']
    #allocation8 [shape = 's32[1]{0}', space=sflag, size = 0x4, scoped, tag = 'scoped memory for tpu_custom_call.1']
    #allocation9 [shape = 'u8[131072]{0}', space=vmem, size = 0x20000, scoped, tag = 'input window, operand 3, single buffered']
    #allocation10 [shape = 'u8[65536]{0}', space=vmem, size = 0x10000, scoped, tag = 'input window, operand 4, single buffered']
    #allocation11 [shape = 's32[1]{0}', space=sflag, size = 0x4, scoped, tag = 'scoped memory for tpu_custom_call.1']
    #allocation12 [shape = 'u8[65536]{0}', space=vmem, size = 0x10000, scoped, tag = 'input window, operand 6, single buffered']
    #allocation13 [shape = 'u8[8192]{0}', space=vmem, size = 0x2000, scoped, tag = 'output window, operand 0']
    %13 = vsyncpa [#allocation5], 0
    %s14 = scalar_lea.sflag [#allocation5], 1
    %15 = vsyncpa %s14, 0
    %16 = vsyncpa [#allocation8], 0
    %17 = vsyncpa [#allocation11], 0
    %18 = vsyncpa [#allocation6], 0
    %s19 = scalar_lea.sflag [#allocation6], 1
    %20 = vsyncpa %s19, 0
    loop: start=0, step=1, limit=6
    $region2: #{tpu_custom_call.1} parent=1 // loop_pre_header
      _
    $region3: #{tpu_custom_call.1} parent=1 // loop_header
      %s22 = sphi 0, %s26
      %p23 = scmp.ge.s32.totalorder %s22, 6
      %s29 = sphi 0, %s41
      %s30 = sphi 0, %s37
      %s31 = sphi 0, %s29
      %s32 = sphi 0, %s30
      %s33 = sphi 0, %s31
      %s34 = sphi 0, %s32
      %s44 = sphi 0, %s46
      %s47 = sphi 0, %s44
      %s48 = sphi 0, %s47
      %s64 = sphi 0, %s48
      %s72 = sphi 0, %s74
      %s75 = sphi 0, %s72
      %s76 = sphi 0, %s75
      %s92 = sphi 0, %s76
      %s96 = sphi 0, %s96
      %s98 = sphi 0, %s96
      %s99 = sphi 0, %s98
      %s113 = sphi 0, %s99
      %s117 = sphi 0, %s117
      %s119 = sphi 0, %s117
      %s120 = sphi 0, %s119
      %s134 = sphi 0, %s120
      %s138 = sphi 0, %s138
      %s140 = sphi 0, %s138
      %s141 = sphi 0, %s140
      %s155 = sphi 0, %s141
      %s159 = sphi 0, %s159
      %s161 = sphi 0, %s159
      %s162 = sphi 0, %s161
      %s176 = sphi 0, %s162
      %s180 = sphi 0, %s180
      %s182 = sphi 0, %s180
      %s183 = sphi 0, %s182
      %s197 = sphi 0, %s183
      %s201 = sphi 0, %s201
      %s203 = sphi 0, %s201
      %s204 = sphi 0, %s203
      %s218 = sphi 0, %s204
      %s224 = sphi 0, %s226
      %s227 = sphi 0, %s224
      %s228 = sphi 0, %s227
      %s244 = sphi 0, %s228
    $region4: #{tpu_custom_call.1} parent=1 // loop_header_branch
      %25 = sbr.rel (%p23) target = $region8
    $region5: #{tpu_custom_call.1} parent=1 // loop_body
      %s27 = ssub.s32 %s22, 1
      %s28 = ssub.s32 %s22, 2
      %s35 = sadd.s32 1, %s30
      %p36 = scmp.ge.s32.totalorder %s35, 2
      %s37 = scalar_select %p36, 0, %s35
      %s38 = sadd.s32 1, %s29
      %s39 = scalar_select %p36, %s38, %s29
      %p40 = scmp.ge.s32.totalorder %s39, 2
      %s41 = scalar_select %p40, 0, %s39
      %s42 = ssub.s32 %s29, %s41
      %p43 = scmp.eq.s32.totalorder %s42, 0
      %s45 = sadd.s32 %s44, 1
      %s46 = scalar_select %p43, %s44, %s45
      %p49 = pneg %p43
      %p50 = scmp.eq.s32.totalorder %s22, 3
      %p51 = por %p49, %p50
      %p52 = scmp.ne.s32.totalorder %s44, %s47
      %p53 = scmp.eq.s32.totalorder %s22, 0
      %p54 = por %p52, %p53
      %p55 = scmp.ne.s32.totalorder %s44, %s47
      %p56 = scmp.eq.s32.totalorder %s27, 3
      %p57 = por %p55, %p56
      %p58 = scmp.ne.s32.totalorder %s47, %s48
      %p59 = scmp.eq.s32.totalorder %s27, 0
      %p60 = por %p58, %p59
      %p61 = scmp.ne.s32.totalorder %s47, %s48
      %p62 = scmp.eq.s32.totalorder %s28, 3
      %p63 = por %p61, %p62
      %p65 = scmp.ne.s32.totalorder %s48, %s64
      %p66 = scmp.eq.s32.totalorder %s28, 0
      %p67 = por %p65, %p66
      %s68 = ssub.s32 %s29, %s41
      %s69 = ssub.s32 %s30, %s37
      %s70 = sor.u32 %s68, %s69
      %p71 = scmp.eq.s32.totalorder %s70, 0
      %s73 = sadd.s32 %s72, 1
      %s74 = scalar_select %p71, %s72, %s73
      %p77 = pneg %p71
      %p78 = scmp.eq.s32.totalorder %s22, 3
      %p79 = por %p77, %p78
      %p80 = scmp.ne.s32.totalorder %s72, %s75
      %p81 = scmp.eq.s32.totalorder %s22, 0
      %p82 = por %p80, %p81
      %p83 = scmp.ne.s32.totalorder %s72, %s75
      %p84 = scmp.eq.s32.totalorder %s27, 3
      %p85 = por %p83, %p84
      %p86 = scmp.ne.s32.totalorder %s75, %s76
      %p87 = scmp.eq.s32.totalorder %s27, 0
      %p88 = por %p86, %p87
      %p89 = scmp.ne.s32.totalorder %s75, %s76
      %p90 = scmp.eq.s32.totalorder %s28, 3
      %p91 = por %p89, %p90
      %p93 = scmp.ne.s32.totalorder %s76, %s92
      %p94 = scmp.eq.s32.totalorder %s28, 0
      %p95 = por %p93, %p94
      %s97 = sadd.s32 %s96, 1
      %p100 = scmp.eq.s32.totalorder %s22, 3
      %p101 = scmp.ne.s32.totalorder %s96, %s98
      %p102 = scmp.eq.s32.totalorder %s22, 0
      %p103 = por %p101, %p102
      %p104 = scmp.ne.s32.totalorder %s96, %s98
      %p105 = scmp.eq.s32.totalorder %s27, 3
      %p106 = por %p104, %p105
      %p107 = scmp.ne.s32.totalorder %s98, %s99
      %p108 = scmp.eq.s32.totalorder %s27, 0
      %p109 = por %p107, %p108
      %p110 = scmp.ne.s32.totalorder %s98, %s99
      %p111 = scmp.eq.s32.totalorder %s28, 3
      %p112 = por %p110, %p111
      %p114 = scmp.ne.s32.totalorder %s99, %s113
      %p115 = scmp.eq.s32.totalorder %s28, 0
      %p116 = por %p114, %p115
      %s118 = sadd.s32 %s117, 1
      %p121 = scmp.eq.s32.totalorder %s22, 3
      %p122 = scmp.ne.s32.totalorder %s117, %s119
      %p123 = scmp.eq.s32.totalorder %s22, 0
      %p124 = por %p122, %p123
      %p125 = scmp.ne.s32.totalorder %s117, %s119
      %p126 = scmp.eq.s32.totalorder %s27, 3
      %p127 = por %p125, %p126
      %p128 = scmp.ne.s32.totalorder %s119, %s120
      %p129 = scmp.eq.s32.totalorder %s27, 0
      %p130 = por %p128, %p129
      %p131 = scmp.ne.s32.totalorder %s119, %s120
      %p132 = scmp.eq.s32.totalorder %s28, 3
      %p133 = por %p131, %p132
      %p135 = scmp.ne.s32.totalorder %s120, %s134
      %p136 = scmp.eq.s32.totalorder %s28, 0
      %p137 = por %p135, %p136
      %s139 = sadd.s32 %s138, 1
      %p142 = scmp.eq.s32.totalorder %s22, 3
      %p143 = scmp.ne.s32.totalorder %s138, %s140
      %p144 = scmp.eq.s32.totalorder %s22, 0
      %p145 = por %p143, %p144
      %p146 = scmp.ne.s32.totalorder %s138, %s140
      %p147 = scmp.eq.s32.totalorder %s27, 3
      %p148 = por %p146, %p147
      %p149 = scmp.ne.s32.totalorder %s140, %s141
      %p150 = scmp.eq.s32.totalorder %s27, 0
      %p151 = por %p149, %p150
      %p152 = scmp.ne.s32.totalorder %s140, %s141
      %p153 = scmp.eq.s32.totalorder %s28, 3
      %p154 = por %p152, %p153
      %p156 = scmp.ne.s32.totalorder %s141, %s155
      %p157 = scmp.eq.s32.totalorder %s28, 0
      %p158 = por %p156, %p157
      %s160 = sadd.s32 %s159, 1
      %p163 = scmp.eq.s32.totalorder %s22, 3
      %p164 = scmp.ne.s32.totalorder %s159, %s161
      %p165 = scmp.eq.s32.totalorder %s22, 0
      %p166 = por %p164, %p165
      %p167 = scmp.ne.s32.totalorder %s159, %s161
      %p168 = scmp.eq.s32.totalorder %s27, 3
      %p169 = por %p167, %p168
      %p170 = scmp.ne.s32.totalorder %s161, %s162
      %p171 = scmp.eq.s32.totalorder %s27, 0
      %p172 = por %p170, %p171
      %p173 = scmp.ne.s32.totalorder %s161, %s162
      %p174 = scmp.eq.s32.totalorder %s28, 3
      %p175 = por %p173, %p174
      %p177 = scmp.ne.s32.totalorder %s162, %s176
      %p178 = scmp.eq.s32.totalorder %s28, 0
      %p179 = por %p177, %p178
      %s181 = sadd.s32 %s180, 1
      %p184 = scmp.eq.s32.totalorder %s22, 3
      %p185 = scmp.ne.s32.totalorder %s180, %s182
      %p186 = scmp.eq.s32.totalorder %s22, 0
      %p187 = por %p185, %p186
      %p188 = scmp.ne.s32.totalorder %s180, %s182
      %p189 = scmp.eq.s32.totalorder %s27, 3
      %p190 = por %p188, %p189
      %p191 = scmp.ne.s32.totalorder %s182, %s183
      %p192 = scmp.eq.s32.totalorder %s27, 0
      %p193 = por %p191, %p192
      %p194 = scmp.ne.s32.totalorder %s182, %s183
      %p195 = scmp.eq.s32.totalorder %s28, 3
      %p196 = por %p194, %p195
      %p198 = scmp.ne.s32.totalorder %s183, %s197
      %p199 = scmp.eq.s32.totalorder %s28, 0
      %p200 = por %p198, %p199
      %s202 = sadd.s32 %s201, 1
      %p205 = scmp.eq.s32.totalorder %s22, 3
      %p206 = scmp.ne.s32.totalorder %s201, %s203
      %p207 = scmp.eq.s32.totalorder %s22, 0
      %p208 = por %p206, %p207
      %p209 = scmp.ne.s32.totalorder %s201, %s203
      %p210 = scmp.eq.s32.totalorder %s27, 3
      %p211 = por %p209, %p210
      %p212 = scmp.ne.s32.totalorder %s203, %s204
      %p213 = scmp.eq.s32.totalorder %s27, 0
      %p214 = por %p212, %p213
      %p215 = scmp.ne.s32.totalorder %s203, %s204
      %p216 = scmp.eq.s32.totalorder %s28, 3
      %p217 = por %p215, %p216
      %p219 = scmp.ne.s32.totalorder %s204, %s218
      %p220 = scmp.eq.s32.totalorder %s28, 0
      %p221 = por %p219, %p220
      %s222 = ssub.s32 %s29, %s41
      %p223 = scmp.eq.s32.totalorder %s222, 0
      %s225 = sadd.s32 %s224, 1
      %s226 = scalar_select %p223, %s224, %s225
      %p229 = pneg %p223
      %p230 = scmp.eq.s32.totalorder %s22, 3
      %p231 = por %p229, %p230
      %p232 = scmp.ne.s32.totalorder %s224, %s227
      %p233 = scmp.eq.s32.totalorder %s22, 0
      %p234 = por %p232, %p233
      %p235 = scmp.ne.s32.totalorder %s224, %s227
      %p236 = scmp.eq.s32.totalorder %s27, 3
      %p237 = por %p235, %p236
      %p238 = scmp.ne.s32.totalorder %s227, %s228
      %p239 = scmp.eq.s32.totalorder %s27, 0
      %p240 = por %p238, %p239
      %p241 = scmp.ne.s32.totalorder %s227, %s228
      %p242 = scmp.eq.s32.totalorder %s28, 3
      %p243 = por %p241, %p242
      %p245 = scmp.ne.s32.totalorder %s228, %s244
      %p246 = scmp.eq.s32.totalorder %s28, 0
      %p247 = por %p245, %p246
      %p248 = scmp.le.s32.totalorder 1, %s22
      %p249 = scmp.lt.s32.totalorder %s22, 5
      %p250 = pnand %p248, %p249
      %p251 = pneg %p250
      // Predicated region
      $region9: #{tpu_custom_call.1} parent=5 // pred_check
        _
      $region10: #{tpu_custom_call.1} parent=5 // pred_check_branch
        %253 = sbr.rel (%p250) target = $region12
      $region11: #{tpu_custom_call.1} parent=5 // pred_region
        %s254 = ssub.s32 %s22, 1
        // Predicated region
        $region13: #{tpu_custom_call.1} parent=11 // pred_check
          %p255 = pneg %p109
        $region14: #{tpu_custom_call.1} parent=11 // pred_check_branch
          %257 = sbr.rel (%p255) target = $region16
        $region15: #{tpu_custom_call.1} parent=11 // pred_region
          %s259 = ssub.s32 1024, 1024
          %260 = vsyncadd [#allocation8], %s259
          %s262 = sshll.u32 [#allocation7], 4
          %s263 = int_to_ptr.vmem [resolvable:$true] %s262
          %265 = dma.hbm_to_vmem [thread:$0]  %s2, 1024, %s263, [#allocation8]
        $region16: #{tpu_custom_call.1} parent=11 // pred_fallthru
          _
        // Predicated region
        $region17: #{tpu_custom_call.1} parent=11 // pred_check
          %p266 = pneg %p130
        $region18: #{tpu_custom_call.1} parent=11 // pred_check_branch
          %268 = sbr.rel (%p266) target = $region20
        $region19: #{tpu_custom_call.1} parent=11 // pred_region
          %s270 = ssub.s32 4096, 4096
          %271 = vsyncadd [#allocation8], %s270
          %s272 = sshll.u32 [#allocation9], 4
          %s273 = int_to_ptr.vmem [resolvable:$true] %s272
          %278 = dma.hbm_to_vmem [thread:$0]  %s3, 4096, %s273, [#allocation8], 64, 64, 4
        $region20: #{tpu_custom_call.1} parent=11 // pred_fallthru
          _
        // Predicated region
        $region21: #{tpu_custom_call.1} parent=11 // pred_check
          %p279 = pneg %p151
        $region22: #{tpu_custom_call.1} parent=11 // pred_check_branch
          %281 = sbr.rel (%p279) target = $region24
        $region23: #{tpu_custom_call.1} parent=11 // pred_region
          %s283 = ssub.s32 2048, 2048
          %284 = vsyncadd [#allocation11], %s283
          %s285 = sshll.u32 [#allocation10], 4
          %s286 = int_to_ptr.vmem [resolvable:$true] %s285
          %291 = dma.hbm_to_vmem [thread:$0]  %s4, 2048, %s286, [#allocation11], 128, 128, 8
        $region24: #{tpu_custom_call.1} parent=11 // pred_fallthru
          _
        // Predicated region
        $region25: #{tpu_custom_call.1} parent=11 // pred_check
          %p292 = pneg %p172
        $region26: #{tpu_custom_call.1} parent=11 // pred_check_branch
          %294 = sbr.rel (%p292) target = $region28
        $region27: #{tpu_custom_call.1} parent=11 // pred_region
          _
        $region28: #{tpu_custom_call.1} parent=11 // pred_fallthru
          _
        // Predicated region
        $region29: #{tpu_custom_call.1} parent=11 // pred_check
          %p295 = pneg %p193
        $region30: #{tpu_custom_call.1} parent=11 // pred_check_branch
          %297 = sbr.rel (%p295) target = $region32
        $region31: #{tpu_custom_call.1} parent=11 // pred_region
          %s299 = ssub.s32 2048, 2048
          %300 = vsyncadd [#allocation11], %s299
          %s301 = sshll.u32 [#allocation12], 4
          %s302 = int_to_ptr.vmem [resolvable:$true] %s301
          %307 = dma.hbm_to_vmem [thread:$0]  %s6, 2048, %s302, [#allocation11], 128, 128, 8
        $region32: #{tpu_custom_call.1} parent=11 // pred_fallthru
          _
        // Predicated region
        $region33: #{tpu_custom_call.1} parent=11 // pred_check
          %p308 = pneg %p214
        $region34: #{tpu_custom_call.1} parent=11 // pred_check_branch
          %310 = sbr.rel (%p308) target = $region36
        $region35: #{tpu_custom_call.1} parent=11 // pred_region
          _
        $region36: #{tpu_custom_call.1} parent=11 // pred_fallthru
          _
      $region12: #{tpu_custom_call.1} parent=5 // pred_fallthru
        _
      %p311 = scmp.lt.s32.totalorder %s22, 4
      // Predicated region
      $region37: #{tpu_custom_call.1} parent=5 // pred_check
        %p312 = pneg %p311
      $region38: #{tpu_custom_call.1} parent=5 // pred_check_branch
        %314 = sbr.rel (%p312) target = $region40
      $region39: #{tpu_custom_call.1} parent=5 // pred_region
        // Predicated region
        $region41: #{tpu_custom_call.1} parent=39 // pred_check
          %p315 = pneg %p54
        $region42: #{tpu_custom_call.1} parent=39 // pred_check_branch
          %317 = sbr.rel (%p315) target = $region44
        $region43: #{tpu_custom_call.1} parent=39 // pred_region
          %p318 = scmp.lt.s32.totalorder %s29, 1
          %s319 = scalar_select %p318, %s29, 1
          %s320 = smul.addr %s319, 8
          %s321 = scalar_lea.vmem %s0, %s320
        $region44: #{tpu_custom_call.1} parent=39 // pred_fallthru
          _
        // Predicated region
        $region45: #{tpu_custom_call.1} parent=39 // pred_check
          %p322 = pneg %p82
        $region46: #{tpu_custom_call.1} parent=39 // pred_check_branch
          %324 = sbr.rel (%p322) target = $region48
        $region47: #{tpu_custom_call.1} parent=39 // pred_region
          %s325 = sand.u32 %s72, 1
          %s326 = scalar_lea.sflag [#allocation5], %s325
          %s327 = sand.u32 %s72, 1
          %s328 = smul.addr %s327, 16
          %s329 = scalar_lea.vmem [#allocation4], %s328
          %s330 = smul.u32 2, %s30
          %s332 = ssub.s32 256, 256
          %333 = vsyncadd %s326, %s332
          %s334 = smul.addr %s29, 4
          %s335 = sadd.s32 %s330, %s334
          %s336 = smul.addr %s335, 128
          %s337 = scalar_lea.hbm %s1, %s336
          %s339 = sshll.u32 %s329, 4
          %s340 = int_to_ptr.vmem [resolvable:$true] %s339
          %342 = dma.hbm_to_vmem [thread:$0]  %s337, 256, %s340, %s326
        $region48: #{tpu_custom_call.1} parent=39 // pred_fallthru
          _
      $region40: #{tpu_custom_call.1} parent=5 // pred_fallthru
        _
      %p343 = scmp.le.s32.totalorder 1, %s22
      %p344 = scmp.lt.s32.totalorder %s22, 5
      %p345 = pnand %p343, %p344
      %p346 = pneg %p345
      // Predicated region
      $region49: #{tpu_custom_call.1} parent=5 // pred_check
        _
      $region50: #{tpu_custom_call.1} parent=5 // pred_check_branch
        %348 = sbr.rel (%p345) target = $region52
      $region51: #{tpu_custom_call.1} parent=5 // pred_region
        %s349 = ssub.s32 %s22, 1
        %s350 = sand.u32 %s75, 1
        %s351 = scalar_lea.sflag [#allocation5], %s350
        %s352 = sand.u32 %s75, 1
        %s353 = smul.addr %s352, 16
        %s354 = scalar_lea.vmem [#allocation4], %s353
        // Predicated region
        $region53: #{tpu_custom_call.1} parent=51 // pred_check
          %p355 = pneg %p88
        $region54: #{tpu_custom_call.1} parent=51 // pred_check_branch
          %357 = sbr.rel (%p355) target = $region56
        $region55: #{tpu_custom_call.1} parent=51 // pred_region
          %358 = dma.done %s351, 256
        $region56: #{tpu_custom_call.1} parent=51 // pred_fallthru
          _
        // Predicated region
        $region57: #{tpu_custom_call.1} parent=51 // pred_check
          %p359 = pneg %p109
        $region58: #{tpu_custom_call.1} parent=51 // pred_check_branch
          %361 = sbr.rel (%p359) target = $region60
        $region59: #{tpu_custom_call.1} parent=51 // pred_region
          %362 = dma.done [#allocation8], 1024
        $region60: #{tpu_custom_call.1} parent=51 // pred_fallthru
          _
        // Predicated region
        $region61: #{tpu_custom_call.1} parent=51 // pred_check
          %p363 = pneg %p130
        $region62: #{tpu_custom_call.1} parent=51 // pred_check_branch
          %365 = sbr.rel (%p363) target = $region64
        $region63: #{tpu_custom_call.1} parent=51 // pred_region
          %366 = dma.done [#allocation8], 4096
        $region64: #{tpu_custom_call.1} parent=51 // pred_fallthru
          _
        // Predicated region
        $region65: #{tpu_custom_call.1} parent=51 // pred_check
          %p367 = pneg %p151
        $region66: #{tpu_custom_call.1} parent=51 // pred_check_branch
          %369 = sbr.rel (%p367) target = $region68
        $region67: #{tpu_custom_call.1} parent=51 // pred_region
          %370 = dma.done [#allocation11], 2048
        $region68: #{tpu_custom_call.1} parent=51 // pred_fallthru
          _
        // Predicated region
        $region69: #{tpu_custom_call.1} parent=51 // pred_check
          %p371 = pneg %p193
        $region70: #{tpu_custom_call.1} parent=51 // pred_check_branch
          %373 = sbr.rel (%p371) target = $region72
        $region71: #{tpu_custom_call.1} parent=51 // pred_region
          %374 = dma.done [#allocation11], 2048
        $region72: #{tpu_custom_call.1} parent=51 // pred_fallthru
          _
        %p375 = scmp.lt.s32.totalorder %s31, 1
        %s376 = scalar_select %p375, %s31, 1
        %s377 = smul.addr %s376, 8
        %s378 = scalar_lea.vmem %s0, %s377
        %p379 = pneg %p60
        %p380 = pneg %p57
        %s381 = sand.u32 %s75, 1
        %s382 = scalar_lea.sflag [#allocation5], %s381
        %s383 = sand.u32 %s75, 1
        %s384 = smul.addr %s383, 16
        %s385 = scalar_lea.vmem [#allocation4], %s384
        %p386 = pneg %p88
        %p387 = pneg %p85
        %p388 = pneg %p109
        %p389 = pneg %p106
        %p390 = pneg %p130
        %p391 = pneg %p127
        %p392 = pneg %p151
        %p393 = pneg %p148
        %p394 = pneg %p172
        %p395 = pneg %p169
        %p396 = pneg %p193
        %p397 = pneg %p190
        %p398 = pneg %p214
        %p399 = pneg %p211
        %p400 = pneg %p240
        %p401 = pneg %p237
        %s402 = sand.u32 %s227, 1
        %s403 = scalar_lea.sflag [#allocation6], %s402
        %s404 = sand.u32 %s227, 1
        %s405 = smul.addr %s404, 8
        %s406 = scalar_lea.vmem [#allocation13], %s405
        %p407 = scmp.lt.s32.totalorder %s31, 1
        %s408 = scalar_select %p407, %s31, 1
        %s409 = smul.addr %s408, 8
        %s410 = scalar_lea.vmem %s0, %s409
        %s411 = smul.u32 2, %s32
        %p413 = scmp.eq.s32.totalorder %s32, 0
        // Predicated region
        $region73: #{tpu_custom_call.1} parent=51 // pred_check
          %p414 = pneg %p413
        $region74: #{tpu_custom_call.1} parent=51 // pred_check_branch
          %416 = sbr.rel (%p414) target = $region76
        $region75: #{tpu_custom_call.1} parent=51 // pred_region
          %417 = vst [vmem:[#allocation2] sm:$0xff] 0.0
          %vm418 = vcmask 7168
          %419 = vst.msk [vmem:[#allocation3] sm:$0xff] %vm418, 0.0
        $region76: #{tpu_custom_call.1} parent=51 // pred_fallthru
          _
        %v420 = vlaneseq
        %v421 = vand.u32 %v420, 127
        %v422 = vadd.s32 %v421, 128
        %s423 = smul.u32 %s32, 256
        %v424 = vstv %s423
        %v425 = vadd.s32 %v421, %v424
        %v426 = vadd.s32 %v422, %v424
        %v427 = vld [vmem:[%s410] sm:$0xff]
        %428 = vset.pattern.permute.xlu0 0
        %429 = vperm.xlu0 %428, %v427
        %v430 = vpop.permute.xlu0 %429
        %vm431 = vcmp.lt.s32.totalorder %v425, %v430
        %vm432 = vcmp.lt.s32.totalorder %v426, %v430
        %v433 = vld [vmem:[%s354] sm:$0xff]
        %v434 = vld [vmem:[%s354 + $0x8] sm:$0xff]
        %v435 = vsel %vm431, %v433, 4294967295
        %v436 = vsel %vm432, %v434, 4294967295
        %v437 = vadd.s32 %v421, 256
        %v438 = vadd.s32 %v421, 384
        %v439 = vlaneseq
        %v440 = vshrl.u32 %v439, 7
        %v441 = vsub.s32 0, %v440
        %v442 = vrot.slane %v435, %v441
        %444 = vbcast.lane.b32.xlu0 %v442, 256
        %v445 = vpop.permute.xlu0 %444
        %s447 = sor.u32 256, 8
        %448 = vbcast.lane.b32.xlu0 %v442, %s447
        %v449 = vpop.permute.xlu0 %448
        %s451 = sor.u32 256, 16
        %452 = vbcast.lane.b32.xlu0 %v442, %s451
        %v453 = vpop.permute.xlu0 %452
        %s455 = sor.u32 256, 24
        %456 = vbcast.lane.b32.xlu0 %v442, %s455
        %v457 = vpop.permute.xlu0 %456
        %s459 = sor.u32 256, 32
        %460 = vbcast.lane.b32.xlu0 %v442, %s459
        %v461 = vpop.permute.xlu0 %460
        %s463 = sor.u32 256, 40
        %464 = vbcast.lane.b32.xlu0 %v442, %s463
        %v465 = vpop.permute.xlu0 %464
        %s467 = sor.u32 256, 48
        %468 = vbcast.lane.b32.xlu0 %v442, %s467
        %v469 = vpop.permute.xlu0 %468
        %s471 = sor.u32 256, 56
        %472 = vbcast.lane.b32.xlu0 %v442, %s471
        %v473 = vpop.permute.xlu0 %472
        %s475 = sor.u32 256, 64
        %476 = vbcast.lane.b32.xlu0 %v442, %s475
        %v477 = vpop.permute.xlu0 %476
        %s479 = sor.u32 256, 72
        %480 = vbcast.lane.b32.xlu0 %v442, %s479
        %v481 = vpop.permute.xlu0 %480
        %s483 = sor.u32 256, 80
        %484 = vbcast.lane.b32.xlu0 %v442, %s483
        %v485 = vpop.permute.xlu0 %484
        %s487 = sor.u32 256, 88
        %488 = vbcast.lane.b32.xlu0 %v442, %s487
        %v489 = vpop.permute.xlu0 %488
        %s491 = sor.u32 256, 96
        %492 = vbcast.lane.b32.xlu0 %v442, %s491
        %v493 = vpop.permute.xlu0 %492
        %s495 = sor.u32 256, 104
        %496 = vbcast.lane.b32.xlu0 %v442, %s495
        %v497 = vpop.permute.xlu0 %496
        %s499 = sor.u32 256, 112
        %500 = vbcast.lane.b32.xlu0 %v442, %s499
        %v501 = vpop.permute.xlu0 %500
        %s503 = sor.u32 256, 120
        %504 = vbcast.lane.b32.xlu0 %v442, %s503
        %v505 = vpop.permute.xlu0 %504
        %v506 = vlaneseq
        %v507 = vshrl.u32 %v506, 7
        %v508 = vsub.s32 0, %v507
        %v509 = vrot.slane %v436, %v508
        %511 = vbcast.lane.b32.xlu0 %v509, 256
        %v512 = vpop.permute.xlu0 %511
        %s514 = sor.u32 256, 8
        %515 = vbcast.lane.b32.xlu0 %v509, %s514
        %v516 = vpop.permute.xlu0 %515
        %s518 = sor.u32 256, 16
        %519 = vbcast.lane.b32.xlu0 %v509, %s518
        %v520 = vpop.permute.xlu0 %519
        %s522 = sor.u32 256, 24
        %523 = vbcast.lane.b32.xlu0 %v509, %s522
        %v524 = vpop.permute.xlu0 %523
        %s526 = sor.u32 256, 32
        %527 = vbcast.lane.b32.xlu0 %v509, %s526
        %v528 = vpop.permute.xlu0 %527
        %s530 = sor.u32 256, 40
        %531 = vbcast.lane.b32.xlu0 %v509, %s530
        %v532 = vpop.permute.xlu0 %531
        %s534 = sor.u32 256, 48
        %535 = vbcast.lane.b32.xlu0 %v509, %s534
        %v536 = vpop.permute.xlu0 %535
        %s538 = sor.u32 256, 56
        %539 = vbcast.lane.b32.xlu0 %v509, %s538
        %v540 = vpop.permute.xlu0 %539
        %s542 = sor.u32 256, 64
        %543 = vbcast.lane.b32.xlu0 %v509, %s542
        %v544 = vpop.permute.xlu0 %543
        %s546 = sor.u32 256, 72
        %547 = vbcast.lane.b32.xlu0 %v509, %s546
        %v548 = vpop.permute.xlu0 %547
        %s550 = sor.u32 256, 80
        %551 = vbcast.lane.b32.xlu0 %v509, %s550
        %v552 = vpop.permute.xlu0 %551
        %s554 = sor.u32 256, 88
        %555 = vbcast.lane.b32.xlu0 %v509, %s554
        %v556 = vpop.permute.xlu0 %555
        %s558 = sor.u32 256, 96
        %559 = vbcast.lane.b32.xlu0 %v509, %s558
        %v560 = vpop.permute.xlu0 %559
        %s562 = sor.u32 256, 104
        %563 = vbcast.lane.b32.xlu0 %v509, %s562
        %v564 = vpop.permute.xlu0 %563
        %s566 = sor.u32 256, 112
        %567 = vbcast.lane.b32.xlu0 %v509, %s566
        %v568 = vpop.permute.xlu0 %567
        %s570 = sor.u32 256, 120
        %571 = vbcast.lane.b32.xlu0 %v509, %s570
        %v572 = vpop.permute.xlu0 %571
        %v573 = vlaneseq
        %v574 = vshrl.u32 %v573, 7
        %v575 = vsub.s32 1, %v574
        %v576 = vrot.slane %v435, %v575
        %578 = vbcast.lane.b32.xlu0 %v576, 256
        %v579 = vpop.permute.xlu0 %578
        %s581 = sor.u32 256, 8
        %582 = vbcast.lane.b32.xlu0 %v576, %s581
        %v583 = vpop.permute.xlu0 %582
        %s585 = sor.u32 256, 16
        %586 = vbcast.lane.b32.xlu0 %v576, %s585
        %v587 = vpop.permute.xlu0 %586
        %s589 = sor.u32 256, 24
        %590 = vbcast.lane.b32.xlu0 %v576, %s589
        %v591 = vpop.permute.xlu0 %590
        %s593 = sor.u32 256, 32
        %594 = vbcast.lane.b32.xlu0 %v576, %s593
        %v595 = vpop.permute.xlu0 %594
        %s597 = sor.u32 256, 40
        %598 = vbcast.lane.b32.xlu0 %v576, %s597
        %v599 = vpop.permute.xlu0 %598
        %s601 = sor.u32 256, 48
        %602 = vbcast.lane.b32.xlu0 %v576, %s601
        %v603 = vpop.permute.xlu0 %602
        %s605 = sor.u32 256, 56
        %606 = vbcast.lane.b32.xlu0 %v576, %s605
        %v607 = vpop.permute.xlu0 %606
        %s609 = sor.u32 256, 64
        %610 = vbcast.lane.b32.xlu0 %v576, %s609
        %v611 = vpop.permute.xlu0 %610
        %s613 = sor.u32 256, 72
        %614 = vbcast.lane.b32.xlu0 %v576, %s613
        %v615 = vpop.permute.xlu0 %614
        %s617 = sor.u32 256, 80
        %618 = vbcast.lane.b32.xlu0 %v576, %s617
        %v619 = vpop.permute.xlu0 %618
        %s621 = sor.u32 256, 88
        %622 = vbcast.lane.b32.xlu0 %v576, %s621
        %v623 = vpop.permute.xlu0 %622
        %s625 = sor.u32 256, 96
        %626 = vbcast.lane.b32.xlu0 %v576, %s625
        %v627 = vpop.permute.xlu0 %626
        %s629 = sor.u32 256, 104
        %630 = vbcast.lane.b32.xlu0 %v576, %s629
        %v631 = vpop.permute.xlu0 %630
        %s633 = sor.u32 256, 112
        %634 = vbcast.lane.b32.xlu0 %v576, %s633
        %v635 = vpop.permute.xlu0 %634
        %s637 = sor.u32 256, 120
        %638 = vbcast.lane.b32.xlu0 %v576, %s637
        %v639 = vpop.permute.xlu0 %638
        %v640 = vlaneseq
        %v641 = vshrl.u32 %v640, 7
        %v642 = vsub.s32 1, %v641
        %v643 = vrot.slane %v436, %v642
        %645 = vbcast.lane.b32.xlu0 %v643, 256
        %v646 = vpop.permute.xlu0 %645
        %s648 = sor.u32 256, 8
        %649 = vbcast.lane.b32.xlu0 %v643, %s648
        %v650 = vpop.permute.xlu0 %649
        %s652 = sor.u32 256, 16
        %653 = vbcast.lane.b32.xlu0 %v643, %s652
        %v654 = vpop.permute.xlu0 %653
        %s656 = sor.u32 256, 24
        %657 = vbcast.lane.b32.xlu0 %v643, %s656
        %v658 = vpop.permute.xlu0 %657
        %s660 = sor.u32 256, 32
        %661 = vbcast.lane.b32.xlu0 %v643, %s660
        %v662 = vpop.permute.xlu0 %661
        %s664 = sor.u32 256, 40
        %665 = vbcast.lane.b32.xlu0 %v643, %s664
        %v666 = vpop.permute.xlu0 %665
        %s668 = sor.u32 256, 48
        %669 = vbcast.lane.b32.xlu0 %v643, %s668
        %v670 = vpop.permute.xlu0 %669
        %s672 = sor.u32 256, 56
        %673 = vbcast.lane.b32.xlu0 %v643, %s672
        %v674 = vpop.permute.xlu0 %673
        %s676 = sor.u32 256, 64
        %677 = vbcast.lane.b32.xlu0 %v643, %s676
        %v678 = vpop.permute.xlu0 %677
        %s680 = sor.u32 256, 72
        %681 = vbcast.lane.b32.xlu0 %v643, %s680
        %v682 = vpop.permute.xlu0 %681
        %s684 = sor.u32 256, 80
        %685 = vbcast.lane.b32.xlu0 %v643, %s684
        %v686 = vpop.permute.xlu0 %685
        %s688 = sor.u32 256, 88
        %689 = vbcast.lane.b32.xlu0 %v643, %s688
        %v690 = vpop.permute.xlu0 %689
        %s692 = sor.u32 256, 96
        %693 = vbcast.lane.b32.xlu0 %v643, %s692
        %v694 = vpop.permute.xlu0 %693
        %s696 = sor.u32 256, 104
        %697 = vbcast.lane.b32.xlu0 %v643, %s696
        %v698 = vpop.permute.xlu0 %697
        %s700 = sor.u32 256, 112
        %701 = vbcast.lane.b32.xlu0 %v643, %s700
        %v702 = vpop.permute.xlu0 %701
        %s704 = sor.u32 256, 120
        %705 = vbcast.lane.b32.xlu0 %v643, %s704
        %v706 = vpop.permute.xlu0 %705
        %v707 = vlaneseq
        %v708 = vshrl.u32 %v707, 7
        %v709 = vsub.s32 2, %v708
        %v710 = vrot.slane %v435, %v709
        %712 = vbcast.lane.b32.xlu0 %v710, 256
        %v713 = vpop.permute.xlu0 %712
        %s715 = sor.u32 256, 8
        %716 = vbcast.lane.b32.xlu0 %v710, %s715
        %v717 = vpop.permute.xlu0 %716
        %s719 = sor.u32 256, 16
        %720 = vbcast.lane.b32.xlu0 %v710, %s719
        %v721 = vpop.permute.xlu0 %720
        %s723 = sor.u32 256, 24
        %724 = vbcast.lane.b32.xlu0 %v710, %s723
        %v725 = vpop.permute.xlu0 %724
        %s727 = sor.u32 256, 32
        %728 = vbcast.lane.b32.xlu0 %v710, %s727
        %v729 = vpop.permute.xlu0 %728
        %s731 = sor.u32 256, 40
        %732 = vbcast.lane.b32.xlu0 %v710, %s731
        %v733 = vpop.permute.xlu0 %732
        %s735 = sor.u32 256, 48
        %736 = vbcast.lane.b32.xlu0 %v710, %s735
        %v737 = vpop.permute.xlu0 %736
        %s739 = sor.u32 256, 56
        %740 = vbcast.lane.b32.xlu0 %v710, %s739
        %v741 = vpop.permute.xlu0 %740
        %s743 = sor.u32 256, 64
        %744 = vbcast.lane.b32.xlu0 %v710, %s743
        %v745 = vpop.permute.xlu0 %744
        %s747 = sor.u32 256, 72
        %748 = vbcast.lane.b32.xlu0 %v710, %s747
        %v749 = vpop.permute.xlu0 %748
        %s751 = sor.u32 256, 80
        %752 = vbcast.lane.b32.xlu0 %v710, %s751
        %v753 = vpop.permute.xlu0 %752
        %s755 = sor.u32 256, 88
        %756 = vbcast.lane.b32.xlu0 %v710, %s755
        %v757 = vpop.permute.xlu0 %756
        %s759 = sor.u32 256, 96
        %760 = vbcast.lane.b32.xlu0 %v710, %s759
        %v761 = vpop.permute.xlu0 %760
        %s763 = sor.u32 256, 104
        %764 = vbcast.lane.b32.xlu0 %v710, %s763
        %v765 = vpop.permute.xlu0 %764
        %s767 = sor.u32 256, 112
        %768 = vbcast.lane.b32.xlu0 %v710, %s767
        %v769 = vpop.permute.xlu0 %768
        %s771 = sor.u32 256, 120
        %772 = vbcast.lane.b32.xlu0 %v710, %s771
        %v773 = vpop.permute.xlu0 %772
        %v774 = vlaneseq
        %v775 = vshrl.u32 %v774, 7
        %v776 = vsub.s32 2, %v775
        %v777 = vrot.slane %v436, %v776
        %779 = vbcast.lane.b32.xlu0 %v777, 256
        %v780 = vpop.permute.xlu0 %779
        %s782 = sor.u32 256, 8
        %783 = vbcast.lane.b32.xlu0 %v777, %s782
        %v784 = vpop.permute.xlu0 %783
        %s786 = sor.u32 256, 16
        %787 = vbcast.lane.b32.xlu0 %v777, %s786
        %v788 = vpop.permute.xlu0 %787
        %s790 = sor.u32 256, 24
        %791 = vbcast.lane.b32.xlu0 %v777, %s790
        %v792 = vpop.permute.xlu0 %791
        %s794 = sor.u32 256, 32
        %795 = vbcast.lane.b32.xlu0 %v777, %s794
        %v796 = vpop.permute.xlu0 %795
        %s798 = sor.u32 256, 40
        %799 = vbcast.lane.b32.xlu0 %v777, %s798
        %v800 = vpop.permute.xlu0 %799
        %s802 = sor.u32 256, 48
        %803 = vbcast.lane.b32.xlu0 %v777, %s802
        %v804 = vpop.permute.xlu0 %803
        %s806 = sor.u32 256, 56
        %807 = vbcast.lane.b32.xlu0 %v777, %s806
        %v808 = vpop.permute.xlu0 %807
        %s810 = sor.u32 256, 64
        %811 = vbcast.lane.b32.xlu0 %v777, %s810
        %v812 = vpop.permute.xlu0 %811
        %s814 = sor.u32 256, 72
        %815 = vbcast.lane.b32.xlu0 %v777, %s814
        %v816 = vpop.permute.xlu0 %815
        %s818 = sor.u32 256, 80
        %819 = vbcast.lane.b32.xlu0 %v777, %s818
        %v820 = vpop.permute.xlu0 %819
        %s822 = sor.u32 256, 88
        %823 = vbcast.lane.b32.xlu0 %v777, %s822
        %v824 = vpop.permute.xlu0 %823
        %s826 = sor.u32 256, 96
        %827 = vbcast.lane.b32.xlu0 %v777, %s826
        %v828 = vpop.permute.xlu0 %827
        %s830 = sor.u32 256, 104
        %831 = vbcast.lane.b32.xlu0 %v777, %s830
        %v832 = vpop.permute.xlu0 %831
        %s834 = sor.u32 256, 112
        %835 = vbcast.lane.b32.xlu0 %v777, %s834
        %v836 = vpop.permute.xlu0 %835
        %s838 = sor.u32 256, 120
        %839 = vbcast.lane.b32.xlu0 %v777, %s838
        %v840 = vpop.permute.xlu0 %839
        %v841 = vlaneseq
        %v842 = vshrl.u32 %v841, 7
        %v843 = vsub.s32 3, %v842
        %v844 = vrot.slane %v435, %v843
        %846 = vbcast.lane.b32.xlu0 %v844, 256
        %v847 = vpop.permute.xlu0 %846
        %s849 = sor.u32 256, 8
        %850 = vbcast.lane.b32.xlu0 %v844, %s849
        %v851 = vpop.permute.xlu0 %850
        %s853 = sor.u32 256, 16
        %854 = vbcast.lane.b32.xlu0 %v844, %s853
        %v855 = vpop.permute.xlu0 %854
        %s857 = sor.u32 256, 24
        %858 = vbcast.lane.b32.xlu0 %v844, %s857
        %v859 = vpop.permute.xlu0 %858
        %s861 = sor.u32 256, 32
        %862 = vbcast.lane.b32.xlu0 %v844, %s861
        %v863 = vpop.permute.xlu0 %862
        %s865 = sor.u32 256, 40
        %866 = vbcast.lane.b32.xlu0 %v844, %s865
        %v867 = vpop.permute.xlu0 %866
        %s869 = sor.u32 256, 48
        %870 = vbcast.lane.b32.xlu0 %v844, %s869
        %v871 = vpop.permute.xlu0 %870
        %s873 = sor.u32 256, 56
        %874 = vbcast.lane.b32.xlu0 %v844, %s873
        %v875 = vpop.permute.xlu0 %874
        %s877 = sor.u32 256, 64
        %878 = vbcast.lane.b32.xlu0 %v844, %s877
        %v879 = vpop.permute.xlu0 %878
        %s881 = sor.u32 256, 72
        %882 = vbcast.lane.b32.xlu0 %v844, %s881
        %v883 = vpop.permute.xlu0 %882
        %s885 = sor.u32 256, 80
        %886 = vbcast.lane.b32.xlu0 %v844, %s885
        %v887 = vpop.permute.xlu0 %886
        %s889 = sor.u32 256, 88
        %890 = vbcast.lane.b32.xlu0 %v844, %s889
        %v891 = vpop.permute.xlu0 %890
        %s893 = sor.u32 256, 96
        %894 = vbcast.lane.b32.xlu0 %v844, %s893
        %v895 = vpop.permute.xlu0 %894
        %s897 = sor.u32 256, 104
        %898 = vbcast.lane.b32.xlu0 %v844, %s897
        %v899 = vpop.permute.xlu0 %898
        %s901 = sor.u32 256, 112
        %902 = vbcast.lane.b32.xlu0 %v844, %s901
        %v903 = vpop.permute.xlu0 %902
        %s905 = sor.u32 256, 120
        %906 = vbcast.lane.b32.xlu0 %v844, %s905
        %v907 = vpop.permute.xlu0 %906
        %v908 = vlaneseq
        %v909 = vshrl.u32 %v908, 7
        %v910 = vsub.s32 3, %v909
        %v911 = vrot.slane %v436, %v910
        %913 = vbcast.lane.b32.xlu0 %v911, 256
        %v914 = vpop.permute.xlu0 %913
        %s916 = sor.u32 256, 8
        %917 = vbcast.lane.b32.xlu0 %v911, %s916
        %v918 = vpop.permute.xlu0 %917
        %s920 = sor.u32 256, 16
        %921 = vbcast.lane.b32.xlu0 %v911, %s920
        %v922 = vpop.permute.xlu0 %921
        %s924 = sor.u32 256, 24
        %925 = vbcast.lane.b32.xlu0 %v911, %s924
        %v926 = vpop.permute.xlu0 %925
        %s928 = sor.u32 256, 32
        %929 = vbcast.lane.b32.xlu0 %v911, %s928
        %v930 = vpop.permute.xlu0 %929
        %s932 = sor.u32 256, 40
        %933 = vbcast.lane.b32.xlu0 %v911, %s932
        %v934 = vpop.permute.xlu0 %933
        %s936 = sor.u32 256, 48
        %937 = vbcast.lane.b32.xlu0 %v911, %s936
        %v938 = vpop.permute.xlu0 %937
        %s940 = sor.u32 256, 56
        %941 = vbcast.lane.b32.xlu0 %v911, %s940
        %v942 = vpop.permute.xlu0 %941
        %s944 = sor.u32 256, 64
        %945 = vbcast.lane.b32.xlu0 %v911, %s944
        %v946 = vpop.permute.xlu0 %945
        %s948 = sor.u32 256, 72
        %949 = vbcast.lane.b32.xlu0 %v911, %s948
        %v950 = vpop.permute.xlu0 %949
        %s952 = sor.u32 256, 80
        %953 = vbcast.lane.b32.xlu0 %v911, %s952
        %v954 = vpop.permute.xlu0 %953
        %s956 = sor.u32 256, 88
        %957 = vbcast.lane.b32.xlu0 %v911, %s956
        %v958 = vpop.permute.xlu0 %957
        %s960 = sor.u32 256, 96
        %961 = vbcast.lane.b32.xlu0 %v911, %s960
        %v962 = vpop.permute.xlu0 %961
        %s964 = sor.u32 256, 104
        %965 = vbcast.lane.b32.xlu0 %v911, %s964
        %v966 = vpop.permute.xlu0 %965
        %s968 = sor.u32 256, 112
        %969 = vbcast.lane.b32.xlu0 %v911, %s968
        %v970 = vpop.permute.xlu0 %969
        %s972 = sor.u32 256, 120
        %973 = vbcast.lane.b32.xlu0 %v911, %s972
        %v974 = vpop.permute.xlu0 %973
        %v975 = vlaneseq
        %v976 = vshrl.u32 %v975, 7
        %v977 = vsub.s32 4, %v976
        %v978 = vrot.slane %v435, %v977
        %980 = vbcast.lane.b32.xlu0 %v978, 256
        %v981 = vpop.permute.xlu0 %980
        %s983 = sor.u32 256, 8
        %984 = vbcast.lane.b32.xlu0 %v978, %s983
        %v985 = vpop.permute.xlu0 %984
        %s987 = sor.u32 256, 16
        %988 = vbcast.lane.b32.xlu0 %v978, %s987
        %v989 = vpop.permute.xlu0 %988
        %s991 = sor.u32 256, 24
        %992 = vbcast.lane.b32.xlu0 %v978, %s991
        %v993 = vpop.permute.xlu0 %992
        %s995 = sor.u32 256, 32
        %996 = vbcast.lane.b32.xlu0 %v978, %s995
        %v997 = vpop.permute.xlu0 %996
        %s999 = sor.u32 256, 40
        %1000 = vbcast.lane.b32.xlu0 %v978, %s999
        %v1001 = vpop.permute.xlu0 %1000
        %s1003 = sor.u32 256, 48
        %1004 = vbcast.lane.b32.xlu0 %v978, %s1003
        %v1005 = vpop.permute.xlu0 %1004
        %s1007 = sor.u32 256, 56
        %1008 = vbcast.lane.b32.xlu0 %v978, %s1007
        %v1009 = vpop.permute.xlu0 %1008
        %s1011 = sor.u32 256, 64
        %1012 = vbcast.lane.b32.xlu0 %v978, %s1011
        %v1013 = vpop.permute.xlu0 %1012
        %s1015 = sor.u32 256, 72
        %1016 = vbcast.lane.b32.xlu0 %v978, %s1015
        %v1017 = vpop.permute.xlu0 %1016
        %s1019 = sor.u32 256, 80
        %1020 = vbcast.lane.b32.xlu0 %v978, %s1019
        %v1021 = vpop.permute.xlu0 %1020
        %s1023 = sor.u32 256, 88
        %1024 = vbcast.lane.b32.xlu0 %v978, %s1023
        %v1025 = vpop.permute.xlu0 %1024
        %s1027 = sor.u32 256, 96
        %1028 = vbcast.lane.b32.xlu0 %v978, %s1027
        %v1029 = vpop.permute.xlu0 %1028
        %s1031 = sor.u32 256, 104
        %1032 = vbcast.lane.b32.xlu0 %v978, %s1031
        %v1033 = vpop.permute.xlu0 %1032
        %s1035 = sor.u32 256, 112
        %1036 = vbcast.lane.b32.xlu0 %v978, %s1035
        %v1037 = vpop.permute.xlu0 %1036
        %s1039 = sor.u32 256, 120
        %1040 = vbcast.lane.b32.xlu0 %v978, %s1039
        %v1041 = vpop.permute.xlu0 %1040
        %v1042 = vlaneseq
        %v1043 = vshrl.u32 %v1042, 7
        %v1044 = vsub.s32 4, %v1043
        %v1045 = vrot.slane %v436, %v1044
        %1047 = vbcast.lane.b32.xlu0 %v1045, 256
        %v1048 = vpop.permute.xlu0 %1047
        %s1050 = sor.u32 256, 8
        %1051 = vbcast.lane.b32.xlu0 %v1045, %s1050
        %v1052 = vpop.permute.xlu0 %1051
        %s1054 = sor.u32 256, 16
        %1055 = vbcast.lane.b32.xlu0 %v1045, %s1054
        %v1056 = vpop.permute.xlu0 %1055
        %s1058 = sor.u32 256, 24
        %1059 = vbcast.lane.b32.xlu0 %v1045, %s1058
        %v1060 = vpop.permute.xlu0 %1059
        %s1062 = sor.u32 256, 32
        %1063 = vbcast.lane.b32.xlu0 %v1045, %s1062
        %v1064 = vpop.permute.xlu0 %1063
        %s1066 = sor.u32 256, 40
        %1067 = vbcast.lane.b32.xlu0 %v1045, %s1066
        %v1068 = vpop.permute.xlu0 %1067
        %s1070 = sor.u32 256, 48
        %1071 = vbcast.lane.b32.xlu0 %v1045, %s1070
        %v1072 = vpop.permute.xlu0 %1071
        %s1074 = sor.u32 256, 56
        %1075 = vbcast.lane.b32.xlu0 %v1045, %s1074
        %v1076 = vpop.permute.xlu0 %1075
        %s1078 = sor.u32 256, 64
        %1079 = vbcast.lane.b32.xlu0 %v1045, %s1078
        %v1080 = vpop.permute.xlu0 %1079
        %s1082 = sor.u32 256, 72
        %1083 = vbcast.lane.b32.xlu0 %v1045, %s1082
        %v1084 = vpop.permute.xlu0 %1083
        %s1086 = sor.u32 256, 80
        %1087 = vbcast.lane.b32.xlu0 %v1045, %s1086
        %v1088 = vpop.permute.xlu0 %1087
        %s1090 = sor.u32 256, 88
        %1091 = vbcast.lane.b32.xlu0 %v1045, %s1090
        %v1092 = vpop.permute.xlu0 %1091
        %s1094 = sor.u32 256, 96
        %1095 = vbcast.lane.b32.xlu0 %v1045, %s1094
        %v1096 = vpop.permute.xlu0 %1095
        %s1098 = sor.u32 256, 104
        %1099 = vbcast.lane.b32.xlu0 %v1045, %s1098
        %v1100 = vpop.permute.xlu0 %1099
        %s1102 = sor.u32 256, 112
        %1103 = vbcast.lane.b32.xlu0 %v1045, %s1102
        %v1104 = vpop.permute.xlu0 %1103
        %s1106 = sor.u32 256, 120
        %1107 = vbcast.lane.b32.xlu0 %v1045, %s1106
        %v1108 = vpop.permute.xlu0 %1107
        %v1109 = vlaneseq
        %v1110 = vshrl.u32 %v1109, 7
        %v1111 = vsub.s32 5, %v1110
        %v1112 = vrot.slane %v435, %v1111
        %1114 = vbcast.lane.b32.xlu0 %v1112, 256
        %v1115 = vpop.permute.xlu0 %1114
        %s1117 = sor.u32 256, 8
        %1118 = vbcast.lane.b32.xlu0 %v1112, %s1117
        %v1119 = vpop.permute.xlu0 %1118
        %s1121 = sor.u32 256, 16
        %1122 = vbcast.lane.b32.xlu0 %v1112, %s1121
        %v1123 = vpop.permute.xlu0 %1122
        %s1125 = sor.u32 256, 24
        %1126 = vbcast.lane.b32.xlu0 %v1112, %s1125
        %v1127 = vpop.permute.xlu0 %1126
        %s1129 = sor.u32 256, 32
        %1130 = vbcast.lane.b32.xlu0 %v1112, %s1129
        %v1131 = vpop.permute.xlu0 %1130
        %s1133 = sor.u32 256, 40
        %1134 = vbcast.lane.b32.xlu0 %v1112, %s1133
        %v1135 = vpop.permute.xlu0 %1134
        %s1137 = sor.u32 256, 48
        %1138 = vbcast.lane.b32.xlu0 %v1112, %s1137
        %v1139 = vpop.permute.xlu0 %1138
        %s1141 = sor.u32 256, 56
        %1142 = vbcast.lane.b32.xlu0 %v1112, %s1141
        %v1143 = vpop.permute.xlu0 %1142
        %s1145 = sor.u32 256, 64
        %1146 = vbcast.lane.b32.xlu0 %v1112, %s1145
        %v1147 = vpop.permute.xlu0 %1146
        %s1149 = sor.u32 256, 72
        %1150 = vbcast.lane.b32.xlu0 %v1112, %s1149
        %v1151 = vpop.permute.xlu0 %1150
        %s1153 = sor.u32 256, 80
        %1154 = vbcast.lane.b32.xlu0 %v1112, %s1153
        %v1155 = vpop.permute.xlu0 %1154
        %s1157 = sor.u32 256, 88
        %1158 = vbcast.lane.b32.xlu0 %v1112, %s1157
        %v1159 = vpop.permute.xlu0 %1158
        %s1161 = sor.u32 256, 96
        %1162 = vbcast.lane.b32.xlu0 %v1112, %s1161
        %v1163 = vpop.permute.xlu0 %1162
        %s1165 = sor.u32 256, 104
        %1166 = vbcast.lane.b32.xlu0 %v1112, %s1165
        %v1167 = vpop.permute.xlu0 %1166
        %s1169 = sor.u32 256, 112
        %1170 = vbcast.lane.b32.xlu0 %v1112, %s1169
        %v1171 = vpop.permute.xlu0 %1170
        %s1173 = sor.u32 256, 120
        %1174 = vbcast.lane.b32.xlu0 %v1112, %s1173
        %v1175 = vpop.permute.xlu0 %1174
        %v1176 = vlaneseq
        %v1177 = vshrl.u32 %v1176, 7
        %v1178 = vsub.s32 5, %v1177
        %v1179 = vrot.slane %v436, %v1178
        %1181 = vbcast.lane.b32.xlu0 %v1179, 256
        %v1182 = vpop.permute.xlu0 %1181
        %s1184 = sor.u32 256, 8
        %1185 = vbcast.lane.b32.xlu0 %v1179, %s1184
        %v1186 = vpop.permute.xlu0 %1185
        %s1188 = sor.u32 256, 16
        %1189 = vbcast.lane.b32.xlu0 %v1179, %s1188
        %v1190 = vpop.permute.xlu0 %1189
        %s1192 = sor.u32 256, 24
        %1193 = vbcast.lane.b32.xlu0 %v1179, %s1192
        %v1194 = vpop.permute.xlu0 %1193
        %s1196 = sor.u32 256, 32
        %1197 = vbcast.lane.b32.xlu0 %v1179, %s1196
        %v1198 = vpop.permute.xlu0 %1197
        %s1200 = sor.u32 256, 40
        %1201 = vbcast.lane.b32.xlu0 %v1179, %s1200
        %v1202 = vpop.permute.xlu0 %1201
        %s1204 = sor.u32 256, 48
        %1205 = vbcast.lane.b32.xlu0 %v1179, %s1204
        %v1206 = vpop.permute.xlu0 %1205
        %s1208 = sor.u32 256, 56
        %1209 = vbcast.lane.b32.xlu0 %v1179, %s1208
        %v1210 = vpop.permute.xlu0 %1209
        %s1212 = sor.u32 256, 64
        %1213 = vbcast.lane.b32.xlu0 %v1179, %s1212
        %v1214 = vpop.permute.xlu0 %1213
        %s1216 = sor.u32 256, 72
        %1217 = vbcast.lane.b32.xlu0 %v1179, %s1216
        %v1218 = vpop.permute.xlu0 %1217
        %s1220 = sor.u32 256, 80
        %1221 = vbcast.lane.b32.xlu0 %v1179, %s1220
        %v1222 = vpop.permute.xlu0 %1221
        %s1224 = sor.u32 256, 88
        %1225 = vbcast.lane.b32.xlu0 %v1179, %s1224
        %v1226 = vpop.permute.xlu0 %1225
        %s1228 = sor.u32 256, 96
        %1229 = vbcast.lane.b32.xlu0 %v1179, %s1228
        %v1230 = vpop.permute.xlu0 %1229
        %s1232 = sor.u32 256, 104
        %1233 = vbcast.lane.b32.xlu0 %v1179, %s1232
        %v1234 = vpop.permute.xlu0 %1233
        %s1236 = sor.u32 256, 112
        %1237 = vbcast.lane.b32.xlu0 %v1179, %s1236
        %v1238 = vpop.permute.xlu0 %1237
        %s1240 = sor.u32 256, 120
        %1241 = vbcast.lane.b32.xlu0 %v1179, %s1240
        %v1242 = vpop.permute.xlu0 %1241
        %v1243 = vlaneseq
        %v1244 = vshrl.u32 %v1243, 7
        %v1245 = vsub.s32 6, %v1244
        %v1246 = vrot.slane %v435, %v1245
        %1248 = vbcast.lane.b32.xlu0 %v1246, 256
        %v1249 = vpop.permute.xlu0 %1248
        %s1251 = sor.u32 256, 8
        %1252 = vbcast.lane.b32.xlu0 %v1246, %s1251
        %v1253 = vpop.permute.xlu0 %1252
        %s1255 = sor.u32 256, 16
        %1256 = vbcast.lane.b32.xlu0 %v1246, %s1255
        %v1257 = vpop.permute.xlu0 %1256
        %s1259 = sor.u32 256, 24
        %1260 = vbcast.lane.b32.xlu0 %v1246, %s1259
        %v1261 = vpop.permute.xlu0 %1260
        %s1263 = sor.u32 256, 32
        %1264 = vbcast.lane.b32.xlu0 %v1246, %s1263
        %v1265 = vpop.permute.xlu0 %1264
        %s1267 = sor.u32 256, 40
        %1268 = vbcast.lane.b32.xlu0 %v1246, %s1267
        %v1269 = vpop.permute.xlu0 %1268
        %s1271 = sor.u32 256, 48
        %1272 = vbcast.lane.b32.xlu0 %v1246, %s1271
        %v1273 = vpop.permute.xlu0 %1272
        %s1275 = sor.u32 256, 56
        %1276 = vbcast.lane.b32.xlu0 %v1246, %s1275
        %v1277 = vpop.permute.xlu0 %1276
        %s1279 = sor.u32 256, 64
        %1280 = vbcast.lane.b32.xlu0 %v1246, %s1279
        %v1281 = vpop.permute.xlu0 %1280
        %s1283 = sor.u32 256, 72
        %1284 = vbcast.lane.b32.xlu0 %v1246, %s1283
        %v1285 = vpop.permute.xlu0 %1284
        %s1287 = sor.u32 256, 80
        %1288 = vbcast.lane.b32.xlu0 %v1246, %s1287
        %v1289 = vpop.permute.xlu0 %1288
        %s1291 = sor.u32 256, 88
        %1292 = vbcast.lane.b32.xlu0 %v1246, %s1291
        %v1293 = vpop.permute.xlu0 %1292
        %s1295 = sor.u32 256, 96
        %1296 = vbcast.lane.b32.xlu0 %v1246, %s1295
        %v1297 = vpop.permute.xlu0 %1296
        %s1299 = sor.u32 256, 104
        %1300 = vbcast.lane.b32.xlu0 %v1246, %s1299
        %v1301 = vpop.permute.xlu0 %1300
        %s1303 = sor.u32 256, 112
        %1304 = vbcast.lane.b32.xlu0 %v1246, %s1303
        %v1305 = vpop.permute.xlu0 %1304
        %s1307 = sor.u32 256, 120
        %1308 = vbcast.lane.b32.xlu0 %v1246, %s1307
        %v1309 = vpop.permute.xlu0 %1308
        %v1310 = vlaneseq
        %v1311 = vshrl.u32 %v1310, 7
        %v1312 = vsub.s32 6, %v1311
        %v1313 = vrot.slane %v436, %v1312
        %1315 = vbcast.lane.b32.xlu0 %v1313, 256
        %v1316 = vpop.permute.xlu0 %1315
        %s1318 = sor.u32 256, 8
        %1319 = vbcast.lane.b32.xlu0 %v1313, %s1318
        %v1320 = vpop.permute.xlu0 %1319
        %s1322 = sor.u32 256, 16
        %1323 = vbcast.lane.b32.xlu0 %v1313, %s1322
        %v1324 = vpop.permute.xlu0 %1323
        %s1326 = sor.u32 256, 24
        %1327 = vbcast.lane.b32.xlu0 %v1313, %s1326
        %v1328 = vpop.permute.xlu0 %1327
        %s1330 = sor.u32 256, 32
        %1331 = vbcast.lane.b32.xlu0 %v1313, %s1330
        %v1332 = vpop.permute.xlu0 %1331
        %s1334 = sor.u32 256, 40
        %1335 = vbcast.lane.b32.xlu0 %v1313, %s1334
        %v1336 = vpop.permute.xlu0 %1335
        %s1338 = sor.u32 256, 48
        %1339 = vbcast.lane.b32.xlu0 %v1313, %s1338
        %v1340 = vpop.permute.xlu0 %1339
        %s1342 = sor.u32 256, 56
        %1343 = vbcast.lane.b32.xlu0 %v1313, %s1342
        %v1344 = vpop.permute.xlu0 %1343
        %s1346 = sor.u32 256, 64
        %1347 = vbcast.lane.b32.xlu0 %v1313, %s1346
        %v1348 = vpop.permute.xlu0 %1347
        %s1350 = sor.u32 256, 72
        %1351 = vbcast.lane.b32.xlu0 %v1313, %s1350
        %v1352 = vpop.permute.xlu0 %1351
        %s1354 = sor.u32 256, 80
        %1355 = vbcast.lane.b32.xlu0 %v1313, %s1354
        %v1356 = vpop.permute.xlu0 %1355
        %s1358 = sor.u32 256, 88
        %1359 = vbcast.lane.b32.xlu0 %v1313, %s1358
        %v1360 = vpop.permute.xlu0 %1359
        %s1362 = sor.u32 256, 96
        %1363 = vbcast.lane.b32.xlu0 %v1313, %s1362
        %v1364 = vpop.permute.xlu0 %1363
        %s1366 = sor.u32 256, 104
        %1367 = vbcast.lane.b32.xlu0 %v1313, %s1366
        %v1368 = vpop.permute.xlu0 %1367
        %s1370 = sor.u32 256, 112
        %1371 = vbcast.lane.b32.xlu0 %v1313, %s1370
        %v1372 = vpop.permute.xlu0 %1371
        %s1374 = sor.u32 256, 120
        %1375 = vbcast.lane.b32.xlu0 %v1313, %s1374
        %v1376 = vpop.permute.xlu0 %1375
        %v1377 = vlaneseq
        %v1378 = vshrl.u32 %v1377, 7
        %v1379 = vsub.s32 7, %v1378
        %v1380 = vrot.slane %v435, %v1379
        %1382 = vbcast.lane.b32.xlu0 %v1380, 256
        %v1383 = vpop.permute.xlu0 %1382
        %s1385 = sor.u32 256, 8
        %1386 = vbcast.lane.b32.xlu0 %v1380, %s1385
        %v1387 = vpop.permute.xlu0 %1386
        %s1389 = sor.u32 256, 16
        %1390 = vbcast.lane.b32.xlu0 %v1380, %s1389
        %v1391 = vpop.permute.xlu0 %1390
        %s1393 = sor.u32 256, 24
        %1394 = vbcast.lane.b32.xlu0 %v1380, %s1393
        %v1395 = vpop.permute.xlu0 %1394
        %s1397 = sor.u32 256, 32
        %1398 = vbcast.lane.b32.xlu0 %v1380, %s1397
        %v1399 = vpop.permute.xlu0 %1398
        %s1401 = sor.u32 256, 40
        %1402 = vbcast.lane.b32.xlu0 %v1380, %s1401
        %v1403 = vpop.permute.xlu0 %1402
        %s1405 = sor.u32 256, 48
        %1406 = vbcast.lane.b32.xlu0 %v1380, %s1405
        %v1407 = vpop.permute.xlu0 %1406
        %s1409 = sor.u32 256, 56
        %1410 = vbcast.lane.b32.xlu0 %v1380, %s1409
        %v1411 = vpop.permute.xlu0 %1410
        %s1413 = sor.u32 256, 64
        %1414 = vbcast.lane.b32.xlu0 %v1380, %s1413
        %v1415 = vpop.permute.xlu0 %1414
        %s1417 = sor.u32 256, 72
        %1418 = vbcast.lane.b32.xlu0 %v1380, %s1417
        %v1419 = vpop.permute.xlu0 %1418
        %s1421 = sor.u32 256, 80
        %1422 = vbcast.lane.b32.xlu0 %v1380, %s1421
        %v1423 = vpop.permute.xlu0 %1422
        %s1425 = sor.u32 256, 88
        %1426 = vbcast.lane.b32.xlu0 %v1380, %s1425
        %v1427 = vpop.permute.xlu0 %1426
        %s1429 = sor.u32 256, 96
        %1430 = vbcast.lane.b32.xlu0 %v1380, %s1429
        %v1431 = vpop.permute.xlu0 %1430
        %s1433 = sor.u32 256, 104
        %1434 = vbcast.lane.b32.xlu0 %v1380, %s1433
        %v1435 = vpop.permute.xlu0 %1434
        %s1437 = sor.u32 256, 112
        %1438 = vbcast.lane.b32.xlu0 %v1380, %s1437
        %v1439 = vpop.permute.xlu0 %1438
        %s1441 = sor.u32 256, 120
        %1442 = vbcast.lane.b32.xlu0 %v1380, %s1441
        %v1443 = vpop.permute.xlu0 %1442
        %v1444 = vlaneseq
        %v1445 = vshrl.u32 %v1444, 7
        %v1446 = vsub.s32 7, %v1445
        %v1447 = vrot.slane %v436, %v1446
        %1449 = vbcast.lane.b32.xlu0 %v1447, 256
        %v1450 = vpop.permute.xlu0 %1449
        %s1452 = sor.u32 256, 8
        %1453 = vbcast.lane.b32.xlu0 %v1447, %s1452
        %v1454 = vpop.permute.xlu0 %1453
        %s1456 = sor.u32 256, 16
        %1457 = vbcast.lane.b32.xlu0 %v1447, %s1456
        %v1458 = vpop.permute.xlu0 %1457
        %s1460 = sor.u32 256, 24
        %1461 = vbcast.lane.b32.xlu0 %v1447, %s1460
        %v1462 = vpop.permute.xlu0 %1461
        %s1464 = sor.u32 256, 32
        %1465 = vbcast.lane.b32.xlu0 %v1447, %s1464
        %v1466 = vpop.permute.xlu0 %1465
        %s1468 = sor.u32 256, 40
        %1469 = vbcast.lane.b32.xlu0 %v1447, %s1468
        %v1470 = vpop.permute.xlu0 %1469
        %s1472 = sor.u32 256, 48
        %1473 = vbcast.lane.b32.xlu0 %v1447, %s1472
        %v1474 = vpop.permute.xlu0 %1473
        %s1476 = sor.u32 256, 56
        %1477 = vbcast.lane.b32.xlu0 %v1447, %s1476
        %v1478 = vpop.permute.xlu0 %1477
        %s1480 = sor.u32 256, 64
        %1481 = vbcast.lane.b32.xlu0 %v1447, %s1480
        %v1482 = vpop.permute.xlu0 %1481
        %s1484 = sor.u32 256, 72
        %1485 = vbcast.lane.b32.xlu0 %v1447, %s1484
        %v1486 = vpop.permute.xlu0 %1485
        %s1488 = sor.u32 256, 80
        %1489 = vbcast.lane.b32.xlu0 %v1447, %s1488
        %v1490 = vpop.permute.xlu0 %1489
        %s1492 = sor.u32 256, 88
        %1493 = vbcast.lane.b32.xlu0 %v1447, %s1492
        %v1494 = vpop.permute.xlu0 %1493
        %s1496 = sor.u32 256, 96
        %1497 = vbcast.lane.b32.xlu0 %v1447, %s1496
        %v1498 = vpop.permute.xlu0 %1497
        %s1500 = sor.u32 256, 104
        %1501 = vbcast.lane.b32.xlu0 %v1447, %s1500
        %v1502 = vpop.permute.xlu0 %1501
        %s1504 = sor.u32 256, 112
        %1505 = vbcast.lane.b32.xlu0 %v1447, %s1504
        %v1506 = vpop.permute.xlu0 %1505
        %s1508 = sor.u32 256, 120
        %1509 = vbcast.lane.b32.xlu0 %v1447, %s1508
        %v1510 = vpop.permute.xlu0 %1509
        %vm1511 = vcmp.eq.s32.totalorder %v445, %v421
        %vm1512 = vcmp.eq.s32.totalorder %v445, %v422
        %vm1513 = vcmp.eq.s32.totalorder %v445, %v437
        %vm1514 = vcmp.eq.s32.totalorder %v445, %v438
        %vm1515 = vcmp.eq.s32.totalorder %v449, %v421
        %vm1516 = vcmp.eq.s32.totalorder %v449, %v422
        %vm1517 = vcmp.eq.s32.totalorder %v449, %v437
        %vm1518 = vcmp.eq.s32.totalorder %v449, %v438
        %vm1519 = vcmp.eq.s32.totalorder %v453, %v421
        %vm1520 = vcmp.eq.s32.totalorder %v453, %v422
        %vm1521 = vcmp.eq.s32.totalorder %v453, %v437
        %vm1522 = vcmp.eq.s32.totalorder %v453, %v438
        %vm1523 = vcmp.eq.s32.totalorder %v457, %v421
        %vm1524 = vcmp.eq.s32.totalorder %v457, %v422
        %vm1525 = vcmp.eq.s32.totalorder %v457, %v437
        %vm1526 = vcmp.eq.s32.totalorder %v457, %v438
        %vm1527 = vcmp.eq.s32.totalorder %v461, %v421
        %vm1528 = vcmp.eq.s32.totalorder %v461, %v422
        %vm1529 = vcmp.eq.s32.totalorder %v461, %v437
        %vm1530 = vcmp.eq.s32.totalorder %v461, %v438
        %vm1531 = vcmp.eq.s32.totalorder %v465, %v421
        %vm1532 = vcmp.eq.s32.totalorder %v465, %v422
        %vm1533 = vcmp.eq.s32.totalorder %v465, %v437
        %vm1534 = vcmp.eq.s32.totalorder %v465, %v438
        %vm1535 = vcmp.eq.s32.totalorder %v469, %v421
        %vm1536 = vcmp.eq.s32.totalorder %v469, %v422
        %vm1537 = vcmp.eq.s32.totalorder %v469, %v437
        %vm1538 = vcmp.eq.s32.totalorder %v469, %v438
        %vm1539 = vcmp.eq.s32.totalorder %v473, %v421
        %vm1540 = vcmp.eq.s32.totalorder %v473, %v422
        %vm1541 = vcmp.eq.s32.totalorder %v473, %v437
        %vm1542 = vcmp.eq.s32.totalorder %v473, %v438
        %vm1543 = vcmp.eq.s32.totalorder %v477, %v421
        %vm1544 = vcmp.eq.s32.totalorder %v477, %v422
        %vm1545 = vcmp.eq.s32.totalorder %v477, %v437
        %vm1546 = vcmp.eq.s32.totalorder %v477, %v438
        %vm1547 = vcmp.eq.s32.totalorder %v481, %v421
        %vm1548 = vcmp.eq.s32.totalorder %v481, %v422
        %vm1549 = vcmp.eq.s32.totalorder %v481, %v437
        %vm1550 = vcmp.eq.s32.totalorder %v481, %v438
        %vm1551 = vcmp.eq.s32.totalorder %v485, %v421
        %vm1552 = vcmp.eq.s32.totalorder %v485, %v422
        %vm1553 = vcmp.eq.s32.totalorder %v485, %v437
        %vm1554 = vcmp.eq.s32.totalorder %v485, %v438
        %vm1555 = vcmp.eq.s32.totalorder %v489, %v421
        %vm1556 = vcmp.eq.s32.totalorder %v489, %v422
        %vm1557 = vcmp.eq.s32.totalorder %v489, %v437
        %vm1558 = vcmp.eq.s32.totalorder %v489, %v438
        %vm1559 = vcmp.eq.s32.totalorder %v493, %v421
        %vm1560 = vcmp.eq.s32.totalorder %v493, %v422
        %vm1561 = vcmp.eq.s32.totalorder %v493, %v437
        %vm1562 = vcmp.eq.s32.totalorder %v493, %v438
        %vm1563 = vcmp.eq.s32.totalorder %v497, %v421
        %vm1564 = vcmp.eq.s32.totalorder %v497, %v422
        %vm1565 = vcmp.eq.s32.totalorder %v497, %v437
        %vm1566 = vcmp.eq.s32.totalorder %v497, %v438
        %vm1567 = vcmp.eq.s32.totalorder %v501, %v421
        %vm1568 = vcmp.eq.s32.totalorder %v501, %v422
        %vm1569 = vcmp.eq.s32.totalorder %v501, %v437
        %vm1570 = vcmp.eq.s32.totalorder %v501, %v438
        %vm1571 = vcmp.eq.s32.totalorder %v505, %v421
        %vm1572 = vcmp.eq.s32.totalorder %v505, %v422
        %vm1573 = vcmp.eq.s32.totalorder %v505, %v437
        %vm1574 = vcmp.eq.s32.totalorder %v505, %v438
        %vm1575 = vcmp.eq.s32.totalorder %v512, %v421
        %vm1576 = vcmp.eq.s32.totalorder %v512, %v422
        %vm1577 = vcmp.eq.s32.totalorder %v512, %v437
        %vm1578 = vcmp.eq.s32.totalorder %v512, %v438
        %vm1579 = vcmp.eq.s32.totalorder %v516, %v421
        %vm1580 = vcmp.eq.s32.totalorder %v516, %v422
        %vm1581 = vcmp.eq.s32.totalorder %v516, %v437
        %vm1582 = vcmp.eq.s32.totalorder %v516, %v438
        %vm1583 = vcmp.eq.s32.totalorder %v520, %v421
        %vm1584 = vcmp.eq.s32.totalorder %v520, %v422
        %vm1585 = vcmp.eq.s32.totalorder %v520, %v437
        %vm1586 = vcmp.eq.s32.totalorder %v520, %v438
        %vm1587 = vcmp.eq.s32.totalorder %v524, %v421
        %vm1588 = vcmp.eq.s32.totalorder %v524, %v422
        %vm1589 = vcmp.eq.s32.totalorder %v524, %v437
        %vm1590 = vcmp.eq.s32.totalorder %v524, %v438
        %vm1591 = vcmp.eq.s32.totalorder %v528, %v421
        %vm1592 = vcmp.eq.s32.totalorder %v528, %v422
        %vm1593 = vcmp.eq.s32.totalorder %v528, %v437
        %vm1594 = vcmp.eq.s32.totalorder %v528, %v438
        %vm1595 = vcmp.eq.s32.totalorder %v532, %v421
        %vm1596 = vcmp.eq.s32.totalorder %v532, %v422
        %vm1597 = vcmp.eq.s32.totalorder %v532, %v437
        %vm1598 = vcmp.eq.s32.totalorder %v532, %v438
        %vm1599 = vcmp.eq.s32.totalorder %v536, %v421
        %vm1600 = vcmp.eq.s32.totalorder %v536, %v422
        %vm1601 = vcmp.eq.s32.totalorder %v536, %v437
        %vm1602 = vcmp.eq.s32.totalorder %v536, %v438
        %vm1603 = vcmp.eq.s32.totalorder %v540, %v421
        %vm1604 = vcmp.eq.s32.totalorder %v540, %v422
        %vm1605 = vcmp.eq.s32.totalorder %v540, %v437
        %vm1606 = vcmp.eq.s32.totalorder %v540, %v438
        %vm1607 = vcmp.eq.s32.totalorder %v544, %v421
        %vm1608 = vcmp.eq.s32.totalorder %v544, %v422
        %vm1609 = vcmp.eq.s32.totalorder %v544, %v437
        %vm1610 = vcmp.eq.s32.totalorder %v544, %v438
        %vm1611 = vcmp.eq.s32.totalorder %v548, %v421
        %vm1612 = vcmp.eq.s32.totalorder %v548, %v422
        %vm1613 = vcmp.eq.s32.totalorder %v548, %v437
        %vm1614 = vcmp.eq.s32.totalorder %v548, %v438
        %vm1615 = vcmp.eq.s32.totalorder %v552, %v421
        %vm1616 = vcmp.eq.s32.totalorder %v552, %v422
        %vm1617 = vcmp.eq.s32.totalorder %v552, %v437
        %vm1618 = vcmp.eq.s32.totalorder %v552, %v438
        %vm1619 = vcmp.eq.s32.totalorder %v556, %v421
        %vm1620 = vcmp.eq.s32.totalorder %v556, %v422
        %vm1621 = vcmp.eq.s32.totalorder %v556, %v437
        %vm1622 = vcmp.eq.s32.totalorder %v556, %v438
        %vm1623 = vcmp.eq.s32.totalorder %v560, %v421
        %vm1624 = vcmp.eq.s32.totalorder %v560, %v422
        %vm1625 = vcmp.eq.s32.totalorder %v560, %v437
        %vm1626 = vcmp.eq.s32.totalorder %v560, %v438
        %vm1627 = vcmp.eq.s32.totalorder %v564, %v421
        %vm1628 = vcmp.eq.s32.totalorder %v564, %v422
        %vm1629 = vcmp.eq.s32.totalorder %v564, %v437
        %vm1630 = vcmp.eq.s32.totalorder %v564, %v438
        %vm1631 = vcmp.eq.s32.totalorder %v568, %v421
        %vm1632 = vcmp.eq.s32.totalorder %v568, %v422
        %vm1633 = vcmp.eq.s32.totalorder %v568, %v437
        %vm1634 = vcmp.eq.s32.totalorder %v568, %v438
        %vm1635 = vcmp.eq.s32.totalorder %v572, %v421
        %vm1636 = vcmp.eq.s32.totalorder %v572, %v422
        %vm1637 = vcmp.eq.s32.totalorder %v572, %v437
        %vm1638 = vcmp.eq.s32.totalorder %v572, %v438
        %vm1639 = vcmp.eq.s32.totalorder %v579, %v421
        %vm1640 = vcmp.eq.s32.totalorder %v579, %v422
        %vm1641 = vcmp.eq.s32.totalorder %v579, %v437
        %vm1642 = vcmp.eq.s32.totalorder %v579, %v438
        %vm1643 = vcmp.eq.s32.totalorder %v583, %v421
        %vm1644 = vcmp.eq.s32.totalorder %v583, %v422
        %vm1645 = vcmp.eq.s32.totalorder %v583, %v437
        %vm1646 = vcmp.eq.s32.totalorder %v583, %v438
        %vm1647 = vcmp.eq.s32.totalorder %v587, %v421
        %vm1648 = vcmp.eq.s32.totalorder %v587, %v422
        %vm1649 = vcmp.eq.s32.totalorder %v587, %v437
        %vm1650 = vcmp.eq.s32.totalorder %v587, %v438
        %vm1651 = vcmp.eq.s32.totalorder %v591, %v421
        %vm1652 = vcmp.eq.s32.totalorder %v591, %v422
        %vm1653 = vcmp.eq.s32.totalorder %v591, %v437
        %vm1654 = vcmp.eq.s32.totalorder %v591, %v438
        %vm1655 = vcmp.eq.s32.totalorder %v595, %v421
        %vm1656 = vcmp.eq.s32.totalorder %v595, %v422
        %vm1657 = vcmp.eq.s32.totalorder %v595, %v437
        %vm1658 = vcmp.eq.s32.totalorder %v595, %v438
        %vm1659 = vcmp.eq.s32.totalorder %v599, %v421
        %vm1660 = vcmp.eq.s32.totalorder %v599, %v422
        %vm1661 = vcmp.eq.s32.totalorder %v599, %v437
        %vm1662 = vcmp.eq.s32.totalorder %v599, %v438
        %vm1663 = vcmp.eq.s32.totalorder %v603, %v421
        %vm1664 = vcmp.eq.s32.totalorder %v603, %v422
        %vm1665 = vcmp.eq.s32.totalorder %v603, %v437
        %vm1666 = vcmp.eq.s32.totalorder %v603, %v438
        %vm1667 = vcmp.eq.s32.totalorder %v607, %v421
        %vm1668 = vcmp.eq.s32.totalorder %v607, %v422
        %vm1669 = vcmp.eq.s32.totalorder %v607, %v437
        %vm1670 = vcmp.eq.s32.totalorder %v607, %v438
        %vm1671 = vcmp.eq.s32.totalorder %v611, %v421
        %vm1672 = vcmp.eq.s32.totalorder %v611, %v422
        %vm1673 = vcmp.eq.s32.totalorder %v611, %v437
        %vm1674 = vcmp.eq.s32.totalorder %v611, %v438
        %vm1675 = vcmp.eq.s32.totalorder %v615, %v421
        %vm1676 = vcmp.eq.s32.totalorder %v615, %v422
        %vm1677 = vcmp.eq.s32.totalorder %v615, %v437
        %vm1678 = vcmp.eq.s32.totalorder %v615, %v438
        %vm1679 = vcmp.eq.s32.totalorder %v619, %v421
        %vm1680 = vcmp.eq.s32.totalorder %v619, %v422
        %vm1681 = vcmp.eq.s32.totalorder %v619, %v437
        %vm1682 = vcmp.eq.s32.totalorder %v619, %v438
        %vm1683 = vcmp.eq.s32.totalorder %v623, %v421
        %vm1684 = vcmp.eq.s32.totalorder %v623, %v422
        %vm1685 = vcmp.eq.s32.totalorder %v623, %v437
        %vm1686 = vcmp.eq.s32.totalorder %v623, %v438
        %vm1687 = vcmp.eq.s32.totalorder %v627, %v421
        %vm1688 = vcmp.eq.s32.totalorder %v627, %v422
        %vm1689 = vcmp.eq.s32.totalorder %v627, %v437
        %vm1690 = vcmp.eq.s32.totalorder %v627, %v438
        %vm1691 = vcmp.eq.s32.totalorder %v631, %v421
        %vm1692 = vcmp.eq.s32.totalorder %v631, %v422
        %vm1693 = vcmp.eq.s32.totalorder %v631, %v437
        %vm1694 = vcmp.eq.s32.totalorder %v631, %v438
        %vm1695 = vcmp.eq.s32.totalorder %v635, %v421
        %vm1696 = vcmp.eq.s32.totalorder %v635, %v422
        %vm1697 = vcmp.eq.s32.totalorder %v635, %v437
        %vm1698 = vcmp.eq.s32.totalorder %v635, %v438
        %vm1699 = vcmp.eq.s32.totalorder %v639, %v421
        %vm1700 = vcmp.eq.s32.totalorder %v639, %v422
        %vm1701 = vcmp.eq.s32.totalorder %v639, %v437
        %vm1702 = vcmp.eq.s32.totalorder %v639, %v438
        %vm1703 = vcmp.eq.s32.totalorder %v646, %v421
        %vm1704 = vcmp.eq.s32.totalorder %v646, %v422
        %vm1705 = vcmp.eq.s32.totalorder %v646, %v437
        %vm1706 = vcmp.eq.s32.totalorder %v646, %v438
        %vm1707 = vcmp.eq.s32.totalorder %v650, %v421
        %vm1708 = vcmp.eq.s32.totalorder %v650, %v422
        %vm1709 = vcmp.eq.s32.totalorder %v650, %v437
        %vm1710 = vcmp.eq.s32.totalorder %v650, %v438
        %vm1711 = vcmp.eq.s32.totalorder %v654, %v421
        %vm1712 = vcmp.eq.s32.totalorder %v654, %v422
        %vm1713 = vcmp.eq.s32.totalorder %v654, %v437
        %vm1714 = vcmp.eq.s32.totalorder %v654, %v438
        %vm1715 = vcmp.eq.s32.totalorder %v658, %v421
        %vm1716 = vcmp.eq.s32.totalorder %v658, %v422
        %vm1717 = vcmp.eq.s32.totalorder %v658, %v437
        %vm1718 = vcmp.eq.s32.totalorder %v658, %v438
        %vm1719 = vcmp.eq.s32.totalorder %v662, %v421
        %vm1720 = vcmp.eq.s32.totalorder %v662, %v422
        %vm1721 = vcmp.eq.s32.totalorder %v662, %v437
        %vm1722 = vcmp.eq.s32.totalorder %v662, %v438
        %vm1723 = vcmp.eq.s32.totalorder %v666, %v421
        %vm1724 = vcmp.eq.s32.totalorder %v666, %v422
        %vm1725 = vcmp.eq.s32.totalorder %v666, %v437
        %vm1726 = vcmp.eq.s32.totalorder %v666, %v438
        %vm1727 = vcmp.eq.s32.totalorder %v670, %v421
        %vm1728 = vcmp.eq.s32.totalorder %v670, %v422
        %vm1729 = vcmp.eq.s32.totalorder %v670, %v437
        %vm1730 = vcmp.eq.s32.totalorder %v670, %v438
        %vm1731 = vcmp.eq.s32.totalorder %v674, %v421
        %vm1732 = vcmp.eq.s32.totalorder %v674, %v422
        %vm1733 = vcmp.eq.s32.totalorder %v674, %v437
        %vm1734 = vcmp.eq.s32.totalorder %v674, %v438
        %vm1735 = vcmp.eq.s32.totalorder %v678, %v421
        %vm1736 = vcmp.eq.s32.totalorder %v678, %v422
        %vm1737 = vcmp.eq.s32.totalorder %v678, %v437
        %vm1738 = vcmp.eq.s32.totalorder %v678, %v438
        %vm1739 = vcmp.eq.s32.totalorder %v682, %v421
        %vm1740 = vcmp.eq.s32.totalorder %v682, %v422
        %vm1741 = vcmp.eq.s32.totalorder %v682, %v437
        %vm1742 = vcmp.eq.s32.totalorder %v682, %v438
        %vm1743 = vcmp.eq.s32.totalorder %v686, %v421
        %vm1744 = vcmp.eq.s32.totalorder %v686, %v422
        %vm1745 = vcmp.eq.s32.totalorder %v686, %v437
        %vm1746 = vcmp.eq.s32.totalorder %v686, %v438
        %vm1747 = vcmp.eq.s32.totalorder %v690, %v421
        %vm1748 = vcmp.eq.s32.totalorder %v690, %v422
        %vm1749 = vcmp.eq.s32.totalorder %v690, %v437
        %vm1750 = vcmp.eq.s32.totalorder %v690, %v438
        %vm1751 = vcmp.eq.s32.totalorder %v694, %v421
        %vm1752 = vcmp.eq.s32.totalorder %v694, %v422
        %vm1753 = vcmp.eq.s32.totalorder %v694, %v437
        %vm1754 = vcmp.eq.s32.totalorder %v694, %v438
        %vm1755 = vcmp.eq.s32.totalorder %v698, %v421
        %vm1756 = vcmp.eq.s32.totalorder %v698, %v422
        %vm1757 = vcmp.eq.s32.totalorder %v698, %v437
        %vm1758 = vcmp.eq.s32.totalorder %v698, %v438
        %vm1759 = vcmp.eq.s32.totalorder %v702, %v421
        %vm1760 = vcmp.eq.s32.totalorder %v702, %v422
        %vm1761 = vcmp.eq.s32.totalorder %v702, %v437
        %vm1762 = vcmp.eq.s32.totalorder %v702, %v438
        %vm1763 = vcmp.eq.s32.totalorder %v706, %v421
        %vm1764 = vcmp.eq.s32.totalorder %v706, %v422
        %vm1765 = vcmp.eq.s32.totalorder %v706, %v437
        %vm1766 = vcmp.eq.s32.totalorder %v706, %v438
        %vm1767 = vcmp.eq.s32.totalorder %v713, %v421
        %vm1768 = vcmp.eq.s32.totalorder %v713, %v422
        %vm1769 = vcmp.eq.s32.totalorder %v713, %v437
        %vm1770 = vcmp.eq.s32.totalorder %v713, %v438
        %vm1771 = vcmp.eq.s32.totalorder %v717, %v421
        %vm1772 = vcmp.eq.s32.totalorder %v717, %v422
        %vm1773 = vcmp.eq.s32.totalorder %v717, %v437
        %vm1774 = vcmp.eq.s32.totalorder %v717, %v438
        %vm1775 = vcmp.eq.s32.totalorder %v721, %v421
        %vm1776 = vcmp.eq.s32.totalorder %v721, %v422
        %vm1777 = vcmp.eq.s32.totalorder %v721, %v437
        %vm1778 = vcmp.eq.s32.totalorder %v721, %v438
        %vm1779 = vcmp.eq.s32.totalorder %v725, %v421
        %vm1780 = vcmp.eq.s32.totalorder %v725, %v422
        %vm1781 = vcmp.eq.s32.totalorder %v725, %v437
        %vm1782 = vcmp.eq.s32.totalorder %v725, %v438
        %vm1783 = vcmp.eq.s32.totalorder %v729, %v421
        %vm1784 = vcmp.eq.s32.totalorder %v729, %v422
        %vm1785 = vcmp.eq.s32.totalorder %v729, %v437
        %vm1786 = vcmp.eq.s32.totalorder %v729, %v438
        %vm1787 = vcmp.eq.s32.totalorder %v733, %v421
        %vm1788 = vcmp.eq.s32.totalorder %v733, %v422
        %vm1789 = vcmp.eq.s32.totalorder %v733, %v437
        %vm1790 = vcmp.eq.s32.totalorder %v733, %v438
        %vm1791 = vcmp.eq.s32.totalorder %v737, %v421
        %vm1792 = vcmp.eq.s32.totalorder %v737, %v422
        %vm1793 = vcmp.eq.s32.totalorder %v737, %v437
        %vm1794 = vcmp.eq.s32.totalorder %v737, %v438
        %vm1795 = vcmp.eq.s32.totalorder %v741, %v421
        %vm1796 = vcmp.eq.s32.totalorder %v741, %v422
        %vm1797 = vcmp.eq.s32.totalorder %v741, %v437
        %vm1798 = vcmp.eq.s32.totalorder %v741, %v438
        %vm1799 = vcmp.eq.s32.totalorder %v745, %v421
        %vm1800 = vcmp.eq.s32.totalorder %v745, %v422
        %vm1801 = vcmp.eq.s32.totalorder %v745, %v437
        %vm1802 = vcmp.eq.s32.totalorder %v745, %v438
        %vm1803 = vcmp.eq.s32.totalorder %v749, %v421
        %vm1804 = vcmp.eq.s32.totalorder %v749, %v422
        %vm1805 = vcmp.eq.s32.totalorder %v749, %v437
        %vm1806 = vcmp.eq.s32.totalorder %v749, %v438
        %vm1807 = vcmp.eq.s32.totalorder %v753, %v421
        %vm1808 = vcmp.eq.s32.totalorder %v753, %v422
        %vm1809 = vcmp.eq.s32.totalorder %v753, %v437
        %vm1810 = vcmp.eq.s32.totalorder %v753, %v438
        %vm1811 = vcmp.eq.s32.totalorder %v757, %v421
        %vm1812 = vcmp.eq.s32.totalorder %v757, %v422
        %vm1813 = vcmp.eq.s32.totalorder %v757, %v437
        %vm1814 = vcmp.eq.s32.totalorder %v757, %v438
        %vm1815 = vcmp.eq.s32.totalorder %v761, %v421
        %vm1816 = vcmp.eq.s32.totalorder %v761, %v422
        %vm1817 = vcmp.eq.s32.totalorder %v761, %v437
        %vm1818 = vcmp.eq.s32.totalorder %v761, %v438
        %vm1819 = vcmp.eq.s32.totalorder %v765, %v421
        %vm1820 = vcmp.eq.s32.totalorder %v765, %v422
        %vm1821 = vcmp.eq.s32.totalorder %v765, %v437
        %vm1822 = vcmp.eq.s32.totalorder %v765, %v438
        %vm1823 = vcmp.eq.s32.totalorder %v769, %v421
        %vm1824 = vcmp.eq.s32.totalorder %v769, %v422
        %vm1825 = vcmp.eq.s32.totalorder %v769, %v437
        %vm1826 = vcmp.eq.s32.totalorder %v769, %v438
        %vm1827 = vcmp.eq.s32.totalorder %v773, %v421
        %vm1828 = vcmp.eq.s32.totalorder %v773, %v422
        %vm1829 = vcmp.eq.s32.totalorder %v773, %v437
        %vm1830 = vcmp.eq.s32.totalorder %v773, %v438
        %vm1831 = vcmp.eq.s32.totalorder %v780, %v421
        %vm1832 = vcmp.eq.s32.totalorder %v780, %v422
        %vm1833 = vcmp.eq.s32.totalorder %v780, %v437
        %vm1834 = vcmp.eq.s32.totalorder %v780, %v438
        %vm1835 = vcmp.eq.s32.totalorder %v784, %v421
        %vm1836 = vcmp.eq.s32.totalorder %v784, %v422
        %vm1837 = vcmp.eq.s32.totalorder %v784, %v437
        %vm1838 = vcmp.eq.s32.totalorder %v784, %v438
        %vm1839 = vcmp.eq.s32.totalorder %v788, %v421
        %vm1840 = vcmp.eq.s32.totalorder %v788, %v422
        %vm1841 = vcmp.eq.s32.totalorder %v788, %v437
        %vm1842 = vcmp.eq.s32.totalorder %v788, %v438
        %vm1843 = vcmp.eq.s32.totalorder %v792, %v421
        %vm1844 = vcmp.eq.s32.totalorder %v792, %v422
        %vm1845 = vcmp.eq.s32.totalorder %v792, %v437
        %vm1846 = vcmp.eq.s32.totalorder %v792, %v438
        %vm1847 = vcmp.eq.s32.totalorder %v796, %v421
        %vm1848 = vcmp.eq.s32.totalorder %v796, %v422
        %vm1849 = vcmp.eq.s32.totalorder %v796, %v437
        %vm1850 = vcmp.eq.s32.totalorder %v796, %v438
        %vm1851 = vcmp.eq.s32.totalorder %v800, %v421
        %vm1852 = vcmp.eq.s32.totalorder %v800, %v422
        %vm1853 = vcmp.eq.s32.totalorder %v800, %v437
        %vm1854 = vcmp.eq.s32.totalorder %v800, %v438
        %vm1855 = vcmp.eq.s32.totalorder %v804, %v421
        %vm1856 = vcmp.eq.s32.totalorder %v804, %v422
        %vm1857 = vcmp.eq.s32.totalorder %v804, %v437
        %vm1858 = vcmp.eq.s32.totalorder %v804, %v438
        %vm1859 = vcmp.eq.s32.totalorder %v808, %v421
        %vm1860 = vcmp.eq.s32.totalorder %v808, %v422
        %vm1861 = vcmp.eq.s32.totalorder %v808, %v437
        %vm1862 = vcmp.eq.s32.totalorder %v808, %v438
        %vm1863 = vcmp.eq.s32.totalorder %v812, %v421
        %vm1864 = vcmp.eq.s32.totalorder %v812, %v422
        %vm1865 = vcmp.eq.s32.totalorder %v812, %v437
        %vm1866 = vcmp.eq.s32.totalorder %v812, %v438
        %vm1867 = vcmp.eq.s32.totalorder %v816, %v421
        %vm1868 = vcmp.eq.s32.totalorder %v816, %v422
        %vm1869 = vcmp.eq.s32.totalorder %v816, %v437
        %vm1870 = vcmp.eq.s32.totalorder %v816, %v438
        %vm1871 = vcmp.eq.s32.totalorder %v820, %v421
        %vm1872 = vcmp.eq.s32.totalorder %v820, %v422
        %vm1873 = vcmp.eq.s32.totalorder %v820, %v437
        %vm1874 = vcmp.eq.s32.totalorder %v820, %v438
        %vm1875 = vcmp.eq.s32.totalorder %v824, %v421
        %vm1876 = vcmp.eq.s32.totalorder %v824, %v422
        %vm1877 = vcmp.eq.s32.totalorder %v824, %v437
        %vm1878 = vcmp.eq.s32.totalorder %v824, %v438
        %vm1879 = vcmp.eq.s32.totalorder %v828, %v421
        %vm1880 = vcmp.eq.s32.totalorder %v828, %v422
        %vm1881 = vcmp.eq.s32.totalorder %v828, %v437
        %vm1882 = vcmp.eq.s32.totalorder %v828, %v438
        %vm1883 = vcmp.eq.s32.totalorder %v832, %v421
        %vm1884 = vcmp.eq.s32.totalorder %v832, %v422
        %vm1885 = vcmp.eq.s32.totalorder %v832, %v437
        %vm1886 = vcmp.eq.s32.totalorder %v832, %v438
        %vm1887 = vcmp.eq.s32.totalorder %v836, %v421
        %vm1888 = vcmp.eq.s32.totalorder %v836, %v422
        %vm1889 = vcmp.eq.s32.totalorder %v836, %v437
        %vm1890 = vcmp.eq.s32.totalorder %v836, %v438
        %vm1891 = vcmp.eq.s32.totalorder %v840, %v421
        %vm1892 = vcmp.eq.s32.totalorder %v840, %v422
        %vm1893 = vcmp.eq.s32.totalorder %v840, %v437
        %vm1894 = vcmp.eq.s32.totalorder %v840, %v438
        %vm1895 = vcmp.eq.s32.totalorder %v847, %v421
        %vm1896 = vcmp.eq.s32.totalorder %v847, %v422
        %vm1897 = vcmp.eq.s32.totalorder %v847, %v437
        %vm1898 = vcmp.eq.s32.totalorder %v847, %v438
        %vm1899 = vcmp.eq.s32.totalorder %v851, %v421
        %vm1900 = vcmp.eq.s32.totalorder %v851, %v422
        %vm1901 = vcmp.eq.s32.totalorder %v851, %v437
        %vm1902 = vcmp.eq.s32.totalorder %v851, %v438
        %vm1903 = vcmp.eq.s32.totalorder %v855, %v421
        %vm1904 = vcmp.eq.s32.totalorder %v855, %v422
        %vm1905 = vcmp.eq.s32.totalorder %v855, %v437
        %vm1906 = vcmp.eq.s32.totalorder %v855, %v438
        %vm1907 = vcmp.eq.s32.totalorder %v859, %v421
        %vm1908 = vcmp.eq.s32.totalorder %v859, %v422
        %vm1909 = vcmp.eq.s32.totalorder %v859, %v437
        %vm1910 = vcmp.eq.s32.totalorder %v859, %v438
        %vm1911 = vcmp.eq.s32.totalorder %v863, %v421
        %vm1912 = vcmp.eq.s32.totalorder %v863, %v422
        %vm1913 = vcmp.eq.s32.totalorder %v863, %v437
        %vm1914 = vcmp.eq.s32.totalorder %v863, %v438
        %vm1915 = vcmp.eq.s32.totalorder %v867, %v421
        %vm1916 = vcmp.eq.s32.totalorder %v867, %v422
        %vm1917 = vcmp.eq.s32.totalorder %v867, %v437
        %vm1918 = vcmp.eq.s32.totalorder %v867, %v438
        %vm1919 = vcmp.eq.s32.totalorder %v871, %v421
        %vm1920 = vcmp.eq.s32.totalorder %v871, %v422
        %vm1921 = vcmp.eq.s32.totalorder %v871, %v437
        %vm1922 = vcmp.eq.s32.totalorder %v871, %v438
        %vm1923 = vcmp.eq.s32.totalorder %v875, %v421
        %vm1924 = vcmp.eq.s32.totalorder %v875, %v422
        %vm1925 = vcmp.eq.s32.totalorder %v875, %v437
        %vm1926 = vcmp.eq.s32.totalorder %v875, %v438
        %vm1927 = vcmp.eq.s32.totalorder %v879, %v421
        %vm1928 = vcmp.eq.s32.totalorder %v879, %v422
        %vm1929 = vcmp.eq.s32.totalorder %v879, %v437
        %vm1930 = vcmp.eq.s32.totalorder %v879, %v438
        %vm1931 = vcmp.eq.s32.totalorder %v883, %v421
        %vm1932 = vcmp.eq.s32.totalorder %v883, %v422
        %vm1933 = vcmp.eq.s32.totalorder %v883, %v437
        %vm1934 = vcmp.eq.s32.totalorder %v883, %v438
        %vm1935 = vcmp.eq.s32.totalorder %v887, %v421
        %vm1936 = vcmp.eq.s32.totalorder %v887, %v422
        %vm1937 = vcmp.eq.s32.totalorder %v887, %v437
        %vm1938 = vcmp.eq.s32.totalorder %v887, %v438
        %vm1939 = vcmp.eq.s32.totalorder %v891, %v421
        %vm1940 = vcmp.eq.s32.totalorder %v891, %v422
        %vm1941 = vcmp.eq.s32.totalorder %v891, %v437
        %vm1942 = vcmp.eq.s32.totalorder %v891, %v438
        %vm1943 = vcmp.eq.s32.totalorder %v895, %v421
        %vm1944 = vcmp.eq.s32.totalorder %v895, %v422
        %vm1945 = vcmp.eq.s32.totalorder %v895, %v437
        %vm1946 = vcmp.eq.s32.totalorder %v895, %v438
        %vm1947 = vcmp.eq.s32.totalorder %v899, %v421
        %vm1948 = vcmp.eq.s32.totalorder %v899, %v422
        %vm1949 = vcmp.eq.s32.totalorder %v899, %v437
        %vm1950 = vcmp.eq.s32.totalorder %v899, %v438
        %vm1951 = vcmp.eq.s32.totalorder %v903, %v421
        %vm1952 = vcmp.eq.s32.totalorder %v903, %v422
        %vm1953 = vcmp.eq.s32.totalorder %v903, %v437
        %vm1954 = vcmp.eq.s32.totalorder %v903, %v438
        %vm1955 = vcmp.eq.s32.totalorder %v907, %v421
        %vm1956 = vcmp.eq.s32.totalorder %v907, %v422
        %vm1957 = vcmp.eq.s32.totalorder %v907, %v437
        %vm1958 = vcmp.eq.s32.totalorder %v907, %v438
        %vm1959 = vcmp.eq.s32.totalorder %v914, %v421
        %vm1960 = vcmp.eq.s32.totalorder %v914, %v422
        %vm1961 = vcmp.eq.s32.totalorder %v914, %v437
        %vm1962 = vcmp.eq.s32.totalorder %v914, %v438
        %vm1963 = vcmp.eq.s32.totalorder %v918, %v421
        %vm1964 = vcmp.eq.s32.totalorder %v918, %v422
        %vm1965 = vcmp.eq.s32.totalorder %v918, %v437
        %vm1966 = vcmp.eq.s32.totalorder %v918, %v438
        %vm1967 = vcmp.eq.s32.totalorder %v922, %v421
        %vm1968 = vcmp.eq.s32.totalorder %v922, %v422
        %vm1969 = vcmp.eq.s32.totalorder %v922, %v437
        %vm1970 = vcmp.eq.s32.totalorder %v922, %v438
        %vm1971 = vcmp.eq.s32.totalorder %v926, %v421
        %vm1972 = vcmp.eq.s32.totalorder %v926, %v422
        %vm1973 = vcmp.eq.s32.totalorder %v926, %v437
        %vm1974 = vcmp.eq.s32.totalorder %v926, %v438
        %vm1975 = vcmp.eq.s32.totalorder %v930, %v421
        %vm1976 = vcmp.eq.s32.totalorder %v930, %v422
        %vm1977 = vcmp.eq.s32.totalorder %v930, %v437
        %vm1978 = vcmp.eq.s32.totalorder %v930, %v438
        %vm1979 = vcmp.eq.s32.totalorder %v934, %v421
        %vm1980 = vcmp.eq.s32.totalorder %v934, %v422
        %vm1981 = vcmp.eq.s32.totalorder %v934, %v437
        %vm1982 = vcmp.eq.s32.totalorder %v934, %v438
        %vm1983 = vcmp.eq.s32.totalorder %v938, %v421
        %vm1984 = vcmp.eq.s32.totalorder %v938, %v422
        %vm1985 = vcmp.eq.s32.totalorder %v938, %v437
        %vm1986 = vcmp.eq.s32.totalorder %v938, %v438
        %vm1987 = vcmp.eq.s32.totalorder %v942, %v421
        %vm1988 = vcmp.eq.s32.totalorder %v942, %v422
        %vm1989 = vcmp.eq.s32.totalorder %v942, %v437
        %vm1990 = vcmp.eq.s32.totalorder %v942, %v438
        %vm1991 = vcmp.eq.s32.totalorder %v946, %v421
        %vm1992 = vcmp.eq.s32.totalorder %v946, %v422
        %vm1993 = vcmp.eq.s32.totalorder %v946, %v437
        %vm1994 = vcmp.eq.s32.totalorder %v946, %v438
        %vm1995 = vcmp.eq.s32.totalorder %v950, %v421
        %vm1996 = vcmp.eq.s32.totalorder %v950, %v422
        %vm1997 = vcmp.eq.s32.totalorder %v950, %v437
        %vm1998 = vcmp.eq.s32.totalorder %v950, %v438
        %vm1999 = vcmp.eq.s32.totalorder %v954, %v421
        %vm2000 = vcmp.eq.s32.totalorder %v954, %v422
        %vm2001 = vcmp.eq.s32.totalorder %v954, %v437
        %vm2002 = vcmp.eq.s32.totalorder %v954, %v438
        %vm2003 = vcmp.eq.s32.totalorder %v958, %v421
        %vm2004 = vcmp.eq.s32.totalorder %v958, %v422
        %vm2005 = vcmp.eq.s32.totalorder %v958, %v437
        %vm2006 = vcmp.eq.s32.totalorder %v958, %v438
        %vm2007 = vcmp.eq.s32.totalorder %v962, %v421
        %vm2008 = vcmp.eq.s32.totalorder %v962, %v422
        %vm2009 = vcmp.eq.s32.totalorder %v962, %v437
        %vm2010 = vcmp.eq.s32.totalorder %v962, %v438
        %vm2011 = vcmp.eq.s32.totalorder %v966, %v421
        %vm2012 = vcmp.eq.s32.totalorder %v966, %v422
        %vm2013 = vcmp.eq.s32.totalorder %v966, %v437
        %vm2014 = vcmp.eq.s32.totalorder %v966, %v438
        %vm2015 = vcmp.eq.s32.totalorder %v970, %v421
        %vm2016 = vcmp.eq.s32.totalorder %v970, %v422
        %vm2017 = vcmp.eq.s32.totalorder %v970, %v437
        %vm2018 = vcmp.eq.s32.totalorder %v970, %v438
        %vm2019 = vcmp.eq.s32.totalorder %v974, %v421
        %vm2020 = vcmp.eq.s32.totalorder %v974, %v422
        %vm2021 = vcmp.eq.s32.totalorder %v974, %v437
        %vm2022 = vcmp.eq.s32.totalorder %v974, %v438
        %vm2023 = vcmp.eq.s32.totalorder %v981, %v421
        %vm2024 = vcmp.eq.s32.totalorder %v981, %v422
        %vm2025 = vcmp.eq.s32.totalorder %v981, %v437
        %vm2026 = vcmp.eq.s32.totalorder %v981, %v438
        %vm2027 = vcmp.eq.s32.totalorder %v985, %v421
        %vm2028 = vcmp.eq.s32.totalorder %v985, %v422
        %vm2029 = vcmp.eq.s32.totalorder %v985, %v437
        %vm2030 = vcmp.eq.s32.totalorder %v985, %v438
        %vm2031 = vcmp.eq.s32.totalorder %v989, %v421
        %vm2032 = vcmp.eq.s32.totalorder %v989, %v422
        %vm2033 = vcmp.eq.s32.totalorder %v989, %v437
        %vm2034 = vcmp.eq.s32.totalorder %v989, %v438
        %vm2035 = vcmp.eq.s32.totalorder %v993, %v421
        %vm2036 = vcmp.eq.s32.totalorder %v993, %v422
        %vm2037 = vcmp.eq.s32.totalorder %v993, %v437
        %vm2038 = vcmp.eq.s32.totalorder %v993, %v438
        %vm2039 = vcmp.eq.s32.totalorder %v997, %v421
        %vm2040 = vcmp.eq.s32.totalorder %v997, %v422
        %vm2041 = vcmp.eq.s32.totalorder %v997, %v437
        %vm2042 = vcmp.eq.s32.totalorder %v997, %v438
        %vm2043 = vcmp.eq.s32.totalorder %v1001, %v421
        %vm2044 = vcmp.eq.s32.totalorder %v1001, %v422
        %vm2045 = vcmp.eq.s32.totalorder %v1001, %v437
        %vm2046 = vcmp.eq.s32.totalorder %v1001, %v438
        %vm2047 = vcmp.eq.s32.totalorder %v1005, %v421
        %vm2048 = vcmp.eq.s32.totalorder %v1005, %v422
        %vm2049 = vcmp.eq.s32.totalorder %v1005, %v437
        %vm2050 = vcmp.eq.s32.totalorder %v1005, %v438
        %vm2051 = vcmp.eq.s32.totalorder %v1009, %v421
        %vm2052 = vcmp.eq.s32.totalorder %v1009, %v422
        %vm2053 = vcmp.eq.s32.totalorder %v1009, %v437
        %vm2054 = vcmp.eq.s32.totalorder %v1009, %v438
        %vm2055 = vcmp.eq.s32.totalorder %v1013, %v421
        %vm2056 = vcmp.eq.s32.totalorder %v1013, %v422
        %vm2057 = vcmp.eq.s32.totalorder %v1013, %v437
        %vm2058 = vcmp.eq.s32.totalorder %v1013, %v438
        %vm2059 = vcmp.eq.s32.totalorder %v1017, %v421
        %vm2060 = vcmp.eq.s32.totalorder %v1017, %v422
        %vm2061 = vcmp.eq.s32.totalorder %v1017, %v437
        %vm2062 = vcmp.eq.s32.totalorder %v1017, %v438
        %vm2063 = vcmp.eq.s32.totalorder %v1021, %v421
        %vm2064 = vcmp.eq.s32.totalorder %v1021, %v422
        %vm2065 = vcmp.eq.s32.totalorder %v1021, %v437
        %vm2066 = vcmp.eq.s32.totalorder %v1021, %v438
        %vm2067 = vcmp.eq.s32.totalorder %v1025, %v421
        %vm2068 = vcmp.eq.s32.totalorder %v1025, %v422
        %vm2069 = vcmp.eq.s32.totalorder %v1025, %v437
        %vm2070 = vcmp.eq.s32.totalorder %v1025, %v438
        %vm2071 = vcmp.eq.s32.totalorder %v1029, %v421
        %vm2072 = vcmp.eq.s32.totalorder %v1029, %v422
        %vm2073 = vcmp.eq.s32.totalorder %v1029, %v437
        %vm2074 = vcmp.eq.s32.totalorder %v1029, %v438
        %vm2075 = vcmp.eq.s32.totalorder %v1033, %v421
        %vm2076 = vcmp.eq.s32.totalorder %v1033, %v422
        %vm2077 = vcmp.eq.s32.totalorder %v1033, %v437
        %vm2078 = vcmp.eq.s32.totalorder %v1033, %v438
        %vm2079 = vcmp.eq.s32.totalorder %v1037, %v421
        %vm2080 = vcmp.eq.s32.totalorder %v1037, %v422
        %vm2081 = vcmp.eq.s32.totalorder %v1037, %v437
        %vm2082 = vcmp.eq.s32.totalorder %v1037, %v438
        %vm2083 = vcmp.eq.s32.totalorder %v1041, %v421
        %vm2084 = vcmp.eq.s32.totalorder %v1041, %v422
        %vm2085 = vcmp.eq.s32.totalorder %v1041, %v437
        %vm2086 = vcmp.eq.s32.totalorder %v1041, %v438
        %vm2087 = vcmp.eq.s32.totalorder %v1048, %v421
        %vm2088 = vcmp.eq.s32.totalorder %v1048, %v422
        %vm2089 = vcmp.eq.s32.totalorder %v1048, %v437
        %vm2090 = vcmp.eq.s32.totalorder %v1048, %v438
        %vm2091 = vcmp.eq.s32.totalorder %v1052, %v421
        %vm2092 = vcmp.eq.s32.totalorder %v1052, %v422
        %vm2093 = vcmp.eq.s32.totalorder %v1052, %v437
        %vm2094 = vcmp.eq.s32.totalorder %v1052, %v438
        %vm2095 = vcmp.eq.s32.totalorder %v1056, %v421
        %vm2096 = vcmp.eq.s32.totalorder %v1056, %v422
        %vm2097 = vcmp.eq.s32.totalorder %v1056, %v437
        %vm2098 = vcmp.eq.s32.totalorder %v1056, %v438
        %vm2099 = vcmp.eq.s32.totalorder %v1060, %v421
        %vm2100 = vcmp.eq.s32.totalorder %v1060, %v422
        %vm2101 = vcmp.eq.s32.totalorder %v1060, %v437
        %vm2102 = vcmp.eq.s32.totalorder %v1060, %v438
        %vm2103 = vcmp.eq.s32.totalorder %v1064, %v421
        %vm2104 = vcmp.eq.s32.totalorder %v1064, %v422
        %vm2105 = vcmp.eq.s32.totalorder %v1064, %v437
        %vm2106 = vcmp.eq.s32.totalorder %v1064, %v438
        %vm2107 = vcmp.eq.s32.totalorder %v1068, %v421
        %vm2108 = vcmp.eq.s32.totalorder %v1068, %v422
        %vm2109 = vcmp.eq.s32.totalorder %v1068, %v437
        %vm2110 = vcmp.eq.s32.totalorder %v1068, %v438
        %vm2111 = vcmp.eq.s32.totalorder %v1072, %v421
        %vm2112 = vcmp.eq.s32.totalorder %v1072, %v422
        %vm2113 = vcmp.eq.s32.totalorder %v1072, %v437
        %vm2114 = vcmp.eq.s32.totalorder %v1072, %v438
        %vm2115 = vcmp.eq.s32.totalorder %v1076, %v421
        %vm2116 = vcmp.eq.s32.totalorder %v1076, %v422
        %vm2117 = vcmp.eq.s32.totalorder %v1076, %v437
        %vm2118 = vcmp.eq.s32.totalorder %v1076, %v438
        %vm2119 = vcmp.eq.s32.totalorder %v1080, %v421
        %vm2120 = vcmp.eq.s32.totalorder %v1080, %v422
        %vm2121 = vcmp.eq.s32.totalorder %v1080, %v437
        %vm2122 = vcmp.eq.s32.totalorder %v1080, %v438
        %vm2123 = vcmp.eq.s32.totalorder %v1084, %v421
        %vm2124 = vcmp.eq.s32.totalorder %v1084, %v422
        %vm2125 = vcmp.eq.s32.totalorder %v1084, %v437
        %vm2126 = vcmp.eq.s32.totalorder %v1084, %v438
        %vm2127 = vcmp.eq.s32.totalorder %v1088, %v421
        %vm2128 = vcmp.eq.s32.totalorder %v1088, %v422
        %vm2129 = vcmp.eq.s32.totalorder %v1088, %v437
        %vm2130 = vcmp.eq.s32.totalorder %v1088, %v438
        %vm2131 = vcmp.eq.s32.totalorder %v1092, %v421
        %vm2132 = vcmp.eq.s32.totalorder %v1092, %v422
        %vm2133 = vcmp.eq.s32.totalorder %v1092, %v437
        %vm2134 = vcmp.eq.s32.totalorder %v1092, %v438
        %vm2135 = vcmp.eq.s32.totalorder %v1096, %v421
        %vm2136 = vcmp.eq.s32.totalorder %v1096, %v422
        %vm2137 = vcmp.eq.s32.totalorder %v1096, %v437
        %vm2138 = vcmp.eq.s32.totalorder %v1096, %v438
        %vm2139 = vcmp.eq.s32.totalorder %v1100, %v421
        %vm2140 = vcmp.eq.s32.totalorder %v1100, %v422
        %vm2141 = vcmp.eq.s32.totalorder %v1100, %v437
        %vm2142 = vcmp.eq.s32.totalorder %v1100, %v438
        %vm2143 = vcmp.eq.s32.totalorder %v1104, %v421
        %vm2144 = vcmp.eq.s32.totalorder %v1104, %v422
        %vm2145 = vcmp.eq.s32.totalorder %v1104, %v437
        %vm2146 = vcmp.eq.s32.totalorder %v1104, %v438
        %vm2147 = vcmp.eq.s32.totalorder %v1108, %v421
        %vm2148 = vcmp.eq.s32.totalorder %v1108, %v422
        %vm2149 = vcmp.eq.s32.totalorder %v1108, %v437
        %vm2150 = vcmp.eq.s32.totalorder %v1108, %v438
        %vm2151 = vcmp.eq.s32.totalorder %v1115, %v421
        %vm2152 = vcmp.eq.s32.totalorder %v1115, %v422
        %vm2153 = vcmp.eq.s32.totalorder %v1115, %v437
        %vm2154 = vcmp.eq.s32.totalorder %v1115, %v438
        %vm2155 = vcmp.eq.s32.totalorder %v1119, %v421
        %vm2156 = vcmp.eq.s32.totalorder %v1119, %v422
        %vm2157 = vcmp.eq.s32.totalorder %v1119, %v437
        %vm2158 = vcmp.eq.s32.totalorder %v1119, %v438
        %vm2159 = vcmp.eq.s32.totalorder %v1123, %v421
        %vm2160 = vcmp.eq.s32.totalorder %v1123, %v422
        %vm2161 = vcmp.eq.s32.totalorder %v1123, %v437
        %vm2162 = vcmp.eq.s32.totalorder %v1123, %v438
        %vm2163 = vcmp.eq.s32.totalorder %v1127, %v421
        %vm2164 = vcmp.eq.s32.totalorder %v1127, %v422
        %vm2165 = vcmp.eq.s32.totalorder %v1127, %v437
        %vm2166 = vcmp.eq.s32.totalorder %v1127, %v438
        %vm2167 = vcmp.eq.s32.totalorder %v1131, %v421
        %vm2168 = vcmp.eq.s32.totalorder %v1131, %v422
        %vm2169 = vcmp.eq.s32.totalorder %v1131, %v437
        %vm2170 = vcmp.eq.s32.totalorder %v1131, %v438
        %vm2171 = vcmp.eq.s32.totalorder %v1135, %v421
        %vm2172 = vcmp.eq.s32.totalorder %v1135, %v422
        %vm2173 = vcmp.eq.s32.totalorder %v1135, %v437
        %vm2174 = vcmp.eq.s32.totalorder %v1135, %v438
        %vm2175 = vcmp.eq.s32.totalorder %v1139, %v421
        %vm2176 = vcmp.eq.s32.totalorder %v1139, %v422
        %vm2177 = vcmp.eq.s32.totalorder %v1139, %v437
        %vm2178 = vcmp.eq.s32.totalorder %v1139, %v438
        %vm2179 = vcmp.eq.s32.totalorder %v1143, %v421
        %vm2180 = vcmp.eq.s32.totalorder %v1143, %v422
        %vm2181 = vcmp.eq.s32.totalorder %v1143, %v437
        %vm2182 = vcmp.eq.s32.totalorder %v1143, %v438
        %vm2183 = vcmp.eq.s32.totalorder %v1147, %v421
        %vm2184 = vcmp.eq.s32.totalorder %v1147, %v422
        %vm2185 = vcmp.eq.s32.totalorder %v1147, %v437
        %vm2186 = vcmp.eq.s32.totalorder %v1147, %v438
        %vm2187 = vcmp.eq.s32.totalorder %v1151, %v421
        %vm2188 = vcmp.eq.s32.totalorder %v1151, %v422
        %vm2189 = vcmp.eq.s32.totalorder %v1151, %v437
        %vm2190 = vcmp.eq.s32.totalorder %v1151, %v438
        %vm2191 = vcmp.eq.s32.totalorder %v1155, %v421
        %vm2192 = vcmp.eq.s32.totalorder %v1155, %v422
        %vm2193 = vcmp.eq.s32.totalorder %v1155, %v437
        %vm2194 = vcmp.eq.s32.totalorder %v1155, %v438
        %vm2195 = vcmp.eq.s32.totalorder %v1159, %v421
        %vm2196 = vcmp.eq.s32.totalorder %v1159, %v422
        %vm2197 = vcmp.eq.s32.totalorder %v1159, %v437
        %vm2198 = vcmp.eq.s32.totalorder %v1159, %v438
        %vm2199 = vcmp.eq.s32.totalorder %v1163, %v421
        %vm2200 = vcmp.eq.s32.totalorder %v1163, %v422
        %vm2201 = vcmp.eq.s32.totalorder %v1163, %v437
        %vm2202 = vcmp.eq.s32.totalorder %v1163, %v438
        %vm2203 = vcmp.eq.s32.totalorder %v1167, %v421
        %vm2204 = vcmp.eq.s32.totalorder %v1167, %v422
        %vm2205 = vcmp.eq.s32.totalorder %v1167, %v437
        %vm2206 = vcmp.eq.s32.totalorder %v1167, %v438
        %vm2207 = vcmp.eq.s32.totalorder %v1171, %v421
        %vm2208 = vcmp.eq.s32.totalorder %v1171, %v422
        %vm2209 = vcmp.eq.s32.totalorder %v1171, %v437
        %vm2210 = vcmp.eq.s32.totalorder %v1171, %v438
        %vm2211 = vcmp.eq.s32.totalorder %v1175, %v421
        %vm2212 = vcmp.eq.s32.totalorder %v1175, %v422
        %vm2213 = vcmp.eq.s32.totalorder %v1175, %v437
        %vm2214 = vcmp.eq.s32.totalorder %v1175, %v438
        %vm2215 = vcmp.eq.s32.totalorder %v1182, %v421
        %vm2216 = vcmp.eq.s32.totalorder %v1182, %v422
        %vm2217 = vcmp.eq.s32.totalorder %v1182, %v437
        %vm2218 = vcmp.eq.s32.totalorder %v1182, %v438
        %vm2219 = vcmp.eq.s32.totalorder %v1186, %v421
        %vm2220 = vcmp.eq.s32.totalorder %v1186, %v422
        %vm2221 = vcmp.eq.s32.totalorder %v1186, %v437
        %vm2222 = vcmp.eq.s32.totalorder %v1186, %v438
        %vm2223 = vcmp.eq.s32.totalorder %v1190, %v421
        %vm2224 = vcmp.eq.s32.totalorder %v1190, %v422
        %vm2225 = vcmp.eq.s32.totalorder %v1190, %v437
        %vm2226 = vcmp.eq.s32.totalorder %v1190, %v438
        %vm2227 = vcmp.eq.s32.totalorder %v1194, %v421
        %vm2228 = vcmp.eq.s32.totalorder %v1194, %v422
        %vm2229 = vcmp.eq.s32.totalorder %v1194, %v437
        %vm2230 = vcmp.eq.s32.totalorder %v1194, %v438
        %vm2231 = vcmp.eq.s32.totalorder %v1198, %v421
        %vm2232 = vcmp.eq.s32.totalorder %v1198, %v422
        %vm2233 = vcmp.eq.s32.totalorder %v1198, %v437
        %vm2234 = vcmp.eq.s32.totalorder %v1198, %v438
        %vm2235 = vcmp.eq.s32.totalorder %v1202, %v421
        %vm2236 = vcmp.eq.s32.totalorder %v1202, %v422
        %vm2237 = vcmp.eq.s32.totalorder %v1202, %v437
        %vm2238 = vcmp.eq.s32.totalorder %v1202, %v438
        %vm2239 = vcmp.eq.s32.totalorder %v1206, %v421
        %vm2240 = vcmp.eq.s32.totalorder %v1206, %v422
        %vm2241 = vcmp.eq.s32.totalorder %v1206, %v437
        %vm2242 = vcmp.eq.s32.totalorder %v1206, %v438
        %vm2243 = vcmp.eq.s32.totalorder %v1210, %v421
        %vm2244 = vcmp.eq.s32.totalorder %v1210, %v422
        %vm2245 = vcmp.eq.s32.totalorder %v1210, %v437
        %vm2246 = vcmp.eq.s32.totalorder %v1210, %v438
        %vm2247 = vcmp.eq.s32.totalorder %v1214, %v421
        %vm2248 = vcmp.eq.s32.totalorder %v1214, %v422
        %vm2249 = vcmp.eq.s32.totalorder %v1214, %v437
        %vm2250 = vcmp.eq.s32.totalorder %v1214, %v438
        %vm2251 = vcmp.eq.s32.totalorder %v1218, %v421
        %vm2252 = vcmp.eq.s32.totalorder %v1218, %v422
        %vm2253 = vcmp.eq.s32.totalorder %v1218, %v437
        %vm2254 = vcmp.eq.s32.totalorder %v1218, %v438
        %vm2255 = vcmp.eq.s32.totalorder %v1222, %v421
        %vm2256 = vcmp.eq.s32.totalorder %v1222, %v422
        %vm2257 = vcmp.eq.s32.totalorder %v1222, %v437
        %vm2258 = vcmp.eq.s32.totalorder %v1222, %v438
        %vm2259 = vcmp.eq.s32.totalorder %v1226, %v421
        %vm2260 = vcmp.eq.s32.totalorder %v1226, %v422
        %vm2261 = vcmp.eq.s32.totalorder %v1226, %v437
        %vm2262 = vcmp.eq.s32.totalorder %v1226, %v438
        %vm2263 = vcmp.eq.s32.totalorder %v1230, %v421
        %vm2264 = vcmp.eq.s32.totalorder %v1230, %v422
        %vm2265 = vcmp.eq.s32.totalorder %v1230, %v437
        %vm2266 = vcmp.eq.s32.totalorder %v1230, %v438
        %vm2267 = vcmp.eq.s32.totalorder %v1234, %v421
        %vm2268 = vcmp.eq.s32.totalorder %v1234, %v422
        %vm2269 = vcmp.eq.s32.totalorder %v1234, %v437
        %vm2270 = vcmp.eq.s32.totalorder %v1234, %v438
        %vm2271 = vcmp.eq.s32.totalorder %v1238, %v421
        %vm2272 = vcmp.eq.s32.totalorder %v1238, %v422
        %vm2273 = vcmp.eq.s32.totalorder %v1238, %v437
        %vm2274 = vcmp.eq.s32.totalorder %v1238, %v438
        %vm2275 = vcmp.eq.s32.totalorder %v1242, %v421
        %vm2276 = vcmp.eq.s32.totalorder %v1242, %v422
        %vm2277 = vcmp.eq.s32.totalorder %v1242, %v437
        %vm2278 = vcmp.eq.s32.totalorder %v1242, %v438
        %vm2279 = vcmp.eq.s32.totalorder %v1249, %v421
        %vm2280 = vcmp.eq.s32.totalorder %v1249, %v422
        %vm2281 = vcmp.eq.s32.totalorder %v1249, %v437
        %vm2282 = vcmp.eq.s32.totalorder %v1249, %v438
        %vm2283 = vcmp.eq.s32.totalorder %v1253, %v421
        %vm2284 = vcmp.eq.s32.totalorder %v1253, %v422
        %vm2285 = vcmp.eq.s32.totalorder %v1253, %v437
        %vm2286 = vcmp.eq.s32.totalorder %v1253, %v438
        %vm2287 = vcmp.eq.s32.totalorder %v1257, %v421
        %vm2288 = vcmp.eq.s32.totalorder %v1257, %v422
        %vm2289 = vcmp.eq.s32.totalorder %v1257, %v437
        %vm2290 = vcmp.eq.s32.totalorder %v1257, %v438
        %vm2291 = vcmp.eq.s32.totalorder %v1261, %v421
        %vm2292 = vcmp.eq.s32.totalorder %v1261, %v422
        %vm2293 = vcmp.eq.s32.totalorder %v1261, %v437
        %vm2294 = vcmp.eq.s32.totalorder %v1261, %v438
        %vm2295 = vcmp.eq.s32.totalorder %v1265, %v421
        %vm2296 = vcmp.eq.s32.totalorder %v1265, %v422
        %vm2297 = vcmp.eq.s32.totalorder %v1265, %v437
        %vm2298 = vcmp.eq.s32.totalorder %v1265, %v438
        %vm2299 = vcmp.eq.s32.totalorder %v1269, %v421
        %vm2300 = vcmp.eq.s32.totalorder %v1269, %v422
        %vm2301 = vcmp.eq.s32.totalorder %v1269, %v437
        %vm2302 = vcmp.eq.s32.totalorder %v1269, %v438
        %vm2303 = vcmp.eq.s32.totalorder %v1273, %v421
        %vm2304 = vcmp.eq.s32.totalorder %v1273, %v422
        %vm2305 = vcmp.eq.s32.totalorder %v1273, %v437
        %vm2306 = vcmp.eq.s32.totalorder %v1273, %v438
        %vm2307 = vcmp.eq.s32.totalorder %v1277, %v421
        %vm2308 = vcmp.eq.s32.totalorder %v1277, %v422
        %vm2309 = vcmp.eq.s32.totalorder %v1277, %v437
        %vm2310 = vcmp.eq.s32.totalorder %v1277, %v438
        %vm2311 = vcmp.eq.s32.totalorder %v1281, %v421
        %vm2312 = vcmp.eq.s32.totalorder %v1281, %v422
        %vm2313 = vcmp.eq.s32.totalorder %v1281, %v437
        %vm2314 = vcmp.eq.s32.totalorder %v1281, %v438
        %vm2315 = vcmp.eq.s32.totalorder %v1285, %v421
        %vm2316 = vcmp.eq.s32.totalorder %v1285, %v422
        %vm2317 = vcmp.eq.s32.totalorder %v1285, %v437
        %vm2318 = vcmp.eq.s32.totalorder %v1285, %v438
        %vm2319 = vcmp.eq.s32.totalorder %v1289, %v421
        %vm2320 = vcmp.eq.s32.totalorder %v1289, %v422
        %vm2321 = vcmp.eq.s32.totalorder %v1289, %v437
        %vm2322 = vcmp.eq.s32.totalorder %v1289, %v438
        %vm2323 = vcmp.eq.s32.totalorder %v1293, %v421
        %vm2324 = vcmp.eq.s32.totalorder %v1293, %v422
        %vm2325 = vcmp.eq.s32.totalorder %v1293, %v437
        %vm2326 = vcmp.eq.s32.totalorder %v1293, %v438
        %vm2327 = vcmp.eq.s32.totalorder %v1297, %v421
        %vm2328 = vcmp.eq.s32.totalorder %v1297, %v422
        %vm2329 = vcmp.eq.s32.totalorder %v1297, %v437
        %vm2330 = vcmp.eq.s32.totalorder %v1297, %v438
        %vm2331 = vcmp.eq.s32.totalorder %v1301, %v421
        %vm2332 = vcmp.eq.s32.totalorder %v1301, %v422
        %vm2333 = vcmp.eq.s32.totalorder %v1301, %v437
        %vm2334 = vcmp.eq.s32.totalorder %v1301, %v438
        %vm2335 = vcmp.eq.s32.totalorder %v1305, %v421
        %vm2336 = vcmp.eq.s32.totalorder %v1305, %v422
        %vm2337 = vcmp.eq.s32.totalorder %v1305, %v437
        %vm2338 = vcmp.eq.s32.totalorder %v1305, %v438
        %vm2339 = vcmp.eq.s32.totalorder %v1309, %v421
        %vm2340 = vcmp.eq.s32.totalorder %v1309, %v422
        %vm2341 = vcmp.eq.s32.totalorder %v1309, %v437
        %vm2342 = vcmp.eq.s32.totalorder %v1309, %v438
        %vm2343 = vcmp.eq.s32.totalorder %v1316, %v421
        %vm2344 = vcmp.eq.s32.totalorder %v1316, %v422
        %vm2345 = vcmp.eq.s32.totalorder %v1316, %v437
        %vm2346 = vcmp.eq.s32.totalorder %v1316, %v438
        %vm2347 = vcmp.eq.s32.totalorder %v1320, %v421
        %vm2348 = vcmp.eq.s32.totalorder %v1320, %v422
        %vm2349 = vcmp.eq.s32.totalorder %v1320, %v437
        %vm2350 = vcmp.eq.s32.totalorder %v1320, %v438
        %vm2351 = vcmp.eq.s32.totalorder %v1324, %v421
        %vm2352 = vcmp.eq.s32.totalorder %v1324, %v422
        %vm2353 = vcmp.eq.s32.totalorder %v1324, %v437
        %vm2354 = vcmp.eq.s32.totalorder %v1324, %v438
        %vm2355 = vcmp.eq.s32.totalorder %v1328, %v421
        %vm2356 = vcmp.eq.s32.totalorder %v1328, %v422
        %vm2357 = vcmp.eq.s32.totalorder %v1328, %v437
        %vm2358 = vcmp.eq.s32.totalorder %v1328, %v438
        %vm2359 = vcmp.eq.s32.totalorder %v1332, %v421
        %vm2360 = vcmp.eq.s32.totalorder %v1332, %v422
        %vm2361 = vcmp.eq.s32.totalorder %v1332, %v437
        %vm2362 = vcmp.eq.s32.totalorder %v1332, %v438
        %vm2363 = vcmp.eq.s32.totalorder %v1336, %v421
        %vm2364 = vcmp.eq.s32.totalorder %v1336, %v422
        %vm2365 = vcmp.eq.s32.totalorder %v1336, %v437
        %vm2366 = vcmp.eq.s32.totalorder %v1336, %v438
        %vm2367 = vcmp.eq.s32.totalorder %v1340, %v421
        %vm2368 = vcmp.eq.s32.totalorder %v1340, %v422
        %vm2369 = vcmp.eq.s32.totalorder %v1340, %v437
        %vm2370 = vcmp.eq.s32.totalorder %v1340, %v438
        %vm2371 = vcmp.eq.s32.totalorder %v1344, %v421
        %vm2372 = vcmp.eq.s32.totalorder %v1344, %v422
        %vm2373 = vcmp.eq.s32.totalorder %v1344, %v437
        %vm2374 = vcmp.eq.s32.totalorder %v1344, %v438
        %vm2375 = vcmp.eq.s32.totalorder %v1348, %v421
        %vm2376 = vcmp.eq.s32.totalorder %v1348, %v422
        %vm2377 = vcmp.eq.s32.totalorder %v1348, %v437
        %vm2378 = vcmp.eq.s32.totalorder %v1348, %v438
        %vm2379 = vcmp.eq.s32.totalorder %v1352, %v421
        %vm2380 = vcmp.eq.s32.totalorder %v1352, %v422
        %vm2381 = vcmp.eq.s32.totalorder %v1352, %v437
        %vm2382 = vcmp.eq.s32.totalorder %v1352, %v438
        %vm2383 = vcmp.eq.s32.totalorder %v1356, %v421
        %vm2384 = vcmp.eq.s32.totalorder %v1356, %v422
        %vm2385 = vcmp.eq.s32.totalorder %v1356, %v437
        %vm2386 = vcmp.eq.s32.totalorder %v1356, %v438
        %vm2387 = vcmp.eq.s32.totalorder %v1360, %v421
        %vm2388 = vcmp.eq.s32.totalorder %v1360, %v422
        %vm2389 = vcmp.eq.s32.totalorder %v1360, %v437
        %vm2390 = vcmp.eq.s32.totalorder %v1360, %v438
        %vm2391 = vcmp.eq.s32.totalorder %v1364, %v421
        %vm2392 = vcmp.eq.s32.totalorder %v1364, %v422
        %vm2393 = vcmp.eq.s32.totalorder %v1364, %v437
        %vm2394 = vcmp.eq.s32.totalorder %v1364, %v438
        %vm2395 = vcmp.eq.s32.totalorder %v1368, %v421
        %vm2396 = vcmp.eq.s32.totalorder %v1368, %v422
        %vm2397 = vcmp.eq.s32.totalorder %v1368, %v437
        %vm2398 = vcmp.eq.s32.totalorder %v1368, %v438
        %vm2399 = vcmp.eq.s32.totalorder %v1372, %v421
        %vm2400 = vcmp.eq.s32.totalorder %v1372, %v422
        %vm2401 = vcmp.eq.s32.totalorder %v1372, %v437
        %vm2402 = vcmp.eq.s32.totalorder %v1372, %v438
        %vm2403 = vcmp.eq.s32.totalorder %v1376, %v421
        %vm2404 = vcmp.eq.s32.totalorder %v1376, %v422
        %vm2405 = vcmp.eq.s32.totalorder %v1376, %v437
        %vm2406 = vcmp.eq.s32.totalorder %v1376, %v438
        %vm2407 = vcmp.eq.s32.totalorder %v1383, %v421
        %vm2408 = vcmp.eq.s32.totalorder %v1383, %v422
        %vm2409 = vcmp.eq.s32.totalorder %v1383, %v437
        %vm2410 = vcmp.eq.s32.totalorder %v1383, %v438
        %vm2411 = vcmp.eq.s32.totalorder %v1387, %v421
        %vm2412 = vcmp.eq.s32.totalorder %v1387, %v422
        %vm2413 = vcmp.eq.s32.totalorder %v1387, %v437
        %vm2414 = vcmp.eq.s32.totalorder %v1387, %v438
        %vm2415 = vcmp.eq.s32.totalorder %v1391, %v421
        %vm2416 = vcmp.eq.s32.totalorder %v1391, %v422
        %vm2417 = vcmp.eq.s32.totalorder %v1391, %v437
        %vm2418 = vcmp.eq.s32.totalorder %v1391, %v438
        %vm2419 = vcmp.eq.s32.totalorder %v1395, %v421
        %vm2420 = vcmp.eq.s32.totalorder %v1395, %v422
        %vm2421 = vcmp.eq.s32.totalorder %v1395, %v437
        %vm2422 = vcmp.eq.s32.totalorder %v1395, %v438
        %vm2423 = vcmp.eq.s32.totalorder %v1399, %v421
        %vm2424 = vcmp.eq.s32.totalorder %v1399, %v422
        %vm2425 = vcmp.eq.s32.totalorder %v1399, %v437
        %vm2426 = vcmp.eq.s32.totalorder %v1399, %v438
        %vm2427 = vcmp.eq.s32.totalorder %v1403, %v421
        %vm2428 = vcmp.eq.s32.totalorder %v1403, %v422
        %vm2429 = vcmp.eq.s32.totalorder %v1403, %v437
        %vm2430 = vcmp.eq.s32.totalorder %v1403, %v438
        %vm2431 = vcmp.eq.s32.totalorder %v1407, %v421
        %vm2432 = vcmp.eq.s32.totalorder %v1407, %v422
        %vm2433 = vcmp.eq.s32.totalorder %v1407, %v437
        %vm2434 = vcmp.eq.s32.totalorder %v1407, %v438
        %vm2435 = vcmp.eq.s32.totalorder %v1411, %v421
        %vm2436 = vcmp.eq.s32.totalorder %v1411, %v422
        %vm2437 = vcmp.eq.s32.totalorder %v1411, %v437
        %vm2438 = vcmp.eq.s32.totalorder %v1411, %v438
        %vm2439 = vcmp.eq.s32.totalorder %v1415, %v421
        %vm2440 = vcmp.eq.s32.totalorder %v1415, %v422
        %vm2441 = vcmp.eq.s32.totalorder %v1415, %v437
        %vm2442 = vcmp.eq.s32.totalorder %v1415, %v438
        %vm2443 = vcmp.eq.s32.totalorder %v1419, %v421
        %vm2444 = vcmp.eq.s32.totalorder %v1419, %v422
        %vm2445 = vcmp.eq.s32.totalorder %v1419, %v437
        %vm2446 = vcmp.eq.s32.totalorder %v1419, %v438
        %vm2447 = vcmp.eq.s32.totalorder %v1423, %v421
        %vm2448 = vcmp.eq.s32.totalorder %v1423, %v422
        %vm2449 = vcmp.eq.s32.totalorder %v1423, %v437
        %vm2450 = vcmp.eq.s32.totalorder %v1423, %v438
        %vm2451 = vcmp.eq.s32.totalorder %v1427, %v421
        %vm2452 = vcmp.eq.s32.totalorder %v1427, %v422
        %vm2453 = vcmp.eq.s32.totalorder %v1427, %v437
        %vm2454 = vcmp.eq.s32.totalorder %v1427, %v438
        %vm2455 = vcmp.eq.s32.totalorder %v1431, %v421
        %vm2456 = vcmp.eq.s32.totalorder %v1431, %v422
        %vm2457 = vcmp.eq.s32.totalorder %v1431, %v437
        %vm2458 = vcmp.eq.s32.totalorder %v1431, %v438
        %vm2459 = vcmp.eq.s32.totalorder %v1435, %v421
        %vm2460 = vcmp.eq.s32.totalorder %v1435, %v422
        %vm2461 = vcmp.eq.s32.totalorder %v1435, %v437
        %vm2462 = vcmp.eq.s32.totalorder %v1435, %v438
        %vm2463 = vcmp.eq.s32.totalorder %v1439, %v421
        %vm2464 = vcmp.eq.s32.totalorder %v1439, %v422
        %vm2465 = vcmp.eq.s32.totalorder %v1439, %v437
        %vm2466 = vcmp.eq.s32.totalorder %v1439, %v438
        %vm2467 = vcmp.eq.s32.totalorder %v1443, %v421
        %vm2468 = vcmp.eq.s32.totalorder %v1443, %v422
        %vm2469 = vcmp.eq.s32.totalorder %v1443, %v437
        %vm2470 = vcmp.eq.s32.totalorder %v1443, %v438
        %vm2471 = vcmp.eq.s32.totalorder %v1450, %v421
        %vm2472 = vcmp.eq.s32.totalorder %v1450, %v422
        %vm2473 = vcmp.eq.s32.totalorder %v1450, %v437
        %vm2474 = vcmp.eq.s32.totalorder %v1450, %v438
        %vm2475 = vcmp.eq.s32.totalorder %v1454, %v421
        %vm2476 = vcmp.eq.s32.totalorder %v1454, %v422
        %vm2477 = vcmp.eq.s32.totalorder %v1454, %v437
        %vm2478 = vcmp.eq.s32.totalorder %v1454, %v438
        %vm2479 = vcmp.eq.s32.totalorder %v1458, %v421
        %vm2480 = vcmp.eq.s32.totalorder %v1458, %v422
        %vm2481 = vcmp.eq.s32.totalorder %v1458, %v437
        %vm2482 = vcmp.eq.s32.totalorder %v1458, %v438
        %vm2483 = vcmp.eq.s32.totalorder %v1462, %v421
        %vm2484 = vcmp.eq.s32.totalorder %v1462, %v422
        %vm2485 = vcmp.eq.s32.totalorder %v1462, %v437
        %vm2486 = vcmp.eq.s32.totalorder %v1462, %v438
        %vm2487 = vcmp.eq.s32.totalorder %v1466, %v421
        %vm2488 = vcmp.eq.s32.totalorder %v1466, %v422
        %vm2489 = vcmp.eq.s32.totalorder %v1466, %v437
        %vm2490 = vcmp.eq.s32.totalorder %v1466, %v438
        %vm2491 = vcmp.eq.s32.totalorder %v1470, %v421
        %vm2492 = vcmp.eq.s32.totalorder %v1470, %v422
        %vm2493 = vcmp.eq.s32.totalorder %v1470, %v437
        %vm2494 = vcmp.eq.s32.totalorder %v1470, %v438
        %vm2495 = vcmp.eq.s32.totalorder %v1474, %v421
        %vm2496 = vcmp.eq.s32.totalorder %v1474, %v422
        %vm2497 = vcmp.eq.s32.totalorder %v1474, %v437
        %vm2498 = vcmp.eq.s32.totalorder %v1474, %v438
        %vm2499 = vcmp.eq.s32.totalorder %v1478, %v421
        %vm2500 = vcmp.eq.s32.totalorder %v1478, %v422
        %vm2501 = vcmp.eq.s32.totalorder %v1478, %v437
        %vm2502 = vcmp.eq.s32.totalorder %v1478, %v438
        %vm2503 = vcmp.eq.s32.totalorder %v1482, %v421
        %vm2504 = vcmp.eq.s32.totalorder %v1482, %v422
        %vm2505 = vcmp.eq.s32.totalorder %v1482, %v437
        %vm2506 = vcmp.eq.s32.totalorder %v1482, %v438
        %vm2507 = vcmp.eq.s32.totalorder %v1486, %v421
        %vm2508 = vcmp.eq.s32.totalorder %v1486, %v422
        %vm2509 = vcmp.eq.s32.totalorder %v1486, %v437
        %vm2510 = vcmp.eq.s32.totalorder %v1486, %v438
        %vm2511 = vcmp.eq.s32.totalorder %v1490, %v421
        %vm2512 = vcmp.eq.s32.totalorder %v1490, %v422
        %vm2513 = vcmp.eq.s32.totalorder %v1490, %v437
        %vm2514 = vcmp.eq.s32.totalorder %v1490, %v438
        %vm2515 = vcmp.eq.s32.totalorder %v1494, %v421
        %vm2516 = vcmp.eq.s32.totalorder %v1494, %v422
        %vm2517 = vcmp.eq.s32.totalorder %v1494, %v437
        %vm2518 = vcmp.eq.s32.totalorder %v1494, %v438
        %vm2519 = vcmp.eq.s32.totalorder %v1498, %v421
        %vm2520 = vcmp.eq.s32.totalorder %v1498, %v422
        %vm2521 = vcmp.eq.s32.totalorder %v1498, %v437
        %vm2522 = vcmp.eq.s32.totalorder %v1498, %v438
        %vm2523 = vcmp.eq.s32.totalorder %v1502, %v421
        %vm2524 = vcmp.eq.s32.totalorder %v1502, %v422
        %vm2525 = vcmp.eq.s32.totalorder %v1502, %v437
        %vm2526 = vcmp.eq.s32.totalorder %v1502, %v438
        %vm2527 = vcmp.eq.s32.totalorder %v1506, %v421
        %vm2528 = vcmp.eq.s32.totalorder %v1506, %v422
        %vm2529 = vcmp.eq.s32.totalorder %v1506, %v437
        %vm2530 = vcmp.eq.s32.totalorder %v1506, %v438
        %vm2531 = vcmp.eq.s32.totalorder %v1510, %v421
        %vm2532 = vcmp.eq.s32.totalorder %v1510, %v422
        %vm2533 = vcmp.eq.s32.totalorder %v1510, %v437
        %vm2534 = vcmp.eq.s32.totalorder %v1510, %v438
        %v2535 = vsel %vm1511, 1, 0
        %v2536 = vsel %vm1512, 1, 0
        %v2537 = vsel %vm1513, 1, 0
        %v2538 = vsel %vm1514, 1, 0
        %v2539 = vsel %vm1515, 1, 0
        %v2540 = vsel %vm1516, 1, 0
        %v2541 = vsel %vm1517, 1, 0
        %v2542 = vsel %vm1518, 1, 0
        %v2543 = vsel %vm1519, 1, 0
        %v2544 = vsel %vm1520, 1, 0
        %v2545 = vsel %vm1521, 1, 0
        %v2546 = vsel %vm1522, 1, 0
        %v2547 = vsel %vm1523, 1, 0
        %v2548 = vsel %vm1524, 1, 0
        %v2549 = vsel %vm1525, 1, 0
        %v2550 = vsel %vm1526, 1, 0
        %v2551 = vsel %vm1527, 1, 0
        %v2552 = vsel %vm1528, 1, 0
        %v2553 = vsel %vm1529, 1, 0
        %v2554 = vsel %vm1530, 1, 0
        %v2555 = vsel %vm1531, 1, 0
        %v2556 = vsel %vm1532, 1, 0
        %v2557 = vsel %vm1533, 1, 0
        %v2558 = vsel %vm1534, 1, 0
        %v2559 = vsel %vm1535, 1, 0
        %v2560 = vsel %vm1536, 1, 0
        %v2561 = vsel %vm1537, 1, 0
        %v2562 = vsel %vm1538, 1, 0
        %v2563 = vsel %vm1539, 1, 0
        %v2564 = vsel %vm1540, 1, 0
        %v2565 = vsel %vm1541, 1, 0
        %v2566 = vsel %vm1542, 1, 0
        %v2567 = vsel %vm1543, 1, 0
        %v2568 = vsel %vm1544, 1, 0
        %v2569 = vsel %vm1545, 1, 0
        %v2570 = vsel %vm1546, 1, 0
        %v2571 = vsel %vm1547, 1, 0
        %v2572 = vsel %vm1548, 1, 0
        %v2573 = vsel %vm1549, 1, 0
        %v2574 = vsel %vm1550, 1, 0
        %v2575 = vsel %vm1551, 1, 0
        %v2576 = vsel %vm1552, 1, 0
        %v2577 = vsel %vm1553, 1, 0
        %v2578 = vsel %vm1554, 1, 0
        %v2579 = vsel %vm1555, 1, 0
        %v2580 = vsel %vm1556, 1, 0
        %v2581 = vsel %vm1557, 1, 0
        %v2582 = vsel %vm1558, 1, 0
        %v2583 = vsel %vm1559, 1, 0
        %v2584 = vsel %vm1560, 1, 0
        %v2585 = vsel %vm1561, 1, 0
        %v2586 = vsel %vm1562, 1, 0
        %v2587 = vsel %vm1563, 1, 0
        %v2588 = vsel %vm1564, 1, 0
        %v2589 = vsel %vm1565, 1, 0
        %v2590 = vsel %vm1566, 1, 0
        %v2591 = vsel %vm1567, 1, 0
        %v2592 = vsel %vm1568, 1, 0
        %v2593 = vsel %vm1569, 1, 0
        %v2594 = vsel %vm1570, 1, 0
        %v2595 = vsel %vm1571, 1, 0
        %v2596 = vsel %vm1572, 1, 0
        %v2597 = vsel %vm1573, 1, 0
        %v2598 = vsel %vm1574, 1, 0
        %v2599 = vsel %vm1575, 1, 0
        %v2600 = vsel %vm1576, 1, 0
        %v2601 = vsel %vm1577, 1, 0
        %v2602 = vsel %vm1578, 1, 0
        %v2603 = vsel %vm1579, 1, 0
        %v2604 = vsel %vm1580, 1, 0
        %v2605 = vsel %vm1581, 1, 0
        %v2606 = vsel %vm1582, 1, 0
        %v2607 = vsel %vm1583, 1, 0
        %v2608 = vsel %vm1584, 1, 0
        %v2609 = vsel %vm1585, 1, 0
        %v2610 = vsel %vm1586, 1, 0
        %v2611 = vsel %vm1587, 1, 0
        %v2612 = vsel %vm1588, 1, 0
        %v2613 = vsel %vm1589, 1, 0
        %v2614 = vsel %vm1590, 1, 0
        %v2615 = vsel %vm1591, 1, 0
        %v2616 = vsel %vm1592, 1, 0
        %v2617 = vsel %vm1593, 1, 0
        %v2618 = vsel %vm1594, 1, 0
        %v2619 = vsel %vm1595, 1, 0
        %v2620 = vsel %vm1596, 1, 0
        %v2621 = vsel %vm1597, 1, 0
        %v2622 = vsel %vm1598, 1, 0
        %v2623 = vsel %vm1599, 1, 0
        %v2624 = vsel %vm1600, 1, 0
        %v2625 = vsel %vm1601, 1, 0
        %v2626 = vsel %vm1602, 1, 0
        %v2627 = vsel %vm1603, 1, 0
        %v2628 = vsel %vm1604, 1, 0
        %v2629 = vsel %vm1605, 1, 0
        %v2630 = vsel %vm1606, 1, 0
        %v2631 = vsel %vm1607, 1, 0
        %v2632 = vsel %vm1608, 1, 0
        %v2633 = vsel %vm1609, 1, 0
        %v2634 = vsel %vm1610, 1, 0
        %v2635 = vsel %vm1611, 1, 0
        %v2636 = vsel %vm1612, 1, 0
        %v2637 = vsel %vm1613, 1, 0
        %v2638 = vsel %vm1614, 1, 0
        %v2639 = vsel %vm1615, 1, 0
        %v2640 = vsel %vm1616, 1, 0
        %v2641 = vsel %vm1617, 1, 0
        %v2642 = vsel %vm1618, 1, 0
        %v2643 = vsel %vm1619, 1, 0
        %v2644 = vsel %vm1620, 1, 0
        %v2645 = vsel %vm1621, 1, 0
        %v2646 = vsel %vm1622, 1, 0
        %v2647 = vsel %vm1623, 1, 0
        %v2648 = vsel %vm1624, 1, 0
        %v2649 = vsel %vm1625, 1, 0
        %v2650 = vsel %vm1626, 1, 0
        %v2651 = vsel %vm1627, 1, 0
        %v2652 = vsel %vm1628, 1, 0
        %v2653 = vsel %vm1629, 1, 0
        %v2654 = vsel %vm1630, 1, 0
        %v2655 = vsel %vm1631, 1, 0
        %v2656 = vsel %vm1632, 1, 0
        %v2657 = vsel %vm1633, 1, 0
        %v2658 = vsel %vm1634, 1, 0
        %v2659 = vsel %vm1635, 1, 0
        %v2660 = vsel %vm1636, 1, 0
        %v2661 = vsel %vm1637, 1, 0
        %v2662 = vsel %vm1638, 1, 0
        %v2663 = vsel %vm1639, 1, 0
        %v2664 = vsel %vm1640, 1, 0
        %v2665 = vsel %vm1641, 1, 0
        %v2666 = vsel %vm1642, 1, 0
        %v2667 = vsel %vm1643, 1, 0
        %v2668 = vsel %vm1644, 1, 0
        %v2669 = vsel %vm1645, 1, 0
        %v2670 = vsel %vm1646, 1, 0
        %v2671 = vsel %vm1647, 1, 0
        %v2672 = vsel %vm1648, 1, 0
        %v2673 = vsel %vm1649, 1, 0
        %v2674 = vsel %vm1650, 1, 0
        %v2675 = vsel %vm1651, 1, 0
        %v2676 = vsel %vm1652, 1, 0
        %v2677 = vsel %vm1653, 1, 0
        %v2678 = vsel %vm1654, 1, 0
        %v2679 = vsel %vm1655, 1, 0
        %v2680 = vsel %vm1656, 1, 0
        %v2681 = vsel %vm1657, 1, 0
        %v2682 = vsel %vm1658, 1, 0
        %v2683 = vsel %vm1659, 1, 0
        %v2684 = vsel %vm1660, 1, 0
        %v2685 = vsel %vm1661, 1, 0
        %v2686 = vsel %vm1662, 1, 0
        %v2687 = vsel %vm1663, 1, 0
        %v2688 = vsel %vm1664, 1, 0
        %v2689 = vsel %vm1665, 1, 0
        %v2690 = vsel %vm1666, 1, 0
        %v2691 = vsel %vm1667, 1, 0
        %v2692 = vsel %vm1668, 1, 0
        %v2693 = vsel %vm1669, 1, 0
        %v2694 = vsel %vm1670, 1, 0
        %v2695 = vsel %vm1671, 1, 0
        %v2696 = vsel %vm1672, 1, 0
        %v2697 = vsel %vm1673, 1, 0
        %v2698 = vsel %vm1674, 1, 0
        %v2699 = vsel %vm1675, 1, 0
        %v2700 = vsel %vm1676, 1, 0
        %v2701 = vsel %vm1677, 1, 0
        %v2702 = vsel %vm1678, 1, 0
        %v2703 = vsel %vm1679, 1, 0
        %v2704 = vsel %vm1680, 1, 0
        %v2705 = vsel %vm1681, 1, 0
        %v2706 = vsel %vm1682, 1, 0
        %v2707 = vsel %vm1683, 1, 0
        %v2708 = vsel %vm1684, 1, 0
        %v2709 = vsel %vm1685, 1, 0
        %v2710 = vsel %vm1686, 1, 0
        %v2711 = vsel %vm1687, 1, 0
        %v2712 = vsel %vm1688, 1, 0
        %v2713 = vsel %vm1689, 1, 0
        %v2714 = vsel %vm1690, 1, 0
        %v2715 = vsel %vm1691, 1, 0
        %v2716 = vsel %vm1692, 1, 0
        %v2717 = vsel %vm1693, 1, 0
        %v2718 = vsel %vm1694, 1, 0
        %v2719 = vsel %vm1695, 1, 0
        %v2720 = vsel %vm1696, 1, 0
        %v2721 = vsel %vm1697, 1, 0
        %v2722 = vsel %vm1698, 1, 0
        %v2723 = vsel %vm1699, 1, 0
        %v2724 = vsel %vm1700, 1, 0
        %v2725 = vsel %vm1701, 1, 0
        %v2726 = vsel %vm1702, 1, 0
        %v2727 = vsel %vm1703, 1, 0
        %v2728 = vsel %vm1704, 1, 0
        %v2729 = vsel %vm1705, 1, 0
        %v2730 = vsel %vm1706, 1, 0
        %v2731 = vsel %vm1707, 1, 0
        %v2732 = vsel %vm1708, 1, 0
        %v2733 = vsel %vm1709, 1, 0
        %v2734 = vsel %vm1710, 1, 0
        %v2735 = vsel %vm1711, 1, 0
        %v2736 = vsel %vm1712, 1, 0
        %v2737 = vsel %vm1713, 1, 0
        %v2738 = vsel %vm1714, 1, 0
        %v2739 = vsel %vm1715, 1, 0
        %v2740 = vsel %vm1716, 1, 0
        %v2741 = vsel %vm1717, 1, 0
        %v2742 = vsel %vm1718, 1, 0
        %v2743 = vsel %vm1719, 1, 0
        %v2744 = vsel %vm1720, 1, 0
        %v2745 = vsel %vm1721, 1, 0
        %v2746 = vsel %vm1722, 1, 0
        %v2747 = vsel %vm1723, 1, 0
        %v2748 = vsel %vm1724, 1, 0
        %v2749 = vsel %vm1725, 1, 0
        %v2750 = vsel %vm1726, 1, 0
        %v2751 = vsel %vm1727, 1, 0
        %v2752 = vsel %vm1728, 1, 0
        %v2753 = vsel %vm1729, 1, 0
        %v2754 = vsel %vm1730, 1, 0
        %v2755 = vsel %vm1731, 1, 0
        %v2756 = vsel %vm1732, 1, 0
        %v2757 = vsel %vm1733, 1, 0
        %v2758 = vsel %vm1734, 1, 0
        %v2759 = vsel %vm1735, 1, 0
        %v2760 = vsel %vm1736, 1, 0
        %v2761 = vsel %vm1737, 1, 0
        %v2762 = vsel %vm1738, 1, 0
        %v2763 = vsel %vm1739, 1, 0
        %v2764 = vsel %vm1740, 1, 0
        %v2765 = vsel %vm1741, 1, 0
        %v2766 = vsel %vm1742, 1, 0
        %v2767 = vsel %vm1743, 1, 0
        %v2768 = vsel %vm1744, 1, 0
        %v2769 = vsel %vm1745, 1, 0
        %v2770 = vsel %vm1746, 1, 0
        %v2771 = vsel %vm1747, 1, 0
        %v2772 = vsel %vm1748, 1, 0
        %v2773 = vsel %vm1749, 1, 0
        %v2774 = vsel %vm1750, 1, 0
        %v2775 = vsel %vm1751, 1, 0
        %v2776 = vsel %vm1752, 1, 0
        %v2777 = vsel %vm1753, 1, 0
        %v2778 = vsel %vm1754, 1, 0
        %v2779 = vsel %vm1755, 1, 0
        %v2780 = vsel %vm1756, 1, 0
        %v2781 = vsel %vm1757, 1, 0
        %v2782 = vsel %vm1758, 1, 0
        %v2783 = vsel %vm1759, 1, 0
        %v2784 = vsel %vm1760, 1, 0
        %v2785 = vsel %vm1761, 1, 0
        %v2786 = vsel %vm1762, 1, 0
        %v2787 = vsel %vm1763, 1, 0
        %v2788 = vsel %vm1764, 1, 0
        %v2789 = vsel %vm1765, 1, 0
        %v2790 = vsel %vm1766, 1, 0
        %v2791 = vsel %vm1767, 1, 0
        %v2792 = vsel %vm1768, 1, 0
        %v2793 = vsel %vm1769, 1, 0
        %v2794 = vsel %vm1770, 1, 0
        %v2795 = vsel %vm1771, 1, 0
        %v2796 = vsel %vm1772, 1, 0
        %v2797 = vsel %vm1773, 1, 0
        %v2798 = vsel %vm1774, 1, 0
        %v2799 = vsel %vm1775, 1, 0
        %v2800 = vsel %vm1776, 1, 0
        %v2801 = vsel %vm1777, 1, 0
        %v2802 = vsel %vm1778, 1, 0
        %v2803 = vsel %vm1779, 1, 0
        %v2804 = vsel %vm1780, 1, 0
        %v2805 = vsel %vm1781, 1, 0
        %v2806 = vsel %vm1782, 1, 0
        %v2807 = vsel %vm1783, 1, 0
        %v2808 = vsel %vm1784, 1, 0
        %v2809 = vsel %vm1785, 1, 0
        %v2810 = vsel %vm1786, 1, 0
        %v2811 = vsel %vm1787, 1, 0
        %v2812 = vsel %vm1788, 1, 0
        %v2813 = vsel %vm1789, 1, 0
        %v2814 = vsel %vm1790, 1, 0
        %v2815 = vsel %vm1791, 1, 0
        %v2816 = vsel %vm1792, 1, 0
        %v2817 = vsel %vm1793, 1, 0
        %v2818 = vsel %vm1794, 1, 0
        %v2819 = vsel %vm1795, 1, 0
        %v2820 = vsel %vm1796, 1, 0
        %v2821 = vsel %vm1797, 1, 0
        %v2822 = vsel %vm1798, 1, 0
        %v2823 = vsel %vm1799, 1, 0
        %v2824 = vsel %vm1800, 1, 0
        %v2825 = vsel %vm1801, 1, 0
        %v2826 = vsel %vm1802, 1, 0
        %v2827 = vsel %vm1803, 1, 0
        %v2828 = vsel %vm1804, 1, 0
        %v2829 = vsel %vm1805, 1, 0
        %v2830 = vsel %vm1806, 1, 0
        %v2831 = vsel %vm1807, 1, 0
        %v2832 = vsel %vm1808, 1, 0
        %v2833 = vsel %vm1809, 1, 0
        %v2834 = vsel %vm1810, 1, 0
        %v2835 = vsel %vm1811, 1, 0
        %v2836 = vsel %vm1812, 1, 0
        %v2837 = vsel %vm1813, 1, 0
        %v2838 = vsel %vm1814, 1, 0
        %v2839 = vsel %vm1815, 1, 0
        %v2840 = vsel %vm1816, 1, 0
        %v2841 = vsel %vm1817, 1, 0
        %v2842 = vsel %vm1818, 1, 0
        %v2843 = vsel %vm1819, 1, 0
        %v2844 = vsel %vm1820, 1, 0
        %v2845 = vsel %vm1821, 1, 0
        %v2846 = vsel %vm1822, 1, 0
        %v2847 = vsel %vm1823, 1, 0
        %v2848 = vsel %vm1824, 1, 0
        %v2849 = vsel %vm1825, 1, 0
        %v2850 = vsel %vm1826, 1, 0
        %v2851 = vsel %vm1827, 1, 0
        %v2852 = vsel %vm1828, 1, 0
        %v2853 = vsel %vm1829, 1, 0
        %v2854 = vsel %vm1830, 1, 0
        %v2855 = vsel %vm1831, 1, 0
        %v2856 = vsel %vm1832, 1, 0
        %v2857 = vsel %vm1833, 1, 0
        %v2858 = vsel %vm1834, 1, 0
        %v2859 = vsel %vm1835, 1, 0
        %v2860 = vsel %vm1836, 1, 0
        %v2861 = vsel %vm1837, 1, 0
        %v2862 = vsel %vm1838, 1, 0
        %v2863 = vsel %vm1839, 1, 0
        %v2864 = vsel %vm1840, 1, 0
        %v2865 = vsel %vm1841, 1, 0
        %v2866 = vsel %vm1842, 1, 0
        %v2867 = vsel %vm1843, 1, 0
        %v2868 = vsel %vm1844, 1, 0
        %v2869 = vsel %vm1845, 1, 0
        %v2870 = vsel %vm1846, 1, 0
        %v2871 = vsel %vm1847, 1, 0
        %v2872 = vsel %vm1848, 1, 0
        %v2873 = vsel %vm1849, 1, 0
        %v2874 = vsel %vm1850, 1, 0
        %v2875 = vsel %vm1851, 1, 0
        %v2876 = vsel %vm1852, 1, 0
        %v2877 = vsel %vm1853, 1, 0
        %v2878 = vsel %vm1854, 1, 0
        %v2879 = vsel %vm1855, 1, 0
        %v2880 = vsel %vm1856, 1, 0
        %v2881 = vsel %vm1857, 1, 0
        %v2882 = vsel %vm1858, 1, 0
        %v2883 = vsel %vm1859, 1, 0
        %v2884 = vsel %vm1860, 1, 0
        %v2885 = vsel %vm1861, 1, 0
        %v2886 = vsel %vm1862, 1, 0
        %v2887 = vsel %vm1863, 1, 0
        %v2888 = vsel %vm1864, 1, 0
        %v2889 = vsel %vm1865, 1, 0
        %v2890 = vsel %vm1866, 1, 0
        %v2891 = vsel %vm1867, 1, 0
        %v2892 = vsel %vm1868, 1, 0
        %v2893 = vsel %vm1869, 1, 0
        %v2894 = vsel %vm1870, 1, 0
        %v2895 = vsel %vm1871, 1, 0
        %v2896 = vsel %vm1872, 1, 0
        %v2897 = vsel %vm1873, 1, 0
        %v2898 = vsel %vm1874, 1, 0
        %v2899 = vsel %vm1875, 1, 0
        %v2900 = vsel %vm1876, 1, 0
        %v2901 = vsel %vm1877, 1, 0
        %v2902 = vsel %vm1878, 1, 0
        %v2903 = vsel %vm1879, 1, 0
        %v2904 = vsel %vm1880, 1, 0
        %v2905 = vsel %vm1881, 1, 0
        %v2906 = vsel %vm1882, 1, 0
        %v2907 = vsel %vm1883, 1, 0
        %v2908 = vsel %vm1884, 1, 0
        %v2909 = vsel %vm1885, 1, 0
        %v2910 = vsel %vm1886, 1, 0
        %v2911 = vsel %vm1887, 1, 0
        %v2912 = vsel %vm1888, 1, 0
        %v2913 = vsel %vm1889, 1, 0
        %v2914 = vsel %vm1890, 1, 0
        %v2915 = vsel %vm1891, 1, 0
        %v2916 = vsel %vm1892, 1, 0
        %v2917 = vsel %vm1893, 1, 0
        %v2918 = vsel %vm1894, 1, 0
        %v2919 = vsel %vm1895, 1, 0
        %v2920 = vsel %vm1896, 1, 0
        %v2921 = vsel %vm1897, 1, 0
        %v2922 = vsel %vm1898, 1, 0
        %v2923 = vsel %vm1899, 1, 0
        %v2924 = vsel %vm1900, 1, 0
        %v2925 = vsel %vm1901, 1, 0
        %v2926 = vsel %vm1902, 1, 0
        %v2927 = vsel %vm1903, 1, 0
        %v2928 = vsel %vm1904, 1, 0
        %v2929 = vsel %vm1905, 1, 0
        %v2930 = vsel %vm1906, 1, 0
        %v2931 = vsel %vm1907, 1, 0
        %v2932 = vsel %vm1908, 1, 0
        %v2933 = vsel %vm1909, 1, 0
        %v2934 = vsel %vm1910, 1, 0
        %v2935 = vsel %vm1911, 1, 0
        %v2936 = vsel %vm1912, 1, 0
        %v2937 = vsel %vm1913, 1, 0
        %v2938 = vsel %vm1914, 1, 0
        %v2939 = vsel %vm1915, 1, 0
        %v2940 = vsel %vm1916, 1, 0
        %v2941 = vsel %vm1917, 1, 0
        %v2942 = vsel %vm1918, 1, 0
        %v2943 = vsel %vm1919, 1, 0
        %v2944 = vsel %vm1920, 1, 0
        %v2945 = vsel %vm1921, 1, 0
        %v2946 = vsel %vm1922, 1, 0
        %v2947 = vsel %vm1923, 1, 0
        %v2948 = vsel %vm1924, 1, 0
        %v2949 = vsel %vm1925, 1, 0
        %v2950 = vsel %vm1926, 1, 0
        %v2951 = vsel %vm1927, 1, 0
        %v2952 = vsel %vm1928, 1, 0
        %v2953 = vsel %vm1929, 1, 0
        %v2954 = vsel %vm1930, 1, 0
        %v2955 = vsel %vm1931, 1, 0
        %v2956 = vsel %vm1932, 1, 0
        %v2957 = vsel %vm1933, 1, 0
        %v2958 = vsel %vm1934, 1, 0
        %v2959 = vsel %vm1935, 1, 0
        %v2960 = vsel %vm1936, 1, 0
        %v2961 = vsel %vm1937, 1, 0
        %v2962 = vsel %vm1938, 1, 0
        %v2963 = vsel %vm1939, 1, 0
        %v2964 = vsel %vm1940, 1, 0
        %v2965 = vsel %vm1941, 1, 0
        %v2966 = vsel %vm1942, 1, 0
        %v2967 = vsel %vm1943, 1, 0
        %v2968 = vsel %vm1944, 1, 0
        %v2969 = vsel %vm1945, 1, 0
        %v2970 = vsel %vm1946, 1, 0
        %v2971 = vsel %vm1947, 1, 0
        %v2972 = vsel %vm1948, 1, 0
        %v2973 = vsel %vm1949, 1, 0
        %v2974 = vsel %vm1950, 1, 0
        %v2975 = vsel %vm1951, 1, 0
        %v2976 = vsel %vm1952, 1, 0
        %v2977 = vsel %vm1953, 1, 0
        %v2978 = vsel %vm1954, 1, 0
        %v2979 = vsel %vm1955, 1, 0
        %v2980 = vsel %vm1956, 1, 0
        %v2981 = vsel %vm1957, 1, 0
        %v2982 = vsel %vm1958, 1, 0
        %v2983 = vsel %vm1959, 1, 0
        %v2984 = vsel %vm1960, 1, 0
        %v2985 = vsel %vm1961, 1, 0
        %v2986 = vsel %vm1962, 1, 0
        %v2987 = vsel %vm1963, 1, 0
        %v2988 = vsel %vm1964, 1, 0
        %v2989 = vsel %vm1965, 1, 0
        %v2990 = vsel %vm1966, 1, 0
        %v2991 = vsel %vm1967, 1, 0
        %v2992 = vsel %vm1968, 1, 0
        %v2993 = vsel %vm1969, 1, 0
        %v2994 = vsel %vm1970, 1, 0
        %v2995 = vsel %vm1971, 1, 0
        %v2996 = vsel %vm1972, 1, 0
        %v2997 = vsel %vm1973, 1, 0
        %v2998 = vsel %vm1974, 1, 0
        %v2999 = vsel %vm1975, 1, 0
        %v3000 = vsel %vm1976, 1, 0
        %v3001 = vsel %vm1977, 1, 0
        %v3002 = vsel %vm1978, 1, 0
        %v3003 = vsel %vm1979, 1, 0
        %v3004 = vsel %vm1980, 1, 0
        %v3005 = vsel %vm1981, 1, 0
        %v3006 = vsel %vm1982, 1, 0
        %v3007 = vsel %vm1983, 1, 0
        %v3008 = vsel %vm1984, 1, 0
        %v3009 = vsel %vm1985, 1, 0
        %v3010 = vsel %vm1986, 1, 0
        %v3011 = vsel %vm1987, 1, 0
        %v3012 = vsel %vm1988, 1, 0
        %v3013 = vsel %vm1989, 1, 0
        %v3014 = vsel %vm1990, 1, 0
        %v3015 = vsel %vm1991, 1, 0
        %v3016 = vsel %vm1992, 1, 0
        %v3017 = vsel %vm1993, 1, 0
        %v3018 = vsel %vm1994, 1, 0
        %v3019 = vsel %vm1995, 1, 0
        %v3020 = vsel %vm1996, 1, 0
        %v3021 = vsel %vm1997, 1, 0
        %v3022 = vsel %vm1998, 1, 0
        %v3023 = vsel %vm1999, 1, 0
        %v3024 = vsel %vm2000, 1, 0
        %v3025 = vsel %vm2001, 1, 0
        %v3026 = vsel %vm2002, 1, 0
        %v3027 = vsel %vm2003, 1, 0
        %v3028 = vsel %vm2004, 1, 0
        %v3029 = vsel %vm2005, 1, 0
        %v3030 = vsel %vm2006, 1, 0
        %v3031 = vsel %vm2007, 1, 0
        %v3032 = vsel %vm2008, 1, 0
        %v3033 = vsel %vm2009, 1, 0
        %v3034 = vsel %vm2010, 1, 0
        %v3035 = vsel %vm2011, 1, 0
        %v3036 = vsel %vm2012, 1, 0
        %v3037 = vsel %vm2013, 1, 0
        %v3038 = vsel %vm2014, 1, 0
        %v3039 = vsel %vm2015, 1, 0
        %v3040 = vsel %vm2016, 1, 0
        %v3041 = vsel %vm2017, 1, 0
        %v3042 = vsel %vm2018, 1, 0
        %v3043 = vsel %vm2019, 1, 0
        %v3044 = vsel %vm2020, 1, 0
        %v3045 = vsel %vm2021, 1, 0
        %v3046 = vsel %vm2022, 1, 0
        %v3047 = vsel %vm2023, 1, 0
        %v3048 = vsel %vm2024, 1, 0
        %v3049 = vsel %vm2025, 1, 0
        %v3050 = vsel %vm2026, 1, 0
        %v3051 = vsel %vm2027, 1, 0
        %v3052 = vsel %vm2028, 1, 0
        %v3053 = vsel %vm2029, 1, 0
        %v3054 = vsel %vm2030, 1, 0
        %v3055 = vsel %vm2031, 1, 0
        %v3056 = vsel %vm2032, 1, 0
        %v3057 = vsel %vm2033, 1, 0
        %v3058 = vsel %vm2034, 1, 0
        %v3059 = vsel %vm2035, 1, 0
        %v3060 = vsel %vm2036, 1, 0
        %v3061 = vsel %vm2037, 1, 0
        %v3062 = vsel %vm2038, 1, 0
        %v3063 = vsel %vm2039, 1, 0
        %v3064 = vsel %vm2040, 1, 0
        %v3065 = vsel %vm2041, 1, 0
        %v3066 = vsel %vm2042, 1, 0
        %v3067 = vsel %vm2043, 1, 0
        %v3068 = vsel %vm2044, 1, 0
        %v3069 = vsel %vm2045, 1, 0
        %v3070 = vsel %vm2046, 1, 0
        %v3071 = vsel %vm2047, 1, 0
        %v3072 = vsel %vm2048, 1, 0
        %v3073 = vsel %vm2049, 1, 0
        %v3074 = vsel %vm2050, 1, 0
        %v3075 = vsel %vm2051, 1, 0
        %v3076 = vsel %vm2052, 1, 0
        %v3077 = vsel %vm2053, 1, 0
        %v3078 = vsel %vm2054, 1, 0
        %v3079 = vsel %vm2055, 1, 0
        %v3080 = vsel %vm2056, 1, 0
        %v3081 = vsel %vm2057, 1, 0
        %v3082 = vsel %vm2058, 1, 0
        %v3083 = vsel %vm2059, 1, 0
        %v3084 = vsel %vm2060, 1, 0
        %v3085 = vsel %vm2061, 1, 0
        %v3086 = vsel %vm2062, 1, 0
        %v3087 = vsel %vm2063, 1, 0
        %v3088 = vsel %vm2064, 1, 0
        %v3089 = vsel %vm2065, 1, 0
        %v3090 = vsel %vm2066, 1, 0
        %v3091 = vsel %vm2067, 1, 0
        %v3092 = vsel %vm2068, 1, 0
        %v3093 = vsel %vm2069, 1, 0
        %v3094 = vsel %vm2070, 1, 0
        %v3095 = vsel %vm2071, 1, 0
        %v3096 = vsel %vm2072, 1, 0
        %v3097 = vsel %vm2073, 1, 0
        %v3098 = vsel %vm2074, 1, 0
        %v3099 = vsel %vm2075, 1, 0
        %v3100 = vsel %vm2076, 1, 0
        %v3101 = vsel %vm2077, 1, 0
        %v3102 = vsel %vm2078, 1, 0
        %v3103 = vsel %vm2079, 1, 0
        %v3104 = vsel %vm2080, 1, 0
        %v3105 = vsel %vm2081, 1, 0
        %v3106 = vsel %vm2082, 1, 0
        %v3107 = vsel %vm2083, 1, 0
        %v3108 = vsel %vm2084, 1, 0
        %v3109 = vsel %vm2085, 1, 0
        %v3110 = vsel %vm2086, 1, 0
        %v3111 = vsel %vm2087, 1, 0
        %v3112 = vsel %vm2088, 1, 0
        %v3113 = vsel %vm2089, 1, 0
        %v3114 = vsel %vm2090, 1, 0
        %v3115 = vsel %vm2091, 1, 0
        %v3116 = vsel %vm2092, 1, 0
        %v3117 = vsel %vm2093, 1, 0
        %v3118 = vsel %vm2094, 1, 0
        %v3119 = vsel %vm2095, 1, 0
        %v3120 = vsel %vm2096, 1, 0
        %v3121 = vsel %vm2097, 1, 0
        %v3122 = vsel %vm2098, 1, 0
        %v3123 = vsel %vm2099, 1, 0
        %v3124 = vsel %vm2100, 1, 0
        %v3125 = vsel %vm2101, 1, 0
        %v3126 = vsel %vm2102, 1, 0
        %v3127 = vsel %vm2103, 1, 0
        %v3128 = vsel %vm2104, 1, 0
        %v3129 = vsel %vm2105, 1, 0
        %v3130 = vsel %vm2106, 1, 0
        %v3131 = vsel %vm2107, 1, 0
        %v3132 = vsel %vm2108, 1, 0
        %v3133 = vsel %vm2109, 1, 0
        %v3134 = vsel %vm2110, 1, 0
        %v3135 = vsel %vm2111, 1, 0
        %v3136 = vsel %vm2112, 1, 0
        %v3137 = vsel %vm2113, 1, 0
        %v3138 = vsel %vm2114, 1, 0
        %v3139 = vsel %vm2115, 1, 0
        %v3140 = vsel %vm2116, 1, 0
        %v3141 = vsel %vm2117, 1, 0
        %v3142 = vsel %vm2118, 1, 0
        %v3143 = vsel %vm2119, 1, 0
        %v3144 = vsel %vm2120, 1, 0
        %v3145 = vsel %vm2121, 1, 0
        %v3146 = vsel %vm2122, 1, 0
        %v3147 = vsel %vm2123, 1, 0
        %v3148 = vsel %vm2124, 1, 0
        %v3149 = vsel %vm2125, 1, 0
        %v3150 = vsel %vm2126, 1, 0
        %v3151 = vsel %vm2127, 1, 0
        %v3152 = vsel %vm2128, 1, 0
        %v3153 = vsel %vm2129, 1, 0
        %v3154 = vsel %vm2130, 1, 0
        %v3155 = vsel %vm2131, 1, 0
        %v3156 = vsel %vm2132, 1, 0
        %v3157 = vsel %vm2133, 1, 0
        %v3158 = vsel %vm2134, 1, 0
        %v3159 = vsel %vm2135, 1, 0
        %v3160 = vsel %vm2136, 1, 0
        %v3161 = vsel %vm2137, 1, 0
        %v3162 = vsel %vm2138, 1, 0
        %v3163 = vsel %vm2139, 1, 0
        %v3164 = vsel %vm2140, 1, 0
        %v3165 = vsel %vm2141, 1, 0
        %v3166 = vsel %vm2142, 1, 0
        %v3167 = vsel %vm2143, 1, 0
        %v3168 = vsel %vm2144, 1, 0
        %v3169 = vsel %vm2145, 1, 0
        %v3170 = vsel %vm2146, 1, 0
        %v3171 = vsel %vm2147, 1, 0
        %v3172 = vsel %vm2148, 1, 0
        %v3173 = vsel %vm2149, 1, 0
        %v3174 = vsel %vm2150, 1, 0
        %v3175 = vsel %vm2151, 1, 0
        %v3176 = vsel %vm2152, 1, 0
        %v3177 = vsel %vm2153, 1, 0
        %v3178 = vsel %vm2154, 1, 0
        %v3179 = vsel %vm2155, 1, 0
        %v3180 = vsel %vm2156, 1, 0
        %v3181 = vsel %vm2157, 1, 0
        %v3182 = vsel %vm2158, 1, 0
        %v3183 = vsel %vm2159, 1, 0
        %v3184 = vsel %vm2160, 1, 0
        %v3185 = vsel %vm2161, 1, 0
        %v3186 = vsel %vm2162, 1, 0
        %v3187 = vsel %vm2163, 1, 0
        %v3188 = vsel %vm2164, 1, 0
        %v3189 = vsel %vm2165, 1, 0
        %v3190 = vsel %vm2166, 1, 0
        %v3191 = vsel %vm2167, 1, 0
        %v3192 = vsel %vm2168, 1, 0
        %v3193 = vsel %vm2169, 1, 0
        %v3194 = vsel %vm2170, 1, 0
        %v3195 = vsel %vm2171, 1, 0
        %v3196 = vsel %vm2172, 1, 0
        %v3197 = vsel %vm2173, 1, 0
        %v3198 = vsel %vm2174, 1, 0
        %v3199 = vsel %vm2175, 1, 0
        %v3200 = vsel %vm2176, 1, 0
        %v3201 = vsel %vm2177, 1, 0
        %v3202 = vsel %vm2178, 1, 0
        %v3203 = vsel %vm2179, 1, 0
        %v3204 = vsel %vm2180, 1, 0
        %v3205 = vsel %vm2181, 1, 0
        %v3206 = vsel %vm2182, 1, 0
        %v3207 = vsel %vm2183, 1, 0
        %v3208 = vsel %vm2184, 1, 0
        %v3209 = vsel %vm2185, 1, 0
        %v3210 = vsel %vm2186, 1, 0
        %v3211 = vsel %vm2187, 1, 0
        %v3212 = vsel %vm2188, 1, 0
        %v3213 = vsel %vm2189, 1, 0
        %v3214 = vsel %vm2190, 1, 0
        %v3215 = vsel %vm2191, 1, 0
        %v3216 = vsel %vm2192, 1, 0
        %v3217 = vsel %vm2193, 1, 0
        %v3218 = vsel %vm2194, 1, 0
        %v3219 = vsel %vm2195, 1, 0
        %v3220 = vsel %vm2196, 1, 0
        %v3221 = vsel %vm2197, 1, 0
        %v3222 = vsel %vm2198, 1, 0
        %v3223 = vsel %vm2199, 1, 0
        %v3224 = vsel %vm2200, 1, 0
        %v3225 = vsel %vm2201, 1, 0
        %v3226 = vsel %vm2202, 1, 0
        %v3227 = vsel %vm2203, 1, 0
        %v3228 = vsel %vm2204, 1, 0
        %v3229 = vsel %vm2205, 1, 0
        %v3230 = vsel %vm2206, 1, 0
        %v3231 = vsel %vm2207, 1, 0
        %v3232 = vsel %vm2208, 1, 0
        %v3233 = vsel %vm2209, 1, 0
        %v3234 = vsel %vm2210, 1, 0
        %v3235 = vsel %vm2211, 1, 0
        %v3236 = vsel %vm2212, 1, 0
        %v3237 = vsel %vm2213, 1, 0
        %v3238 = vsel %vm2214, 1, 0
        %v3239 = vsel %vm2215, 1, 0
        %v3240 = vsel %vm2216, 1, 0
        %v3241 = vsel %vm2217, 1, 0
        %v3242 = vsel %vm2218, 1, 0
        %v3243 = vsel %vm2219, 1, 0
        %v3244 = vsel %vm2220, 1, 0
        %v3245 = vsel %vm2221, 1, 0
        %v3246 = vsel %vm2222, 1, 0
        %v3247 = vsel %vm2223, 1, 0
        %v3248 = vsel %vm2224, 1, 0
        %v3249 = vsel %vm2225, 1, 0
        %v3250 = vsel %vm2226, 1, 0
        %v3251 = vsel %vm2227, 1, 0
        %v3252 = vsel %vm2228, 1, 0
        %v3253 = vsel %vm2229, 1, 0
        %v3254 = vsel %vm2230, 1, 0
        %v3255 = vsel %vm2231, 1, 0
        %v3256 = vsel %vm2232, 1, 0
        %v3257 = vsel %vm2233, 1, 0
        %v3258 = vsel %vm2234, 1, 0
        %v3259 = vsel %vm2235, 1, 0
        %v3260 = vsel %vm2236, 1, 0
        %v3261 = vsel %vm2237, 1, 0
        %v3262 = vsel %vm2238, 1, 0
        %v3263 = vsel %vm2239, 1, 0
        %v3264 = vsel %vm2240, 1, 0
        %v3265 = vsel %vm2241, 1, 0
        %v3266 = vsel %vm2242, 1, 0
        %v3267 = vsel %vm2243, 1, 0
        %v3268 = vsel %vm2244, 1, 0
        %v3269 = vsel %vm2245, 1, 0
        %v3270 = vsel %vm2246, 1, 0
        %v3271 = vsel %vm2247, 1, 0
        %v3272 = vsel %vm2248, 1, 0
        %v3273 = vsel %vm2249, 1, 0
        %v3274 = vsel %vm2250, 1, 0
        %v3275 = vsel %vm2251, 1, 0
        %v3276 = vsel %vm2252, 1, 0
        %v3277 = vsel %vm2253, 1, 0
        %v3278 = vsel %vm2254, 1, 0
        %v3279 = vsel %vm2255, 1, 0
        %v3280 = vsel %vm2256, 1, 0
        %v3281 = vsel %vm2257, 1, 0
        %v3282 = vsel %vm2258, 1, 0
        %v3283 = vsel %vm2259, 1, 0
        %v3284 = vsel %vm2260, 1, 0
        %v3285 = vsel %vm2261, 1, 0
        %v3286 = vsel %vm2262, 1, 0
        %v3287 = vsel %vm2263, 1, 0
        %v3288 = vsel %vm2264, 1, 0
        %v3289 = vsel %vm2265, 1, 0
        %v3290 = vsel %vm2266, 1, 0
        %v3291 = vsel %vm2267, 1, 0
        %v3292 = vsel %vm2268, 1, 0
        %v3293 = vsel %vm2269, 1, 0
        %v3294 = vsel %vm2270, 1, 0
        %v3295 = vsel %vm2271, 1, 0
        %v3296 = vsel %vm2272, 1, 0
        %v3297 = vsel %vm2273, 1, 0
        %v3298 = vsel %vm2274, 1, 0
        %v3299 = vsel %vm2275, 1, 0
        %v3300 = vsel %vm2276, 1, 0
        %v3301 = vsel %vm2277, 1, 0
        %v3302 = vsel %vm2278, 1, 0
        %v3303 = vsel %vm2279, 1, 0
        %v3304 = vsel %vm2280, 1, 0
        %v3305 = vsel %vm2281, 1, 0
        %v3306 = vsel %vm2282, 1, 0
        %v3307 = vsel %vm2283, 1, 0
        %v3308 = vsel %vm2284, 1, 0
        %v3309 = vsel %vm2285, 1, 0
        %v3310 = vsel %vm2286, 1, 0
        %v3311 = vsel %vm2287, 1, 0
        %v3312 = vsel %vm2288, 1, 0
        %v3313 = vsel %vm2289, 1, 0
        %v3314 = vsel %vm2290, 1, 0
        %v3315 = vsel %vm2291, 1, 0
        %v3316 = vsel %vm2292, 1, 0
        %v3317 = vsel %vm2293, 1, 0
        %v3318 = vsel %vm2294, 1, 0
        %v3319 = vsel %vm2295, 1, 0
        %v3320 = vsel %vm2296, 1, 0
        %v3321 = vsel %vm2297, 1, 0
        %v3322 = vsel %vm2298, 1, 0
        %v3323 = vsel %vm2299, 1, 0
        %v3324 = vsel %vm2300, 1, 0
        %v3325 = vsel %vm2301, 1, 0
        %v3326 = vsel %vm2302, 1, 0
        %v3327 = vsel %vm2303, 1, 0
        %v3328 = vsel %vm2304, 1, 0
        %v3329 = vsel %vm2305, 1, 0
        %v3330 = vsel %vm2306, 1, 0
        %v3331 = vsel %vm2307, 1, 0
        %v3332 = vsel %vm2308, 1, 0
        %v3333 = vsel %vm2309, 1, 0
        %v3334 = vsel %vm2310, 1, 0
        %v3335 = vsel %vm2311, 1, 0
        %v3336 = vsel %vm2312, 1, 0
        %v3337 = vsel %vm2313, 1, 0
        %v3338 = vsel %vm2314, 1, 0
        %v3339 = vsel %vm2315, 1, 0
        %v3340 = vsel %vm2316, 1, 0
        %v3341 = vsel %vm2317, 1, 0
        %v3342 = vsel %vm2318, 1, 0
        %v3343 = vsel %vm2319, 1, 0
        %v3344 = vsel %vm2320, 1, 0
        %v3345 = vsel %vm2321, 1, 0
        %v3346 = vsel %vm2322, 1, 0
        %v3347 = vsel %vm2323, 1, 0
        %v3348 = vsel %vm2324, 1, 0
        %v3349 = vsel %vm2325, 1, 0
        %v3350 = vsel %vm2326, 1, 0
        %v3351 = vsel %vm2327, 1, 0
        %v3352 = vsel %vm2328, 1, 0
        %v3353 = vsel %vm2329, 1, 0
        %v3354 = vsel %vm2330, 1, 0
        %v3355 = vsel %vm2331, 1, 0
        %v3356 = vsel %vm2332, 1, 0
        %v3357 = vsel %vm2333, 1, 0
        %v3358 = vsel %vm2334, 1, 0
        %v3359 = vsel %vm2335, 1, 0
        %v3360 = vsel %vm2336, 1, 0
        %v3361 = vsel %vm2337, 1, 0
        %v3362 = vsel %vm2338, 1, 0
        %v3363 = vsel %vm2339, 1, 0
        %v3364 = vsel %vm2340, 1, 0
        %v3365 = vsel %vm2341, 1, 0
        %v3366 = vsel %vm2342, 1, 0
        %v3367 = vsel %vm2343, 1, 0
        %v3368 = vsel %vm2344, 1, 0
        %v3369 = vsel %vm2345, 1, 0
        %v3370 = vsel %vm2346, 1, 0
        %v3371 = vsel %vm2347, 1, 0
        %v3372 = vsel %vm2348, 1, 0
        %v3373 = vsel %vm2349, 1, 0
        %v3374 = vsel %vm2350, 1, 0
        %v3375 = vsel %vm2351, 1, 0
        %v3376 = vsel %vm2352, 1, 0
        %v3377 = vsel %vm2353, 1, 0
        %v3378 = vsel %vm2354, 1, 0
        %v3379 = vsel %vm2355, 1, 0
        %v3380 = vsel %vm2356, 1, 0
        %v3381 = vsel %vm2357, 1, 0
        %v3382 = vsel %vm2358, 1, 0
        %v3383 = vsel %vm2359, 1, 0
        %v3384 = vsel %vm2360, 1, 0
        %v3385 = vsel %vm2361, 1, 0
        %v3386 = vsel %vm2362, 1, 0
        %v3387 = vsel %vm2363, 1, 0
        %v3388 = vsel %vm2364, 1, 0
        %v3389 = vsel %vm2365, 1, 0
        %v3390 = vsel %vm2366, 1, 0
        %v3391 = vsel %vm2367, 1, 0
        %v3392 = vsel %vm2368, 1, 0
        %v3393 = vsel %vm2369, 1, 0
        %v3394 = vsel %vm2370, 1, 0
        %v3395 = vsel %vm2371, 1, 0
        %v3396 = vsel %vm2372, 1, 0
        %v3397 = vsel %vm2373, 1, 0
        %v3398 = vsel %vm2374, 1, 0
        %v3399 = vsel %vm2375, 1, 0
        %v3400 = vsel %vm2376, 1, 0
        %v3401 = vsel %vm2377, 1, 0
        %v3402 = vsel %vm2378, 1, 0
        %v3403 = vsel %vm2379, 1, 0
        %v3404 = vsel %vm2380, 1, 0
        %v3405 = vsel %vm2381, 1, 0
        %v3406 = vsel %vm2382, 1, 0
        %v3407 = vsel %vm2383, 1, 0
        %v3408 = vsel %vm2384, 1, 0
        %v3409 = vsel %vm2385, 1, 0
        %v3410 = vsel %vm2386, 1, 0
        %v3411 = vsel %vm2387, 1, 0
        %v3412 = vsel %vm2388, 1, 0
        %v3413 = vsel %vm2389, 1, 0
        %v3414 = vsel %vm2390, 1, 0
        %v3415 = vsel %vm2391, 1, 0
        %v3416 = vsel %vm2392, 1, 0
        %v3417 = vsel %vm2393, 1, 0
        %v3418 = vsel %vm2394, 1, 0
        %v3419 = vsel %vm2395, 1, 0
        %v3420 = vsel %vm2396, 1, 0
        %v3421 = vsel %vm2397, 1, 0
        %v3422 = vsel %vm2398, 1, 0
        %v3423 = vsel %vm2399, 1, 0
        %v3424 = vsel %vm2400, 1, 0
        %v3425 = vsel %vm2401, 1, 0
        %v3426 = vsel %vm2402, 1, 0
        %v3427 = vsel %vm2403, 1, 0
        %v3428 = vsel %vm2404, 1, 0
        %v3429 = vsel %vm2405, 1, 0
        %v3430 = vsel %vm2406, 1, 0
        %v3431 = vsel %vm2407, 1, 0
        %v3432 = vsel %vm2408, 1, 0
        %v3433 = vsel %vm2409, 1, 0
        %v3434 = vsel %vm2410, 1, 0
        %v3435 = vsel %vm2411, 1, 0
        %v3436 = vsel %vm2412, 1, 0
        %v3437 = vsel %vm2413, 1, 0
        %v3438 = vsel %vm2414, 1, 0
        %v3439 = vsel %vm2415, 1, 0
        %v3440 = vsel %vm2416, 1, 0
        %v3441 = vsel %vm2417, 1, 0
        %v3442 = vsel %vm2418, 1, 0
        %v3443 = vsel %vm2419, 1, 0
        %v3444 = vsel %vm2420, 1, 0
        %v3445 = vsel %vm2421, 1, 0
        %v3446 = vsel %vm2422, 1, 0
        %v3447 = vsel %vm2423, 1, 0
        %v3448 = vsel %vm2424, 1, 0
        %v3449 = vsel %vm2425, 1, 0
        %v3450 = vsel %vm2426, 1, 0
        %v3451 = vsel %vm2427, 1, 0
        %v3452 = vsel %vm2428, 1, 0
        %v3453 = vsel %vm2429, 1, 0
        %v3454 = vsel %vm2430, 1, 0
        %v3455 = vsel %vm2431, 1, 0
        %v3456 = vsel %vm2432, 1, 0
        %v3457 = vsel %vm2433, 1, 0
        %v3458 = vsel %vm2434, 1, 0
        %v3459 = vsel %vm2435, 1, 0
        %v3460 = vsel %vm2436, 1, 0
        %v3461 = vsel %vm2437, 1, 0
        %v3462 = vsel %vm2438, 1, 0
        %v3463 = vsel %vm2439, 1, 0
        %v3464 = vsel %vm2440, 1, 0
        %v3465 = vsel %vm2441, 1, 0
        %v3466 = vsel %vm2442, 1, 0
        %v3467 = vsel %vm2443, 1, 0
        %v3468 = vsel %vm2444, 1, 0
        %v3469 = vsel %vm2445, 1, 0
        %v3470 = vsel %vm2446, 1, 0
        %v3471 = vsel %vm2447, 1, 0
        %v3472 = vsel %vm2448, 1, 0
        %v3473 = vsel %vm2449, 1, 0
        %v3474 = vsel %vm2450, 1, 0
        %v3475 = vsel %vm2451, 1, 0
        %v3476 = vsel %vm2452, 1, 0
        %v3477 = vsel %vm2453, 1, 0
        %v3478 = vsel %vm2454, 1, 0
        %v3479 = vsel %vm2455, 1, 0
        %v3480 = vsel %vm2456, 1, 0
        %v3481 = vsel %vm2457, 1, 0
        %v3482 = vsel %vm2458, 1, 0
        %v3483 = vsel %vm2459, 1, 0
        %v3484 = vsel %vm2460, 1, 0
        %v3485 = vsel %vm2461, 1, 0
        %v3486 = vsel %vm2462, 1, 0
        %v3487 = vsel %vm2463, 1, 0
        %v3488 = vsel %vm2464, 1, 0
        %v3489 = vsel %vm2465, 1, 0
        %v3490 = vsel %vm2466, 1, 0
        %v3491 = vsel %vm2467, 1, 0
        %v3492 = vsel %vm2468, 1, 0
        %v3493 = vsel %vm2469, 1, 0
        %v3494 = vsel %vm2470, 1, 0
        %v3495 = vsel %vm2471, 1, 0
        %v3496 = vsel %vm2472, 1, 0
        %v3497 = vsel %vm2473, 1, 0
        %v3498 = vsel %vm2474, 1, 0
        %v3499 = vsel %vm2475, 1, 0
        %v3500 = vsel %vm2476, 1, 0
        %v3501 = vsel %vm2477, 1, 0
        %v3502 = vsel %vm2478, 1, 0
        %v3503 = vsel %vm2479, 1, 0
        %v3504 = vsel %vm2480, 1, 0
        %v3505 = vsel %vm2481, 1, 0
        %v3506 = vsel %vm2482, 1, 0
        %v3507 = vsel %vm2483, 1, 0
        %v3508 = vsel %vm2484, 1, 0
        %v3509 = vsel %vm2485, 1, 0
        %v3510 = vsel %vm2486, 1, 0
        %v3511 = vsel %vm2487, 1, 0
        %v3512 = vsel %vm2488, 1, 0
        %v3513 = vsel %vm2489, 1, 0
        %v3514 = vsel %vm2490, 1, 0
        %v3515 = vsel %vm2491, 1, 0
        %v3516 = vsel %vm2492, 1, 0
        %v3517 = vsel %vm2493, 1, 0
        %v3518 = vsel %vm2494, 1, 0
        %v3519 = vsel %vm2495, 1, 0
        %v3520 = vsel %vm2496, 1, 0
        %v3521 = vsel %vm2497, 1, 0
        %v3522 = vsel %vm2498, 1, 0
        %v3523 = vsel %vm2499, 1, 0
        %v3524 = vsel %vm2500, 1, 0
        %v3525 = vsel %vm2501, 1, 0
        %v3526 = vsel %vm2502, 1, 0
        %v3527 = vsel %vm2503, 1, 0
        %v3528 = vsel %vm2504, 1, 0
        %v3529 = vsel %vm2505, 1, 0
        %v3530 = vsel %vm2506, 1, 0
        %v3531 = vsel %vm2507, 1, 0
        %v3532 = vsel %vm2508, 1, 0
        %v3533 = vsel %vm2509, 1, 0
        %v3534 = vsel %vm2510, 1, 0
        %v3535 = vsel %vm2511, 1, 0
        %v3536 = vsel %vm2512, 1, 0
        %v3537 = vsel %vm2513, 1, 0
        %v3538 = vsel %vm2514, 1, 0
        %v3539 = vsel %vm2515, 1, 0
        %v3540 = vsel %vm2516, 1, 0
        %v3541 = vsel %vm2517, 1, 0
        %v3542 = vsel %vm2518, 1, 0
        %v3543 = vsel %vm2519, 1, 0
        %v3544 = vsel %vm2520, 1, 0
        %v3545 = vsel %vm2521, 1, 0
        %v3546 = vsel %vm2522, 1, 0
        %v3547 = vsel %vm2523, 1, 0
        %v3548 = vsel %vm2524, 1, 0
        %v3549 = vsel %vm2525, 1, 0
        %v3550 = vsel %vm2526, 1, 0
        %v3551 = vsel %vm2527, 1, 0
        %v3552 = vsel %vm2528, 1, 0
        %v3553 = vsel %vm2529, 1, 0
        %v3554 = vsel %vm2530, 1, 0
        %v3555 = vsel %vm2531, 1, 0
        %v3556 = vsel %vm2532, 1, 0
        %v3557 = vsel %vm2533, 1, 0
        %v3558 = vsel %vm2534, 1, 0
        %v3559 = vcvt.s32.f32 %v2535
        %v3560 = vcvt.s32.f32 %v2536
        %v3561 = vcvt.s32.f32 %v2537
        %v3562 = vcvt.s32.f32 %v2538
        %v3563 = vcvt.s32.f32 %v2539
        %v3564 = vcvt.s32.f32 %v2540
        %v3565 = vcvt.s32.f32 %v2541
        %v3566 = vcvt.s32.f32 %v2542
        %v3567 = vcvt.s32.f32 %v2543
        %v3568 = vcvt.s32.f32 %v2544
        %v3569 = vcvt.s32.f32 %v2545
        %v3570 = vcvt.s32.f32 %v2546
        %v3571 = vcvt.s32.f32 %v2547
        %v3572 = vcvt.s32.f32 %v2548
        %v3573 = vcvt.s32.f32 %v2549
        %v3574 = vcvt.s32.f32 %v2550
        %v3575 = vcvt.s32.f32 %v2551
        %v3576 = vcvt.s32.f32 %v2552
        %v3577 = vcvt.s32.f32 %v2553
        %v3578 = vcvt.s32.f32 %v2554
        %v3579 = vcvt.s32.f32 %v2555
        %v3580 = vcvt.s32.f32 %v2556
        %v3581 = vcvt.s32.f32 %v2557
        %v3582 = vcvt.s32.f32 %v2558
        %v3583 = vcvt.s32.f32 %v2559
        %v3584 = vcvt.s32.f32 %v2560
        %v3585 = vcvt.s32.f32 %v2561
        %v3586 = vcvt.s32.f32 %v2562
        %v3587 = vcvt.s32.f32 %v2563
        %v3588 = vcvt.s32.f32 %v2564
        %v3589 = vcvt.s32.f32 %v2565
        %v3590 = vcvt.s32.f32 %v2566
        %v3591 = vcvt.s32.f32 %v2567
        %v3592 = vcvt.s32.f32 %v2568
        %v3593 = vcvt.s32.f32 %v2569
        %v3594 = vcvt.s32.f32 %v2570
        %v3595 = vcvt.s32.f32 %v2571
        %v3596 = vcvt.s32.f32 %v2572
        %v3597 = vcvt.s32.f32 %v2573
        %v3598 = vcvt.s32.f32 %v2574
        %v3599 = vcvt.s32.f32 %v2575
        %v3600 = vcvt.s32.f32 %v2576
        %v3601 = vcvt.s32.f32 %v2577
        %v3602 = vcvt.s32.f32 %v2578
        %v3603 = vcvt.s32.f32 %v2579
        %v3604 = vcvt.s32.f32 %v2580
        %v3605 = vcvt.s32.f32 %v2581
        %v3606 = vcvt.s32.f32 %v2582
        %v3607 = vcvt.s32.f32 %v2583
        %v3608 = vcvt.s32.f32 %v2584
        %v3609 = vcvt.s32.f32 %v2585
        %v3610 = vcvt.s32.f32 %v2586
        %v3611 = vcvt.s32.f32 %v2587
        %v3612 = vcvt.s32.f32 %v2588
        %v3613 = vcvt.s32.f32 %v2589
        %v3614 = vcvt.s32.f32 %v2590
        %v3615 = vcvt.s32.f32 %v2591
        %v3616 = vcvt.s32.f32 %v2592
        %v3617 = vcvt.s32.f32 %v2593
        %v3618 = vcvt.s32.f32 %v2594
        %v3619 = vcvt.s32.f32 %v2595
        %v3620 = vcvt.s32.f32 %v2596
        %v3621 = vcvt.s32.f32 %v2597
        %v3622 = vcvt.s32.f32 %v2598
        %v3623 = vcvt.s32.f32 %v2599
        %v3624 = vcvt.s32.f32 %v2600
        %v3625 = vcvt.s32.f32 %v2601
        %v3626 = vcvt.s32.f32 %v2602
        %v3627 = vcvt.s32.f32 %v2603
        %v3628 = vcvt.s32.f32 %v2604
        %v3629 = vcvt.s32.f32 %v2605
        %v3630 = vcvt.s32.f32 %v2606
        %v3631 = vcvt.s32.f32 %v2607
        %v3632 = vcvt.s32.f32 %v2608
        %v3633 = vcvt.s32.f32 %v2609
        %v3634 = vcvt.s32.f32 %v2610
        %v3635 = vcvt.s32.f32 %v2611
        %v3636 = vcvt.s32.f32 %v2612
        %v3637 = vcvt.s32.f32 %v2613
        %v3638 = vcvt.s32.f32 %v2614
        %v3639 = vcvt.s32.f32 %v2615
        %v3640 = vcvt.s32.f32 %v2616
        %v3641 = vcvt.s32.f32 %v2617
        %v3642 = vcvt.s32.f32 %v2618
        %v3643 = vcvt.s32.f32 %v2619
        %v3644 = vcvt.s32.f32 %v2620
        %v3645 = vcvt.s32.f32 %v2621
        %v3646 = vcvt.s32.f32 %v2622
        %v3647 = vcvt.s32.f32 %v2623
        %v3648 = vcvt.s32.f32 %v2624
        %v3649 = vcvt.s32.f32 %v2625
        %v3650 = vcvt.s32.f32 %v2626
        %v3651 = vcvt.s32.f32 %v2627
        %v3652 = vcvt.s32.f32 %v2628
        %v3653 = vcvt.s32.f32 %v2629
        %v3654 = vcvt.s32.f32 %v2630
        %v3655 = vcvt.s32.f32 %v2631
        %v3656 = vcvt.s32.f32 %v2632
        %v3657 = vcvt.s32.f32 %v2633
        %v3658 = vcvt.s32.f32 %v2634
        %v3659 = vcvt.s32.f32 %v2635
        %v3660 = vcvt.s32.f32 %v2636
        %v3661 = vcvt.s32.f32 %v2637
        %v3662 = vcvt.s32.f32 %v2638
        %v3663 = vcvt.s32.f32 %v2639
        %v3664 = vcvt.s32.f32 %v2640
        %v3665 = vcvt.s32.f32 %v2641
        %v3666 = vcvt.s32.f32 %v2642
        %v3667 = vcvt.s32.f32 %v2643
        %v3668 = vcvt.s32.f32 %v2644
        %v3669 = vcvt.s32.f32 %v2645
        %v3670 = vcvt.s32.f32 %v2646
        %v3671 = vcvt.s32.f32 %v2647
        %v3672 = vcvt.s32.f32 %v2648
        %v3673 = vcvt.s32.f32 %v2649
        %v3674 = vcvt.s32.f32 %v2650
        %v3675 = vcvt.s32.f32 %v2651
        %v3676 = vcvt.s32.f32 %v2652
        %v3677 = vcvt.s32.f32 %v2653
        %v3678 = vcvt.s32.f32 %v2654
        %v3679 = vcvt.s32.f32 %v2655
        %v3680 = vcvt.s32.f32 %v2656
        %v3681 = vcvt.s32.f32 %v2657
        %v3682 = vcvt.s32.f32 %v2658
        %v3683 = vcvt.s32.f32 %v2659
        %v3684 = vcvt.s32.f32 %v2660
        %v3685 = vcvt.s32.f32 %v2661
        %v3686 = vcvt.s32.f32 %v2662
        %v3687 = vcvt.s32.f32 %v2663
        %v3688 = vcvt.s32.f32 %v2664
        %v3689 = vcvt.s32.f32 %v2665
        %v3690 = vcvt.s32.f32 %v2666
        %v3691 = vcvt.s32.f32 %v2667
        %v3692 = vcvt.s32.f32 %v2668
        %v3693 = vcvt.s32.f32 %v2669
        %v3694 = vcvt.s32.f32 %v2670
        %v3695 = vcvt.s32.f32 %v2671
        %v3696 = vcvt.s32.f32 %v2672
        %v3697 = vcvt.s32.f32 %v2673
        %v3698 = vcvt.s32.f32 %v2674
        %v3699 = vcvt.s32.f32 %v2675
        %v3700 = vcvt.s32.f32 %v2676
        %v3701 = vcvt.s32.f32 %v2677
        %v3702 = vcvt.s32.f32 %v2678
        %v3703 = vcvt.s32.f32 %v2679
        %v3704 = vcvt.s32.f32 %v2680
        %v3705 = vcvt.s32.f32 %v2681
        %v3706 = vcvt.s32.f32 %v2682
        %v3707 = vcvt.s32.f32 %v2683
        %v3708 = vcvt.s32.f32 %v2684
        %v3709 = vcvt.s32.f32 %v2685
        %v3710 = vcvt.s32.f32 %v2686
        %v3711 = vcvt.s32.f32 %v2687
        %v3712 = vcvt.s32.f32 %v2688
        %v3713 = vcvt.s32.f32 %v2689
        %v3714 = vcvt.s32.f32 %v2690
        %v3715 = vcvt.s32.f32 %v2691
        %v3716 = vcvt.s32.f32 %v2692
        %v3717 = vcvt.s32.f32 %v2693
        %v3718 = vcvt.s32.f32 %v2694
        %v3719 = vcvt.s32.f32 %v2695
        %v3720 = vcvt.s32.f32 %v2696
        %v3721 = vcvt.s32.f32 %v2697
        %v3722 = vcvt.s32.f32 %v2698
        %v3723 = vcvt.s32.f32 %v2699
        %v3724 = vcvt.s32.f32 %v2700
        %v3725 = vcvt.s32.f32 %v2701
        %v3726 = vcvt.s32.f32 %v2702
        %v3727 = vcvt.s32.f32 %v2703
        %v3728 = vcvt.s32.f32 %v2704
        %v3729 = vcvt.s32.f32 %v2705
        %v3730 = vcvt.s32.f32 %v2706
        %v3731 = vcvt.s32.f32 %v2707
        %v3732 = vcvt.s32.f32 %v2708
        %v3733 = vcvt.s32.f32 %v2709
        %v3734 = vcvt.s32.f32 %v2710
        %v3735 = vcvt.s32.f32 %v2711
        %v3736 = vcvt.s32.f32 %v2712
        %v3737 = vcvt.s32.f32 %v2713
        %v3738 = vcvt.s32.f32 %v2714
        %v3739 = vcvt.s32.f32 %v2715
        %v3740 = vcvt.s32.f32 %v2716
        %v3741 = vcvt.s32.f32 %v2717
        %v3742 = vcvt.s32.f32 %v2718
        %v3743 = vcvt.s32.f32 %v2719
        %v3744 = vcvt.s32.f32 %v2720
        %v3745 = vcvt.s32.f32 %v2721
        %v3746 = vcvt.s32.f32 %v2722
        %v3747 = vcvt.s32.f32 %v2723
        %v3748 = vcvt.s32.f32 %v2724
        %v3749 = vcvt.s32.f32 %v2725
        %v3750 = vcvt.s32.f32 %v2726
        %v3751 = vcvt.s32.f32 %v2727
        %v3752 = vcvt.s32.f32 %v2728
        %v3753 = vcvt.s32.f32 %v2729
        %v3754 = vcvt.s32.f32 %v2730
        %v3755 = vcvt.s32.f32 %v2731
        %v3756 = vcvt.s32.f32 %v2732
        %v3757 = vcvt.s32.f32 %v2733
        %v3758 = vcvt.s32.f32 %v2734
        %v3759 = vcvt.s32.f32 %v2735
        %v3760 = vcvt.s32.f32 %v2736
        %v3761 = vcvt.s32.f32 %v2737
        %v3762 = vcvt.s32.f32 %v2738
        %v3763 = vcvt.s32.f32 %v2739
        %v3764 = vcvt.s32.f32 %v2740
        %v3765 = vcvt.s32.f32 %v2741
        %v3766 = vcvt.s32.f32 %v2742
        %v3767 = vcvt.s32.f32 %v2743
        %v3768 = vcvt.s32.f32 %v2744
        %v3769 = vcvt.s32.f32 %v2745
        %v3770 = vcvt.s32.f32 %v2746
        %v3771 = vcvt.s32.f32 %v2747
        %v3772 = vcvt.s32.f32 %v2748
        %v3773 = vcvt.s32.f32 %v2749
        %v3774 = vcvt.s32.f32 %v2750
        %v3775 = vcvt.s32.f32 %v2751
        %v3776 = vcvt.s32.f32 %v2752
        %v3777 = vcvt.s32.f32 %v2753
        %v3778 = vcvt.s32.f32 %v2754
        %v3779 = vcvt.s32.f32 %v2755
        %v3780 = vcvt.s32.f32 %v2756
        %v3781 = vcvt.s32.f32 %v2757
        %v3782 = vcvt.s32.f32 %v2758
        %v3783 = vcvt.s32.f32 %v2759
        %v3784 = vcvt.s32.f32 %v2760
        %v3785 = vcvt.s32.f32 %v2761
        %v3786 = vcvt.s32.f32 %v2762
        %v3787 = vcvt.s32.f32 %v2763
        %v3788 = vcvt.s32.f32 %v2764
        %v3789 = vcvt.s32.f32 %v2765
        %v3790 = vcvt.s32.f32 %v2766
        %v3791 = vcvt.s32.f32 %v2767
        %v3792 = vcvt.s32.f32 %v2768
        %v3793 = vcvt.s32.f32 %v2769
        %v3794 = vcvt.s32.f32 %v2770
        %v3795 = vcvt.s32.f32 %v2771
        %v3796 = vcvt.s32.f32 %v2772
        %v3797 = vcvt.s32.f32 %v2773
        %v3798 = vcvt.s32.f32 %v2774
        %v3799 = vcvt.s32.f32 %v2775
        %v3800 = vcvt.s32.f32 %v2776
        %v3801 = vcvt.s32.f32 %v2777
        %v3802 = vcvt.s32.f32 %v2778
        %v3803 = vcvt.s32.f32 %v2779
        %v3804 = vcvt.s32.f32 %v2780
        %v3805 = vcvt.s32.f32 %v2781
        %v3806 = vcvt.s32.f32 %v2782
        %v3807 = vcvt.s32.f32 %v2783
        %v3808 = vcvt.s32.f32 %v2784
        %v3809 = vcvt.s32.f32 %v2785
        %v3810 = vcvt.s32.f32 %v2786
        %v3811 = vcvt.s32.f32 %v2787
        %v3812 = vcvt.s32.f32 %v2788
        %v3813 = vcvt.s32.f32 %v2789
        %v3814 = vcvt.s32.f32 %v2790
        %v3815 = vcvt.s32.f32 %v2791
        %v3816 = vcvt.s32.f32 %v2792
        %v3817 = vcvt.s32.f32 %v2793
        %v3818 = vcvt.s32.f32 %v2794
        %v3819 = vcvt.s32.f32 %v2795
        %v3820 = vcvt.s32.f32 %v2796
        %v3821 = vcvt.s32.f32 %v2797
        %v3822 = vcvt.s32.f32 %v2798
        %v3823 = vcvt.s32.f32 %v2799
        %v3824 = vcvt.s32.f32 %v2800
        %v3825 = vcvt.s32.f32 %v2801
        %v3826 = vcvt.s32.f32 %v2802
        %v3827 = vcvt.s32.f32 %v2803
        %v3828 = vcvt.s32.f32 %v2804
        %v3829 = vcvt.s32.f32 %v2805
        %v3830 = vcvt.s32.f32 %v2806
        %v3831 = vcvt.s32.f32 %v2807
        %v3832 = vcvt.s32.f32 %v2808
        %v3833 = vcvt.s32.f32 %v2809
        %v3834 = vcvt.s32.f32 %v2810
        %v3835 = vcvt.s32.f32 %v2811
        %v3836 = vcvt.s32.f32 %v2812
        %v3837 = vcvt.s32.f32 %v2813
        %v3838 = vcvt.s32.f32 %v2814
        %v3839 = vcvt.s32.f32 %v2815
        %v3840 = vcvt.s32.f32 %v2816
        %v3841 = vcvt.s32.f32 %v2817
        %v3842 = vcvt.s32.f32 %v2818
        %v3843 = vcvt.s32.f32 %v2819
        %v3844 = vcvt.s32.f32 %v2820
        %v3845 = vcvt.s32.f32 %v2821
        %v3846 = vcvt.s32.f32 %v2822
        %v3847 = vcvt.s32.f32 %v2823
        %v3848 = vcvt.s32.f32 %v2824
        %v3849 = vcvt.s32.f32 %v2825
        %v3850 = vcvt.s32.f32 %v2826
        %v3851 = vcvt.s32.f32 %v2827
        %v3852 = vcvt.s32.f32 %v2828
        %v3853 = vcvt.s32.f32 %v2829
        %v3854 = vcvt.s32.f32 %v2830
        %v3855 = vcvt.s32.f32 %v2831
        %v3856 = vcvt.s32.f32 %v2832
        %v3857 = vcvt.s32.f32 %v2833
        %v3858 = vcvt.s32.f32 %v2834
        %v3859 = vcvt.s32.f32 %v2835
        %v3860 = vcvt.s32.f32 %v2836
        %v3861 = vcvt.s32.f32 %v2837
        %v3862 = vcvt.s32.f32 %v2838
        %v3863 = vcvt.s32.f32 %v2839
        %v3864 = vcvt.s32.f32 %v2840
        %v3865 = vcvt.s32.f32 %v2841
        %v3866 = vcvt.s32.f32 %v2842
        %v3867 = vcvt.s32.f32 %v2843
        %v3868 = vcvt.s32.f32 %v2844
        %v3869 = vcvt.s32.f32 %v2845
        %v3870 = vcvt.s32.f32 %v2846
        %v3871 = vcvt.s32.f32 %v2847
        %v3872 = vcvt.s32.f32 %v2848
        %v3873 = vcvt.s32.f32 %v2849
        %v3874 = vcvt.s32.f32 %v2850
        %v3875 = vcvt.s32.f32 %v2851
        %v3876 = vcvt.s32.f32 %v2852
        %v3877 = vcvt.s32.f32 %v2853
        %v3878 = vcvt.s32.f32 %v2854
        %v3879 = vcvt.s32.f32 %v2855
        %v3880 = vcvt.s32.f32 %v2856
        %v3881 = vcvt.s32.f32 %v2857
        %v3882 = vcvt.s32.f32 %v2858
        %v3883 = vcvt.s32.f32 %v2859
        %v3884 = vcvt.s32.f32 %v2860
        %v3885 = vcvt.s32.f32 %v2861
        %v3886 = vcvt.s32.f32 %v2862
        %v3887 = vcvt.s32.f32 %v2863
        %v3888 = vcvt.s32.f32 %v2864
        %v3889 = vcvt.s32.f32 %v2865
        %v3890 = vcvt.s32.f32 %v2866
        %v3891 = vcvt.s32.f32 %v2867
        %v3892 = vcvt.s32.f32 %v2868
        %v3893 = vcvt.s32.f32 %v2869
        %v3894 = vcvt.s32.f32 %v2870
        %v3895 = vcvt.s32.f32 %v2871
        %v3896 = vcvt.s32.f32 %v2872
        %v3897 = vcvt.s32.f32 %v2873
        %v3898 = vcvt.s32.f32 %v2874
        %v3899 = vcvt.s32.f32 %v2875
        %v3900 = vcvt.s32.f32 %v2876
        %v3901 = vcvt.s32.f32 %v2877
        %v3902 = vcvt.s32.f32 %v2878
        %v3903 = vcvt.s32.f32 %v2879
        %v3904 = vcvt.s32.f32 %v2880
        %v3905 = vcvt.s32.f32 %v2881
        %v3906 = vcvt.s32.f32 %v2882
        %v3907 = vcvt.s32.f32 %v2883
        %v3908 = vcvt.s32.f32 %v2884
        %v3909 = vcvt.s32.f32 %v2885
        %v3910 = vcvt.s32.f32 %v2886
        %v3911 = vcvt.s32.f32 %v2887
        %v3912 = vcvt.s32.f32 %v2888
        %v3913 = vcvt.s32.f32 %v2889
        %v3914 = vcvt.s32.f32 %v2890
        %v3915 = vcvt.s32.f32 %v2891
        %v3916 = vcvt.s32.f32 %v2892
        %v3917 = vcvt.s32.f32 %v2893
        %v3918 = vcvt.s32.f32 %v2894
        %v3919 = vcvt.s32.f32 %v2895
        %v3920 = vcvt.s32.f32 %v2896
        %v3921 = vcvt.s32.f32 %v2897
        %v3922 = vcvt.s32.f32 %v2898
        %v3923 = vcvt.s32.f32 %v2899
        %v3924 = vcvt.s32.f32 %v2900
        %v3925 = vcvt.s32.f32 %v2901
        %v3926 = vcvt.s32.f32 %v2902
        %v3927 = vcvt.s32.f32 %v2903
        %v3928 = vcvt.s32.f32 %v2904
        %v3929 = vcvt.s32.f32 %v2905
        %v3930 = vcvt.s32.f32 %v2906
        %v3931 = vcvt.s32.f32 %v2907
        %v3932 = vcvt.s32.f32 %v2908
        %v3933 = vcvt.s32.f32 %v2909
        %v3934 = vcvt.s32.f32 %v2910
        %v3935 = vcvt.s32.f32 %v2911
        %v3936 = vcvt.s32.f32 %v2912
        %v3937 = vcvt.s32.f32 %v2913
        %v3938 = vcvt.s32.f32 %v2914
        %v3939 = vcvt.s32.f32 %v2915
        %v3940 = vcvt.s32.f32 %v2916
        %v3941 = vcvt.s32.f32 %v2917
        %v3942 = vcvt.s32.f32 %v2918
        %v3943 = vcvt.s32.f32 %v2919
        %v3944 = vcvt.s32.f32 %v2920
        %v3945 = vcvt.s32.f32 %v2921
        %v3946 = vcvt.s32.f32 %v2922
        %v3947 = vcvt.s32.f32 %v2923
        %v3948 = vcvt.s32.f32 %v2924
        %v3949 = vcvt.s32.f32 %v2925
        %v3950 = vcvt.s32.f32 %v2926
        %v3951 = vcvt.s32.f32 %v2927
        %v3952 = vcvt.s32.f32 %v2928
        %v3953 = vcvt.s32.f32 %v2929
        %v3954 = vcvt.s32.f32 %v2930
        %v3955 = vcvt.s32.f32 %v2931
        %v3956 = vcvt.s32.f32 %v2932
        %v3957 = vcvt.s32.f32 %v2933
        %v3958 = vcvt.s32.f32 %v2934
        %v3959 = vcvt.s32.f32 %v2935
        %v3960 = vcvt.s32.f32 %v2936
        %v3961 = vcvt.s32.f32 %v2937
        %v3962 = vcvt.s32.f32 %v2938
        %v3963 = vcvt.s32.f32 %v2939
        %v3964 = vcvt.s32.f32 %v2940
        %v3965 = vcvt.s32.f32 %v2941
        %v3966 = vcvt.s32.f32 %v2942
        %v3967 = vcvt.s32.f32 %v2943
        %v3968 = vcvt.s32.f32 %v2944
        %v3969 = vcvt.s32.f32 %v2945
        %v3970 = vcvt.s32.f32 %v2946
        %v3971 = vcvt.s32.f32 %v2947
        %v3972 = vcvt.s32.f32 %v2948
        %v3973 = vcvt.s32.f32 %v2949
        %v3974 = vcvt.s32.f32 %v2950
        %v3975 = vcvt.s32.f32 %v2951
        %v3976 = vcvt.s32.f32 %v2952
        %v3977 = vcvt.s32.f32 %v2953
        %v3978 = vcvt.s32.f32 %v2954
        %v3979 = vcvt.s32.f32 %v2955
        %v3980 = vcvt.s32.f32 %v2956
        %v3981 = vcvt.s32.f32 %v2957
        %v3982 = vcvt.s32.f32 %v2958
        %v3983 = vcvt.s32.f32 %v2959
        %v3984 = vcvt.s32.f32 %v2960
        %v3985 = vcvt.s32.f32 %v2961
        %v3986 = vcvt.s32.f32 %v2962
        %v3987 = vcvt.s32.f32 %v2963
        %v3988 = vcvt.s32.f32 %v2964
        %v3989 = vcvt.s32.f32 %v2965
        %v3990 = vcvt.s32.f32 %v2966
        %v3991 = vcvt.s32.f32 %v2967
        %v3992 = vcvt.s32.f32 %v2968
        %v3993 = vcvt.s32.f32 %v2969
        %v3994 = vcvt.s32.f32 %v2970
        %v3995 = vcvt.s32.f32 %v2971
        %v3996 = vcvt.s32.f32 %v2972
        %v3997 = vcvt.s32.f32 %v2973
        %v3998 = vcvt.s32.f32 %v2974
        %v3999 = vcvt.s32.f32 %v2975
        %v4000 = vcvt.s32.f32 %v2976
        %v4001 = vcvt.s32.f32 %v2977
        %v4002 = vcvt.s32.f32 %v2978
        %v4003 = vcvt.s32.f32 %v2979
        %v4004 = vcvt.s32.f32 %v2980
        %v4005 = vcvt.s32.f32 %v2981
        %v4006 = vcvt.s32.f32 %v2982
        %v4007 = vcvt.s32.f32 %v2983
        %v4008 = vcvt.s32.f32 %v2984
        %v4009 = vcvt.s32.f32 %v2985
        %v4010 = vcvt.s32.f32 %v2986
        %v4011 = vcvt.s32.f32 %v2987
        %v4012 = vcvt.s32.f32 %v2988
        %v4013 = vcvt.s32.f32 %v2989
        %v4014 = vcvt.s32.f32 %v2990
        %v4015 = vcvt.s32.f32 %v2991
        %v4016 = vcvt.s32.f32 %v2992
        %v4017 = vcvt.s32.f32 %v2993
        %v4018 = vcvt.s32.f32 %v2994
        %v4019 = vcvt.s32.f32 %v2995
        %v4020 = vcvt.s32.f32 %v2996
        %v4021 = vcvt.s32.f32 %v2997
        %v4022 = vcvt.s32.f32 %v2998
        %v4023 = vcvt.s32.f32 %v2999
        %v4024 = vcvt.s32.f32 %v3000
        %v4025 = vcvt.s32.f32 %v3001
        %v4026 = vcvt.s32.f32 %v3002
        %v4027 = vcvt.s32.f32 %v3003
        %v4028 = vcvt.s32.f32 %v3004
        %v4029 = vcvt.s32.f32 %v3005
        %v4030 = vcvt.s32.f32 %v3006
        %v4031 = vcvt.s32.f32 %v3007
        %v4032 = vcvt.s32.f32 %v3008
        %v4033 = vcvt.s32.f32 %v3009
        %v4034 = vcvt.s32.f32 %v3010
        %v4035 = vcvt.s32.f32 %v3011
        %v4036 = vcvt.s32.f32 %v3012
        %v4037 = vcvt.s32.f32 %v3013
        %v4038 = vcvt.s32.f32 %v3014
        %v4039 = vcvt.s32.f32 %v3015
        %v4040 = vcvt.s32.f32 %v3016
        %v4041 = vcvt.s32.f32 %v3017
        %v4042 = vcvt.s32.f32 %v3018
        %v4043 = vcvt.s32.f32 %v3019
        %v4044 = vcvt.s32.f32 %v3020
        %v4045 = vcvt.s32.f32 %v3021
        %v4046 = vcvt.s32.f32 %v3022
        %v4047 = vcvt.s32.f32 %v3023
        %v4048 = vcvt.s32.f32 %v3024
        %v4049 = vcvt.s32.f32 %v3025
        %v4050 = vcvt.s32.f32 %v3026
        %v4051 = vcvt.s32.f32 %v3027
        %v4052 = vcvt.s32.f32 %v3028
        %v4053 = vcvt.s32.f32 %v3029
        %v4054 = vcvt.s32.f32 %v3030
        %v4055 = vcvt.s32.f32 %v3031
        %v4056 = vcvt.s32.f32 %v3032
        %v4057 = vcvt.s32.f32 %v3033
        %v4058 = vcvt.s32.f32 %v3034
        %v4059 = vcvt.s32.f32 %v3035
        %v4060 = vcvt.s32.f32 %v3036
        %v4061 = vcvt.s32.f32 %v3037
        %v4062 = vcvt.s32.f32 %v3038
        %v4063 = vcvt.s32.f32 %v3039
        %v4064 = vcvt.s32.f32 %v3040
        %v4065 = vcvt.s32.f32 %v3041
        %v4066 = vcvt.s32.f32 %v3042
        %v4067 = vcvt.s32.f32 %v3043
        %v4068 = vcvt.s32.f32 %v3044
        %v4069 = vcvt.s32.f32 %v3045
        %v4070 = vcvt.s32.f32 %v3046
        %v4071 = vcvt.s32.f32 %v3047
        %v4072 = vcvt.s32.f32 %v3048
        %v4073 = vcvt.s32.f32 %v3049
        %v4074 = vcvt.s32.f32 %v3050
        %v4075 = vcvt.s32.f32 %v3051
        %v4076 = vcvt.s32.f32 %v3052
        %v4077 = vcvt.s32.f32 %v3053
        %v4078 = vcvt.s32.f32 %v3054
        %v4079 = vcvt.s32.f32 %v3055
        %v4080 = vcvt.s32.f32 %v3056
        %v4081 = vcvt.s32.f32 %v3057
        %v4082 = vcvt.s32.f32 %v3058
        %v4083 = vcvt.s32.f32 %v3059
        %v4084 = vcvt.s32.f32 %v3060
        %v4085 = vcvt.s32.f32 %v3061
        %v4086 = vcvt.s32.f32 %v3062
        %v4087 = vcvt.s32.f32 %v3063
        %v4088 = vcvt.s32.f32 %v3064
        %v4089 = vcvt.s32.f32 %v3065
        %v4090 = vcvt.s32.f32 %v3066
        %v4091 = vcvt.s32.f32 %v3067
        %v4092 = vcvt.s32.f32 %v3068
        %v4093 = vcvt.s32.f32 %v3069
        %v4094 = vcvt.s32.f32 %v3070
        %v4095 = vcvt.s32.f32 %v3071
        %v4096 = vcvt.s32.f32 %v3072
        %v4097 = vcvt.s32.f32 %v3073
        %v4098 = vcvt.s32.f32 %v3074
        %v4099 = vcvt.s32.f32 %v3075
        %v4100 = vcvt.s32.f32 %v3076
        %v4101 = vcvt.s32.f32 %v3077
        %v4102 = vcvt.s32.f32 %v3078
        %v4103 = vcvt.s32.f32 %v3079
        %v4104 = vcvt.s32.f32 %v3080
        %v4105 = vcvt.s32.f32 %v3081
        %v4106 = vcvt.s32.f32 %v3082
        %v4107 = vcvt.s32.f32 %v3083
        %v4108 = vcvt.s32.f32 %v3084
        %v4109 = vcvt.s32.f32 %v3085
        %v4110 = vcvt.s32.f32 %v3086
        %v4111 = vcvt.s32.f32 %v3087
        %v4112 = vcvt.s32.f32 %v3088
        %v4113 = vcvt.s32.f32 %v3089
        %v4114 = vcvt.s32.f32 %v3090
        %v4115 = vcvt.s32.f32 %v3091
        %v4116 = vcvt.s32.f32 %v3092
        %v4117 = vcvt.s32.f32 %v3093
        %v4118 = vcvt.s32.f32 %v3094
        %v4119 = vcvt.s32.f32 %v3095
        %v4120 = vcvt.s32.f32 %v3096
        %v4121 = vcvt.s32.f32 %v3097
        %v4122 = vcvt.s32.f32 %v3098
        %v4123 = vcvt.s32.f32 %v3099
        %v4124 = vcvt.s32.f32 %v3100
        %v4125 = vcvt.s32.f32 %v3101
        %v4126 = vcvt.s32.f32 %v3102
        %v4127 = vcvt.s32.f32 %v3103
        %v4128 = vcvt.s32.f32 %v3104
        %v4129 = vcvt.s32.f32 %v3105
        %v4130 = vcvt.s32.f32 %v3106
        %v4131 = vcvt.s32.f32 %v3107
        %v4132 = vcvt.s32.f32 %v3108
        %v4133 = vcvt.s32.f32 %v3109
        %v4134 = vcvt.s32.f32 %v3110
        %v4135 = vcvt.s32.f32 %v3111
        %v4136 = vcvt.s32.f32 %v3112
        %v4137 = vcvt.s32.f32 %v3113
        %v4138 = vcvt.s32.f32 %v3114
        %v4139 = vcvt.s32.f32 %v3115
        %v4140 = vcvt.s32.f32 %v3116
        %v4141 = vcvt.s32.f32 %v3117
        %v4142 = vcvt.s32.f32 %v3118
        %v4143 = vcvt.s32.f32 %v3119
        %v4144 = vcvt.s32.f32 %v3120
        %v4145 = vcvt.s32.f32 %v3121
        %v4146 = vcvt.s32.f32 %v3122
        %v4147 = vcvt.s32.f32 %v3123
        %v4148 = vcvt.s32.f32 %v3124
        %v4149 = vcvt.s32.f32 %v3125
        %v4150 = vcvt.s32.f32 %v3126
        %v4151 = vcvt.s32.f32 %v3127
        %v4152 = vcvt.s32.f32 %v3128
        %v4153 = vcvt.s32.f32 %v3129
        %v4154 = vcvt.s32.f32 %v3130
        %v4155 = vcvt.s32.f32 %v3131
        %v4156 = vcvt.s32.f32 %v3132
        %v4157 = vcvt.s32.f32 %v3133
        %v4158 = vcvt.s32.f32 %v3134
        %v4159 = vcvt.s32.f32 %v3135
        %v4160 = vcvt.s32.f32 %v3136
        %v4161 = vcvt.s32.f32 %v3137
        %v4162 = vcvt.s32.f32 %v3138
        %v4163 = vcvt.s32.f32 %v3139
        %v4164 = vcvt.s32.f32 %v3140
        %v4165 = vcvt.s32.f32 %v3141
        %v4166 = vcvt.s32.f32 %v3142
        %v4167 = vcvt.s32.f32 %v3143
        %v4168 = vcvt.s32.f32 %v3144
        %v4169 = vcvt.s32.f32 %v3145
        %v4170 = vcvt.s32.f32 %v3146
        %v4171 = vcvt.s32.f32 %v3147
        %v4172 = vcvt.s32.f32 %v3148
        %v4173 = vcvt.s32.f32 %v3149
        %v4174 = vcvt.s32.f32 %v3150
        %v4175 = vcvt.s32.f32 %v3151
        %v4176 = vcvt.s32.f32 %v3152
        %v4177 = vcvt.s32.f32 %v3153
        %v4178 = vcvt.s32.f32 %v3154
        %v4179 = vcvt.s32.f32 %v3155
        %v4180 = vcvt.s32.f32 %v3156
        %v4181 = vcvt.s32.f32 %v3157
        %v4182 = vcvt.s32.f32 %v3158
        %v4183 = vcvt.s32.f32 %v3159
        %v4184 = vcvt.s32.f32 %v3160
        %v4185 = vcvt.s32.f32 %v3161
        %v4186 = vcvt.s32.f32 %v3162
        %v4187 = vcvt.s32.f32 %v3163
        %v4188 = vcvt.s32.f32 %v3164
        %v4189 = vcvt.s32.f32 %v3165
        %v4190 = vcvt.s32.f32 %v3166
        %v4191 = vcvt.s32.f32 %v3167
        %v4192 = vcvt.s32.f32 %v3168
        %v4193 = vcvt.s32.f32 %v3169
        %v4194 = vcvt.s32.f32 %v3170
        %v4195 = vcvt.s32.f32 %v3171
        %v4196 = vcvt.s32.f32 %v3172
        %v4197 = vcvt.s32.f32 %v3173
        %v4198 = vcvt.s32.f32 %v3174
        %v4199 = vcvt.s32.f32 %v3175
        %v4200 = vcvt.s32.f32 %v3176
        %v4201 = vcvt.s32.f32 %v3177
        %v4202 = vcvt.s32.f32 %v3178
        %v4203 = vcvt.s32.f32 %v3179
        %v4204 = vcvt.s32.f32 %v3180
        %v4205 = vcvt.s32.f32 %v3181
        %v4206 = vcvt.s32.f32 %v3182
        %v4207 = vcvt.s32.f32 %v3183
        %v4208 = vcvt.s32.f32 %v3184
        %v4209 = vcvt.s32.f32 %v3185
        %v4210 = vcvt.s32.f32 %v3186
        %v4211 = vcvt.s32.f32 %v3187
        %v4212 = vcvt.s32.f32 %v3188
        %v4213 = vcvt.s32.f32 %v3189
        %v4214 = vcvt.s32.f32 %v3190
        %v4215 = vcvt.s32.f32 %v3191
        %v4216 = vcvt.s32.f32 %v3192
        %v4217 = vcvt.s32.f32 %v3193
        %v4218 = vcvt.s32.f32 %v3194
        %v4219 = vcvt.s32.f32 %v3195
        %v4220 = vcvt.s32.f32 %v3196
        %v4221 = vcvt.s32.f32 %v3197
        %v4222 = vcvt.s32.f32 %v3198
        %v4223 = vcvt.s32.f32 %v3199
        %v4224 = vcvt.s32.f32 %v3200
        %v4225 = vcvt.s32.f32 %v3201
        %v4226 = vcvt.s32.f32 %v3202
        %v4227 = vcvt.s32.f32 %v3203
        %v4228 = vcvt.s32.f32 %v3204
        %v4229 = vcvt.s32.f32 %v3205
        %v4230 = vcvt.s32.f32 %v3206
        %v4231 = vcvt.s32.f32 %v3207
        %v4232 = vcvt.s32.f32 %v3208
        %v4233 = vcvt.s32.f32 %v3209
        %v4234 = vcvt.s32.f32 %v3210
        %v4235 = vcvt.s32.f32 %v3211
        %v4236 = vcvt.s32.f32 %v3212
        %v4237 = vcvt.s32.f32 %v3213
        %v4238 = vcvt.s32.f32 %v3214
        %v4239 = vcvt.s32.f32 %v3215
        %v4240 = vcvt.s32.f32 %v3216
        %v4241 = vcvt.s32.f32 %v3217
        %v4242 = vcvt.s32.f32 %v3218
        %v4243 = vcvt.s32.f32 %v3219
        %v4244 = vcvt.s32.f32 %v3220
        %v4245 = vcvt.s32.f32 %v3221
        %v4246 = vcvt.s32.f32 %v3222
        %v4247 = vcvt.s32.f32 %v3223
        %v4248 = vcvt.s32.f32 %v3224
        %v4249 = vcvt.s32.f32 %v3225
        %v4250 = vcvt.s32.f32 %v3226
        %v4251 = vcvt.s32.f32 %v3227
        %v4252 = vcvt.s32.f32 %v3228
        %v4253 = vcvt.s32.f32 %v3229
        %v4254 = vcvt.s32.f32 %v3230
        %v4255 = vcvt.s32.f32 %v3231
        %v4256 = vcvt.s32.f32 %v3232
        %v4257 = vcvt.s32.f32 %v3233
        %v4258 = vcvt.s32.f32 %v3234
        %v4259 = vcvt.s32.f32 %v3235
        %v4260 = vcvt.s32.f32 %v3236
        %v4261 = vcvt.s32.f32 %v3237
        %v4262 = vcvt.s32.f32 %v3238
        %v4263 = vcvt.s32.f32 %v3239
        %v4264 = vcvt.s32.f32 %v3240
        %v4265 = vcvt.s32.f32 %v3241
        %v4266 = vcvt.s32.f32 %v3242
        %v4267 = vcvt.s32.f32 %v3243
        %v4268 = vcvt.s32.f32 %v3244
        %v4269 = vcvt.s32.f32 %v3245
        %v4270 = vcvt.s32.f32 %v3246
        %v4271 = vcvt.s32.f32 %v3247
        %v4272 = vcvt.s32.f32 %v3248
        %v4273 = vcvt.s32.f32 %v3249
        %v4274 = vcvt.s32.f32 %v3250
        %v4275 = vcvt.s32.f32 %v3251
        %v4276 = vcvt.s32.f32 %v3252
        %v4277 = vcvt.s32.f32 %v3253
        %v4278 = vcvt.s32.f32 %v3254
        %v4279 = vcvt.s32.f32 %v3255
        %v4280 = vcvt.s32.f32 %v3256
        %v4281 = vcvt.s32.f32 %v3257
        %v4282 = vcvt.s32.f32 %v3258
        %v4283 = vcvt.s32.f32 %v3259
        %v4284 = vcvt.s32.f32 %v3260
        %v4285 = vcvt.s32.f32 %v3261
        %v4286 = vcvt.s32.f32 %v3262
        %v4287 = vcvt.s32.f32 %v3263
        %v4288 = vcvt.s32.f32 %v3264
        %v4289 = vcvt.s32.f32 %v3265
        %v4290 = vcvt.s32.f32 %v3266
        %v4291 = vcvt.s32.f32 %v3267
        %v4292 = vcvt.s32.f32 %v3268
        %v4293 = vcvt.s32.f32 %v3269
        %v4294 = vcvt.s32.f32 %v3270
        %v4295 = vcvt.s32.f32 %v3271
        %v4296 = vcvt.s32.f32 %v3272
        %v4297 = vcvt.s32.f32 %v3273
        %v4298 = vcvt.s32.f32 %v3274
        %v4299 = vcvt.s32.f32 %v3275
        %v4300 = vcvt.s32.f32 %v3276
        %v4301 = vcvt.s32.f32 %v3277
        %v4302 = vcvt.s32.f32 %v3278
        %v4303 = vcvt.s32.f32 %v3279
        %v4304 = vcvt.s32.f32 %v3280
        %v4305 = vcvt.s32.f32 %v3281
        %v4306 = vcvt.s32.f32 %v3282
        %v4307 = vcvt.s32.f32 %v3283
        %v4308 = vcvt.s32.f32 %v3284
        %v4309 = vcvt.s32.f32 %v3285
        %v4310 = vcvt.s32.f32 %v3286
        %v4311 = vcvt.s32.f32 %v3287
        %v4312 = vcvt.s32.f32 %v3288
        %v4313 = vcvt.s32.f32 %v3289
        %v4314 = vcvt.s32.f32 %v3290
        %v4315 = vcvt.s32.f32 %v3291
        %v4316 = vcvt.s32.f32 %v3292
        %v4317 = vcvt.s32.f32 %v3293
        %v4318 = vcvt.s32.f32 %v3294
        %v4319 = vcvt.s32.f32 %v3295
        %v4320 = vcvt.s32.f32 %v3296
        %v4321 = vcvt.s32.f32 %v3297
        %v4322 = vcvt.s32.f32 %v3298
        %v4323 = vcvt.s32.f32 %v3299
        %v4324 = vcvt.s32.f32 %v3300
        %v4325 = vcvt.s32.f32 %v3301
        %v4326 = vcvt.s32.f32 %v3302
        %v4327 = vcvt.s32.f32 %v3303
        %v4328 = vcvt.s32.f32 %v3304
        %v4329 = vcvt.s32.f32 %v3305
        %v4330 = vcvt.s32.f32 %v3306
        %v4331 = vcvt.s32.f32 %v3307
        %v4332 = vcvt.s32.f32 %v3308
        %v4333 = vcvt.s32.f32 %v3309
        %v4334 = vcvt.s32.f32 %v3310
        %v4335 = vcvt.s32.f32 %v3311
        %v4336 = vcvt.s32.f32 %v3312
        %v4337 = vcvt.s32.f32 %v3313
        %v4338 = vcvt.s32.f32 %v3314
        %v4339 = vcvt.s32.f32 %v3315
        %v4340 = vcvt.s32.f32 %v3316
        %v4341 = vcvt.s32.f32 %v3317
        %v4342 = vcvt.s32.f32 %v3318
        %v4343 = vcvt.s32.f32 %v3319
        %v4344 = vcvt.s32.f32 %v3320
        %v4345 = vcvt.s32.f32 %v3321
        %v4346 = vcvt.s32.f32 %v3322
        %v4347 = vcvt.s32.f32 %v3323
        %v4348 = vcvt.s32.f32 %v3324
        %v4349 = vcvt.s32.f32 %v3325
        %v4350 = vcvt.s32.f32 %v3326
        %v4351 = vcvt.s32.f32 %v3327
        %v4352 = vcvt.s32.f32 %v3328
        %v4353 = vcvt.s32.f32 %v3329
        %v4354 = vcvt.s32.f32 %v3330
        %v4355 = vcvt.s32.f32 %v3331
        %v4356 = vcvt.s32.f32 %v3332
        %v4357 = vcvt.s32.f32 %v3333
        %v4358 = vcvt.s32.f32 %v3334
        %v4359 = vcvt.s32.f32 %v3335
        %v4360 = vcvt.s32.f32 %v3336
        %v4361 = vcvt.s32.f32 %v3337
        %v4362 = vcvt.s32.f32 %v3338
        %v4363 = vcvt.s32.f32 %v3339
        %v4364 = vcvt.s32.f32 %v3340
        %v4365 = vcvt.s32.f32 %v3341
        %v4366 = vcvt.s32.f32 %v3342
        %v4367 = vcvt.s32.f32 %v3343
        %v4368 = vcvt.s32.f32 %v3344
        %v4369 = vcvt.s32.f32 %v3345
        %v4370 = vcvt.s32.f32 %v3346
        %v4371 = vcvt.s32.f32 %v3347
        %v4372 = vcvt.s32.f32 %v3348
        %v4373 = vcvt.s32.f32 %v3349
        %v4374 = vcvt.s32.f32 %v3350
        %v4375 = vcvt.s32.f32 %v3351
        %v4376 = vcvt.s32.f32 %v3352
        %v4377 = vcvt.s32.f32 %v3353
        %v4378 = vcvt.s32.f32 %v3354
        %v4379 = vcvt.s32.f32 %v3355
        %v4380 = vcvt.s32.f32 %v3356
        %v4381 = vcvt.s32.f32 %v3357
        %v4382 = vcvt.s32.f32 %v3358
        %v4383 = vcvt.s32.f32 %v3359
        %v4384 = vcvt.s32.f32 %v3360
        %v4385 = vcvt.s32.f32 %v3361
        %v4386 = vcvt.s32.f32 %v3362
        %v4387 = vcvt.s32.f32 %v3363
        %v4388 = vcvt.s32.f32 %v3364
        %v4389 = vcvt.s32.f32 %v3365
        %v4390 = vcvt.s32.f32 %v3366
        %v4391 = vcvt.s32.f32 %v3367
        %v4392 = vcvt.s32.f32 %v3368
        %v4393 = vcvt.s32.f32 %v3369
        %v4394 = vcvt.s32.f32 %v3370
        %v4395 = vcvt.s32.f32 %v3371
        %v4396 = vcvt.s32.f32 %v3372
        %v4397 = vcvt.s32.f32 %v3373
        %v4398 = vcvt.s32.f32 %v3374
        %v4399 = vcvt.s32.f32 %v3375
        %v4400 = vcvt.s32.f32 %v3376
        %v4401 = vcvt.s32.f32 %v3377
        %v4402 = vcvt.s32.f32 %v3378
        %v4403 = vcvt.s32.f32 %v3379
        %v4404 = vcvt.s32.f32 %v3380
        %v4405 = vcvt.s32.f32 %v3381
        %v4406 = vcvt.s32.f32 %v3382
        %v4407 = vcvt.s32.f32 %v3383
        %v4408 = vcvt.s32.f32 %v3384
        %v4409 = vcvt.s32.f32 %v3385
        %v4410 = vcvt.s32.f32 %v3386
        %v4411 = vcvt.s32.f32 %v3387
        %v4412 = vcvt.s32.f32 %v3388
        %v4413 = vcvt.s32.f32 %v3389
        %v4414 = vcvt.s32.f32 %v3390
        %v4415 = vcvt.s32.f32 %v3391
        %v4416 = vcvt.s32.f32 %v3392
        %v4417 = vcvt.s32.f32 %v3393
        %v4418 = vcvt.s32.f32 %v3394
        %v4419 = vcvt.s32.f32 %v3395
        %v4420 = vcvt.s32.f32 %v3396
        %v4421 = vcvt.s32.f32 %v3397
        %v4422 = vcvt.s32.f32 %v3398
        %v4423 = vcvt.s32.f32 %v3399
        %v4424 = vcvt.s32.f32 %v3400
        %v4425 = vcvt.s32.f32 %v3401
        %v4426 = vcvt.s32.f32 %v3402
        %v4427 = vcvt.s32.f32 %v3403
        %v4428 = vcvt.s32.f32 %v3404
        %v4429 = vcvt.s32.f32 %v3405
        %v4430 = vcvt.s32.f32 %v3406
        %v4431 = vcvt.s32.f32 %v3407
        %v4432 = vcvt.s32.f32 %v3408
        %v4433 = vcvt.s32.f32 %v3409
        %v4434 = vcvt.s32.f32 %v3410
        %v4435 = vcvt.s32.f32 %v3411
        %v4436 = vcvt.s32.f32 %v3412
        %v4437 = vcvt.s32.f32 %v3413
        %v4438 = vcvt.s32.f32 %v3414
        %v4439 = vcvt.s32.f32 %v3415
        %v4440 = vcvt.s32.f32 %v3416
        %v4441 = vcvt.s32.f32 %v3417
        %v4442 = vcvt.s32.f32 %v3418
        %v4443 = vcvt.s32.f32 %v3419
        %v4444 = vcvt.s32.f32 %v3420
        %v4445 = vcvt.s32.f32 %v3421
        %v4446 = vcvt.s32.f32 %v3422
        %v4447 = vcvt.s32.f32 %v3423
        %v4448 = vcvt.s32.f32 %v3424
        %v4449 = vcvt.s32.f32 %v3425
        %v4450 = vcvt.s32.f32 %v3426
        %v4451 = vcvt.s32.f32 %v3427
        %v4452 = vcvt.s32.f32 %v3428
        %v4453 = vcvt.s32.f32 %v3429
        %v4454 = vcvt.s32.f32 %v3430
        %v4455 = vcvt.s32.f32 %v3431
        %v4456 = vcvt.s32.f32 %v3432
        %v4457 = vcvt.s32.f32 %v3433
        %v4458 = vcvt.s32.f32 %v3434
        %v4459 = vcvt.s32.f32 %v3435
        %v4460 = vcvt.s32.f32 %v3436
        %v4461 = vcvt.s32.f32 %v3437
        %v4462 = vcvt.s32.f32 %v3438
        %v4463 = vcvt.s32.f32 %v3439
        %v4464 = vcvt.s32.f32 %v3440
        %v4465 = vcvt.s32.f32 %v3441
        %v4466 = vcvt.s32.f32 %v3442
        %v4467 = vcvt.s32.f32 %v3443
        %v4468 = vcvt.s32.f32 %v3444
        %v4469 = vcvt.s32.f32 %v3445
        %v4470 = vcvt.s32.f32 %v3446
        %v4471 = vcvt.s32.f32 %v3447
        %v4472 = vcvt.s32.f32 %v3448
        %v4473 = vcvt.s32.f32 %v3449
        %v4474 = vcvt.s32.f32 %v3450
        %v4475 = vcvt.s32.f32 %v3451
        %v4476 = vcvt.s32.f32 %v3452
        %v4477 = vcvt.s32.f32 %v3453
        %v4478 = vcvt.s32.f32 %v3454
        %v4479 = vcvt.s32.f32 %v3455
        %v4480 = vcvt.s32.f32 %v3456
        %v4481 = vcvt.s32.f32 %v3457
        %v4482 = vcvt.s32.f32 %v3458
        %v4483 = vcvt.s32.f32 %v3459
        %v4484 = vcvt.s32.f32 %v3460
        %v4485 = vcvt.s32.f32 %v3461
        %v4486 = vcvt.s32.f32 %v3462
        %v4487 = vcvt.s32.f32 %v3463
        %v4488 = vcvt.s32.f32 %v3464
        %v4489 = vcvt.s32.f32 %v3465
        %v4490 = vcvt.s32.f32 %v3466
        %v4491 = vcvt.s32.f32 %v3467
        %v4492 = vcvt.s32.f32 %v3468
        %v4493 = vcvt.s32.f32 %v3469
        %v4494 = vcvt.s32.f32 %v3470
        %v4495 = vcvt.s32.f32 %v3471
        %v4496 = vcvt.s32.f32 %v3472
        %v4497 = vcvt.s32.f32 %v3473
        %v4498 = vcvt.s32.f32 %v3474
        %v4499 = vcvt.s32.f32 %v3475
        %v4500 = vcvt.s32.f32 %v3476
        %v4501 = vcvt.s32.f32 %v3477
        %v4502 = vcvt.s32.f32 %v3478
        %v4503 = vcvt.s32.f32 %v3479
        %v4504 = vcvt.s32.f32 %v3480
        %v4505 = vcvt.s32.f32 %v3481
        %v4506 = vcvt.s32.f32 %v3482
        %v4507 = vcvt.s32.f32 %v3483
        %v4508 = vcvt.s32.f32 %v3484
        %v4509 = vcvt.s32.f32 %v3485
        %v4510 = vcvt.s32.f32 %v3486
        %v4511 = vcvt.s32.f32 %v3487
        %v4512 = vcvt.s32.f32 %v3488
        %v4513 = vcvt.s32.f32 %v3489
        %v4514 = vcvt.s32.f32 %v3490
        %v4515 = vcvt.s32.f32 %v3491
        %v4516 = vcvt.s32.f32 %v3492
        %v4517 = vcvt.s32.f32 %v3493
        %v4518 = vcvt.s32.f32 %v3494
        %v4519 = vcvt.s32.f32 %v3495
        %v4520 = vcvt.s32.f32 %v3496
        %v4521 = vcvt.s32.f32 %v3497
        %v4522 = vcvt.s32.f32 %v3498
        %v4523 = vcvt.s32.f32 %v3499
        %v4524 = vcvt.s32.f32 %v3500
        %v4525 = vcvt.s32.f32 %v3501
        %v4526 = vcvt.s32.f32 %v3502
        %v4527 = vcvt.s32.f32 %v3503
        %v4528 = vcvt.s32.f32 %v3504
        %v4529 = vcvt.s32.f32 %v3505
        %v4530 = vcvt.s32.f32 %v3506
        %v4531 = vcvt.s32.f32 %v3507
        %v4532 = vcvt.s32.f32 %v3508
        %v4533 = vcvt.s32.f32 %v3509
        %v4534 = vcvt.s32.f32 %v3510
        %v4535 = vcvt.s32.f32 %v3511
        %v4536 = vcvt.s32.f32 %v3512
        %v4537 = vcvt.s32.f32 %v3513
        %v4538 = vcvt.s32.f32 %v3514
        %v4539 = vcvt.s32.f32 %v3515
        %v4540 = vcvt.s32.f32 %v3516
        %v4541 = vcvt.s32.f32 %v3517
        %v4542 = vcvt.s32.f32 %v3518
        %v4543 = vcvt.s32.f32 %v3519
        %v4544 = vcvt.s32.f32 %v3520
        %v4545 = vcvt.s32.f32 %v3521
        %v4546 = vcvt.s32.f32 %v3522
        %v4547 = vcvt.s32.f32 %v3523
        %v4548 = vcvt.s32.f32 %v3524
        %v4549 = vcvt.s32.f32 %v3525
        %v4550 = vcvt.s32.f32 %v3526
        %v4551 = vcvt.s32.f32 %v3527
        %v4552 = vcvt.s32.f32 %v3528
        %v4553 = vcvt.s32.f32 %v3529
        %v4554 = vcvt.s32.f32 %v3530
        %v4555 = vcvt.s32.f32 %v3531
        %v4556 = vcvt.s32.f32 %v3532
        %v4557 = vcvt.s32.f32 %v3533
        %v4558 = vcvt.s32.f32 %v3534
        %v4559 = vcvt.s32.f32 %v3535
        %v4560 = vcvt.s32.f32 %v3536
        %v4561 = vcvt.s32.f32 %v3537
        %v4562 = vcvt.s32.f32 %v3538
        %v4563 = vcvt.s32.f32 %v3539
        %v4564 = vcvt.s32.f32 %v3540
        %v4565 = vcvt.s32.f32 %v3541
        %v4566 = vcvt.s32.f32 %v3542
        %v4567 = vcvt.s32.f32 %v3543
        %v4568 = vcvt.s32.f32 %v3544
        %v4569 = vcvt.s32.f32 %v3545
        %v4570 = vcvt.s32.f32 %v3546
        %v4571 = vcvt.s32.f32 %v3547
        %v4572 = vcvt.s32.f32 %v3548
        %v4573 = vcvt.s32.f32 %v3549
        %v4574 = vcvt.s32.f32 %v3550
        %v4575 = vcvt.s32.f32 %v3551
        %v4576 = vcvt.s32.f32 %v3552
        %v4577 = vcvt.s32.f32 %v3553
        %v4578 = vcvt.s32.f32 %v3554
        %v4579 = vcvt.s32.f32 %v3555
        %v4580 = vcvt.s32.f32 %v3556
        %v4581 = vcvt.s32.f32 %v3557
        %v4582 = vcvt.s32.f32 %v3558
        %v4583 = vpack.c.bf16 %v3563, %v3559
        %v4584 = vpack.c.bf16 %v3564, %v3560
        %v4585 = vpack.c.bf16 %v3565, %v3561
        %v4586 = vpack.c.bf16 %v3566, %v3562
        %v4587 = vpack.c.bf16 %v3571, %v3567
        %v4588 = vpack.c.bf16 %v3572, %v3568
        %v4589 = vpack.c.bf16 %v3573, %v3569
        %v4590 = vpack.c.bf16 %v3574, %v3570
        %v4591 = vpack.c.bf16 %v3579, %v3575
        %v4592 = vpack.c.bf16 %v3580, %v3576
        %v4593 = vpack.c.bf16 %v3581, %v3577
        %v4594 = vpack.c.bf16 %v3582, %v3578
        %v4595 = vpack.c.bf16 %v3587, %v3583
        %v4596 = vpack.c.bf16 %v3588, %v3584
        %v4597 = vpack.c.bf16 %v3589, %v3585
        %v4598 = vpack.c.bf16 %v3590, %v3586
        %v4599 = vpack.c.bf16 %v3595, %v3591
        %v4600 = vpack.c.bf16 %v3596, %v3592
        %v4601 = vpack.c.bf16 %v3597, %v3593
        %v4602 = vpack.c.bf16 %v3598, %v3594
        %v4603 = vpack.c.bf16 %v3603, %v3599
        %v4604 = vpack.c.bf16 %v3604, %v3600
        %v4605 = vpack.c.bf16 %v3605, %v3601
        %v4606 = vpack.c.bf16 %v3606, %v3602
        %v4607 = vpack.c.bf16 %v3611, %v3607
        %v4608 = vpack.c.bf16 %v3612, %v3608
        %v4609 = vpack.c.bf16 %v3613, %v3609
        %v4610 = vpack.c.bf16 %v3614, %v3610
        %v4611 = vpack.c.bf16 %v3619, %v3615
        %v4612 = vpack.c.bf16 %v3620, %v3616
        %v4613 = vpack.c.bf16 %v3621, %v3617
        %v4614 = vpack.c.bf16 %v3622, %v3618
        %v4615 = vpack.c.bf16 %v3627, %v3623
        %v4616 = vpack.c.bf16 %v3628, %v3624
        %v4617 = vpack.c.bf16 %v3629, %v3625
        %v4618 = vpack.c.bf16 %v3630, %v3626
        %v4619 = vpack.c.bf16 %v3635, %v3631
        %v4620 = vpack.c.bf16 %v3636, %v3632
        %v4621 = vpack.c.bf16 %v3637, %v3633
        %v4622 = vpack.c.bf16 %v3638, %v3634
        %v4623 = vpack.c.bf16 %v3643, %v3639
        %v4624 = vpack.c.bf16 %v3644, %v3640
        %v4625 = vpack.c.bf16 %v3645, %v3641
        %v4626 = vpack.c.bf16 %v3646, %v3642
        %v4627 = vpack.c.bf16 %v3651, %v3647
        %v4628 = vpack.c.bf16 %v3652, %v3648
        %v4629 = vpack.c.bf16 %v3653, %v3649
        %v4630 = vpack.c.bf16 %v3654, %v3650
        %v4631 = vpack.c.bf16 %v3659, %v3655
        %v4632 = vpack.c.bf16 %v3660, %v3656
        %v4633 = vpack.c.bf16 %v3661, %v3657
        %v4634 = vpack.c.bf16 %v3662, %v3658
        %v4635 = vpack.c.bf16 %v3667, %v3663
        %v4636 = vpack.c.bf16 %v3668, %v3664
        %v4637 = vpack.c.bf16 %v3669, %v3665
        %v4638 = vpack.c.bf16 %v3670, %v3666
        %v4639 = vpack.c.bf16 %v3675, %v3671
        %v4640 = vpack.c.bf16 %v3676, %v3672
        %v4641 = vpack.c.bf16 %v3677, %v3673
        %v4642 = vpack.c.bf16 %v3678, %v3674
        %v4643 = vpack.c.bf16 %v3683, %v3679
        %v4644 = vpack.c.bf16 %v3684, %v3680
        %v4645 = vpack.c.bf16 %v3685, %v3681
        %v4646 = vpack.c.bf16 %v3686, %v3682
        %v4647 = vpack.c.bf16 %v3691, %v3687
        %v4648 = vpack.c.bf16 %v3692, %v3688
        %v4649 = vpack.c.bf16 %v3693, %v3689
        %v4650 = vpack.c.bf16 %v3694, %v3690
        %v4651 = vpack.c.bf16 %v3699, %v3695
        %v4652 = vpack.c.bf16 %v3700, %v3696
        %v4653 = vpack.c.bf16 %v3701, %v3697
        %v4654 = vpack.c.bf16 %v3702, %v3698
        %v4655 = vpack.c.bf16 %v3707, %v3703
        %v4656 = vpack.c.bf16 %v3708, %v3704
        %v4657 = vpack.c.bf16 %v3709, %v3705
        %v4658 = vpack.c.bf16 %v3710, %v3706
        %v4659 = vpack.c.bf16 %v3715, %v3711
        %v4660 = vpack.c.bf16 %v3716, %v3712
        %v4661 = vpack.c.bf16 %v3717, %v3713
        %v4662 = vpack.c.bf16 %v3718, %v3714
        %v4663 = vpack.c.bf16 %v3723, %v3719
        %v4664 = vpack.c.bf16 %v3724, %v3720
        %v4665 = vpack.c.bf16 %v3725, %v3721
        %v4666 = vpack.c.bf16 %v3726, %v3722
        %v4667 = vpack.c.bf16 %v3731, %v3727
        %v4668 = vpack.c.bf16 %v3732, %v3728
        %v4669 = vpack.c.bf16 %v3733, %v3729
        %v4670 = vpack.c.bf16 %v3734, %v3730
        %v4671 = vpack.c.bf16 %v3739, %v3735
        %v4672 = vpack.c.bf16 %v3740, %v3736
        %v4673 = vpack.c.bf16 %v3741, %v3737
        %v4674 = vpack.c.bf16 %v3742, %v3738
        %v4675 = vpack.c.bf16 %v3747, %v3743
        %v4676 = vpack.c.bf16 %v3748, %v3744
        %v4677 = vpack.c.bf16 %v3749, %v3745
        %v4678 = vpack.c.bf16 %v3750, %v3746
        %v4679 = vpack.c.bf16 %v3755, %v3751
        %v4680 = vpack.c.bf16 %v3756, %v3752
        %v4681 = vpack.c.bf16 %v3757, %v3753
        %v4682 = vpack.c.bf16 %v3758, %v3754
        %v4683 = vpack.c.bf16 %v3763, %v3759
        %v4684 = vpack.c.bf16 %v3764, %v3760
        %v4685 = vpack.c.bf16 %v3765, %v3761
        %v4686 = vpack.c.bf16 %v3766, %v3762
        %v4687 = vpack.c.bf16 %v3771, %v3767
        %v4688 = vpack.c.bf16 %v3772, %v3768
        %v4689 = vpack.c.bf16 %v3773, %v3769
        %v4690 = vpack.c.bf16 %v3774, %v3770
        %v4691 = vpack.c.bf16 %v3779, %v3775
        %v4692 = vpack.c.bf16 %v3780, %v3776
        %v4693 = vpack.c.bf16 %v3781, %v3777
        %v4694 = vpack.c.bf16 %v3782, %v3778
        %v4695 = vpack.c.bf16 %v3787, %v3783
        %v4696 = vpack.c.bf16 %v3788, %v3784
        %v4697 = vpack.c.bf16 %v3789, %v3785
        %v4698 = vpack.c.bf16 %v3790, %v3786
        %v4699 = vpack.c.bf16 %v3795, %v3791
        %v4700 = vpack.c.bf16 %v3796, %v3792
        %v4701 = vpack.c.bf16 %v3797, %v3793
        %v4702 = vpack.c.bf16 %v3798, %v3794
        %v4703 = vpack.c.bf16 %v3803, %v3799
        %v4704 = vpack.c.bf16 %v3804, %v3800
        %v4705 = vpack.c.bf16 %v3805, %v3801
        %v4706 = vpack.c.bf16 %v3806, %v3802
        %v4707 = vpack.c.bf16 %v3811, %v3807
        %v4708 = vpack.c.bf16 %v3812, %v3808
        %v4709 = vpack.c.bf16 %v3813, %v3809
        %v4710 = vpack.c.bf16 %v3814, %v3810
        %v4711 = vpack.c.bf16 %v3819, %v3815
        %v4712 = vpack.c.bf16 %v3820, %v3816
        %v4713 = vpack.c.bf16 %v3821, %v3817
        %v4714 = vpack.c.bf16 %v3822, %v3818
        %v4715 = vpack.c.bf16 %v3827, %v3823
        %v4716 = vpack.c.bf16 %v3828, %v3824
        %v4717 = vpack.c.bf16 %v3829, %v3825
        %v4718 = vpack.c.bf16 %v3830, %v3826
        %v4719 = vpack.c.bf16 %v3835, %v3831
        %v4720 = vpack.c.bf16 %v3836, %v3832
        %v4721 = vpack.c.bf16 %v3837, %v3833
        %v4722 = vpack.c.bf16 %v3838, %v3834
        %v4723 = vpack.c.bf16 %v3843, %v3839
        %v4724 = vpack.c.bf16 %v3844, %v3840
        %v4725 = vpack.c.bf16 %v3845, %v3841
        %v4726 = vpack.c.bf16 %v3846, %v3842
        %v4727 = vpack.c.bf16 %v3851, %v3847
        %v4728 = vpack.c.bf16 %v3852, %v3848
        %v4729 = vpack.c.bf16 %v3853, %v3849
        %v4730 = vpack.c.bf16 %v3854, %v3850
        %v4731 = vpack.c.bf16 %v3859, %v3855
        %v4732 = vpack.c.bf16 %v3860, %v3856
        %v4733 = vpack.c.bf16 %v3861, %v3857
        %v4734 = vpack.c.bf16 %v3862, %v3858
        %v4735 = vpack.c.bf16 %v3867, %v3863
        %v4736 = vpack.c.bf16 %v3868, %v3864
        %v4737 = vpack.c.bf16 %v3869, %v3865
        %v4738 = vpack.c.bf16 %v3870, %v3866
        %v4739 = vpack.c.bf16 %v3875, %v3871
        %v4740 = vpack.c.bf16 %v3876, %v3872
        %v4741 = vpack.c.bf16 %v3877, %v3873
        %v4742 = vpack.c.bf16 %v3878, %v3874
        %v4743 = vpack.c.bf16 %v3883, %v3879
        %v4744 = vpack.c.bf16 %v3884, %v3880
        %v4745 = vpack.c.bf16 %v3885, %v3881
        %v4746 = vpack.c.bf16 %v3886, %v3882
        %v4747 = vpack.c.bf16 %v3891, %v3887
        %v4748 = vpack.c.bf16 %v3892, %v3888
        %v4749 = vpack.c.bf16 %v3893, %v3889
        %v4750 = vpack.c.bf16 %v3894, %v3890
        %v4751 = vpack.c.bf16 %v3899, %v3895
        %v4752 = vpack.c.bf16 %v3900, %v3896
        %v4753 = vpack.c.bf16 %v3901, %v3897
        %v4754 = vpack.c.bf16 %v3902, %v3898
        %v4755 = vpack.c.bf16 %v3907, %v3903
        %v4756 = vpack.c.bf16 %v3908, %v3904
        %v4757 = vpack.c.bf16 %v3909, %v3905
        %v4758 = vpack.c.bf16 %v3910, %v3906
        %v4759 = vpack.c.bf16 %v3915, %v3911
        %v4760 = vpack.c.bf16 %v3916, %v3912
        %v4761 = vpack.c.bf16 %v3917, %v3913
        %v4762 = vpack.c.bf16 %v3918, %v3914
        %v4763 = vpack.c.bf16 %v3923, %v3919
        %v4764 = vpack.c.bf16 %v3924, %v3920
        %v4765 = vpack.c.bf16 %v3925, %v3921
        %v4766 = vpack.c.bf16 %v3926, %v3922
        %v4767 = vpack.c.bf16 %v3931, %v3927
        %v4768 = vpack.c.bf16 %v3932, %v3928
        %v4769 = vpack.c.bf16 %v3933, %v3929
        %v4770 = vpack.c.bf16 %v3934, %v3930
        %v4771 = vpack.c.bf16 %v3939, %v3935
        %v4772 = vpack.c.bf16 %v3940, %v3936
        %v4773 = vpack.c.bf16 %v3941, %v3937
        %v4774 = vpack.c.bf16 %v3942, %v3938
        %v4775 = vpack.c.bf16 %v3947, %v3943
        %v4776 = vpack.c.bf16 %v3948, %v3944
        %v4777 = vpack.c.bf16 %v3949, %v3945
        %v4778 = vpack.c.bf16 %v3950, %v3946
        %v4779 = vpack.c.bf16 %v3955, %v3951
        %v4780 = vpack.c.bf16 %v3956, %v3952
        %v4781 = vpack.c.bf16 %v3957, %v3953
        %v4782 = vpack.c.bf16 %v3958, %v3954
        %v4783 = vpack.c.bf16 %v3963, %v3959
        %v4784 = vpack.c.bf16 %v3964, %v3960
        %v4785 = vpack.c.bf16 %v3965, %v3961
        %v4786 = vpack.c.bf16 %v3966, %v3962
        %v4787 = vpack.c.bf16 %v3971, %v3967
        %v4788 = vpack.c.bf16 %v3972, %v3968
        %v4789 = vpack.c.bf16 %v3973, %v3969
        %v4790 = vpack.c.bf16 %v3974, %v3970
        %v4791 = vpack.c.bf16 %v3979, %v3975
        %v4792 = vpack.c.bf16 %v3980, %v3976
        %v4793 = vpack.c.bf16 %v3981, %v3977
        %v4794 = vpack.c.bf16 %v3982, %v3978
        %v4795 = vpack.c.bf16 %v3987, %v3983
        %v4796 = vpack.c.bf16 %v3988, %v3984
        %v4797 = vpack.c.bf16 %v3989, %v3985
        %v4798 = vpack.c.bf16 %v3990, %v3986
        %v4799 = vpack.c.bf16 %v3995, %v3991
        %v4800 = vpack.c.bf16 %v3996, %v3992
        %v4801 = vpack.c.bf16 %v3997, %v3993
        %v4802 = vpack.c.bf16 %v3998, %v3994
        %v4803 = vpack.c.bf16 %v4003, %v3999
        %v4804 = vpack.c.bf16 %v4004, %v4000
        %v4805 = vpack.c.bf16 %v4005, %v4001
        %v4806 = vpack.c.bf16 %v4006, %v4002
        %v4807 = vpack.c.bf16 %v4011, %v4007
        %v4808 = vpack.c.bf16 %v4012, %v4008
        %v4809 = vpack.c.bf16 %v4013, %v4009
        %v4810 = vpack.c.bf16 %v4014, %v4010
        %v4811 = vpack.c.bf16 %v4019, %v4015
        %v4812 = vpack.c.bf16 %v4020, %v4016
        %v4813 = vpack.c.bf16 %v4021, %v4017
        %v4814 = vpack.c.bf16 %v4022, %v4018
        %v4815 = vpack.c.bf16 %v4027, %v4023
        %v4816 = vpack.c.bf16 %v4028, %v4024
        %v4817 = vpack.c.bf16 %v4029, %v4025
        %v4818 = vpack.c.bf16 %v4030, %v4026
        %v4819 = vpack.c.bf16 %v4035, %v4031
        %v4820 = vpack.c.bf16 %v4036, %v4032
        %v4821 = vpack.c.bf16 %v4037, %v4033
        %v4822 = vpack.c.bf16 %v4038, %v4034
        %v4823 = vpack.c.bf16 %v4043, %v4039
        %v4824 = vpack.c.bf16 %v4044, %v4040
        %v4825 = vpack.c.bf16 %v4045, %v4041
        %v4826 = vpack.c.bf16 %v4046, %v4042
        %v4827 = vpack.c.bf16 %v4051, %v4047
        %v4828 = vpack.c.bf16 %v4052, %v4048
        %v4829 = vpack.c.bf16 %v4053, %v4049
        %v4830 = vpack.c.bf16 %v4054, %v4050
        %v4831 = vpack.c.bf16 %v4059, %v4055
        %v4832 = vpack.c.bf16 %v4060, %v4056
        %v4833 = vpack.c.bf16 %v4061, %v4057
        %v4834 = vpack.c.bf16 %v4062, %v4058
        %v4835 = vpack.c.bf16 %v4067, %v4063
        %v4836 = vpack.c.bf16 %v4068, %v4064
        %v4837 = vpack.c.bf16 %v4069, %v4065
        %v4838 = vpack.c.bf16 %v4070, %v4066
        %v4839 = vpack.c.bf16 %v4075, %v4071
        %v4840 = vpack.c.bf16 %v4076, %v4072
        %v4841 = vpack.c.bf16 %v4077, %v4073
        %v4842 = vpack.c.bf16 %v4078, %v4074
        %v4843 = vpack.c.bf16 %v4083, %v4079
        %v4844 = vpack.c.bf16 %v4084, %v4080
        %v4845 = vpack.c.bf16 %v4085, %v4081
        %v4846 = vpack.c.bf16 %v4086, %v4082
        %v4847 = vpack.c.bf16 %v4091, %v4087
        %v4848 = vpack.c.bf16 %v4092, %v4088
        %v4849 = vpack.c.bf16 %v4093, %v4089
        %v4850 = vpack.c.bf16 %v4094, %v4090
        %v4851 = vpack.c.bf16 %v4099, %v4095
        %v4852 = vpack.c.bf16 %v4100, %v4096
        %v4853 = vpack.c.bf16 %v4101, %v4097
        %v4854 = vpack.c.bf16 %v4102, %v4098
        %v4855 = vpack.c.bf16 %v4107, %v4103
        %v4856 = vpack.c.bf16 %v4108, %v4104
        %v4857 = vpack.c.bf16 %v4109, %v4105
        %v4858 = vpack.c.bf16 %v4110, %v4106
        %v4859 = vpack.c.bf16 %v4115, %v4111
        %v4860 = vpack.c.bf16 %v4116, %v4112
        %v4861 = vpack.c.bf16 %v4117, %v4113
        %v4862 = vpack.c.bf16 %v4118, %v4114
        %v4863 = vpack.c.bf16 %v4123, %v4119
        %v4864 = vpack.c.bf16 %v4124, %v4120
        %v4865 = vpack.c.bf16 %v4125, %v4121
        %v4866 = vpack.c.bf16 %v4126, %v4122
        %v4867 = vpack.c.bf16 %v4131, %v4127
        %v4868 = vpack.c.bf16 %v4132, %v4128
        %v4869 = vpack.c.bf16 %v4133, %v4129
        %v4870 = vpack.c.bf16 %v4134, %v4130
        %v4871 = vpack.c.bf16 %v4139, %v4135
        %v4872 = vpack.c.bf16 %v4140, %v4136
        %v4873 = vpack.c.bf16 %v4141, %v4137
        %v4874 = vpack.c.bf16 %v4142, %v4138
        %v4875 = vpack.c.bf16 %v4147, %v4143
        %v4876 = vpack.c.bf16 %v4148, %v4144
        %v4877 = vpack.c.bf16 %v4149, %v4145
        %v4878 = vpack.c.bf16 %v4150, %v4146
        %v4879 = vpack.c.bf16 %v4155, %v4151
        %v4880 = vpack.c.bf16 %v4156, %v4152
        %v4881 = vpack.c.bf16 %v4157, %v4153
        %v4882 = vpack.c.bf16 %v4158, %v4154
        %v4883 = vpack.c.bf16 %v4163, %v4159
        %v4884 = vpack.c.bf16 %v4164, %v4160
        %v4885 = vpack.c.bf16 %v4165, %v4161
        %v4886 = vpack.c.bf16 %v4166, %v4162
        %v4887 = vpack.c.bf16 %v4171, %v4167
        %v4888 = vpack.c.bf16 %v4172, %v4168
        %v4889 = vpack.c.bf16 %v4173, %v4169
        %v4890 = vpack.c.bf16 %v4174, %v4170
        %v4891 = vpack.c.bf16 %v4179, %v4175
        %v4892 = vpack.c.bf16 %v4180, %v4176
        %v4893 = vpack.c.bf16 %v4181, %v4177
        %v4894 = vpack.c.bf16 %v4182, %v4178
        %v4895 = vpack.c.bf16 %v4187, %v4183
        %v4896 = vpack.c.bf16 %v4188, %v4184
        %v4897 = vpack.c.bf16 %v4189, %v4185
        %v4898 = vpack.c.bf16 %v4190, %v4186
        %v4899 = vpack.c.bf16 %v4195, %v4191
        %v4900 = vpack.c.bf16 %v4196, %v4192
        %v4901 = vpack.c.bf16 %v4197, %v4193
        %v4902 = vpack.c.bf16 %v4198, %v4194
        %v4903 = vpack.c.bf16 %v4203, %v4199
        %v4904 = vpack.c.bf16 %v4204, %v4200
        %v4905 = vpack.c.bf16 %v4205, %v4201
        %v4906 = vpack.c.bf16 %v4206, %v4202
        %v4907 = vpack.c.bf16 %v4211, %v4207
        %v4908 = vpack.c.bf16 %v4212, %v4208
        %v4909 = vpack.c.bf16 %v4213, %v4209
        %v4910 = vpack.c.bf16 %v4214, %v4210
        %v4911 = vpack.c.bf16 %v4219, %v4215
        %v4912 = vpack.c.bf16 %v4220, %v4216
        %v4913 = vpack.c.bf16 %v4221, %v4217
        %v4914 = vpack.c.bf16 %v4222, %v4218
        %v4915 = vpack.c.bf16 %v4227, %v4223
        %v4916 = vpack.c.bf16 %v4228, %v4224
        %v4917 = vpack.c.bf16 %v4229, %v4225
        %v4918 = vpack.c.bf16 %v4230, %v4226
        %v4919 = vpack.c.bf16 %v4235, %v4231
        %v4920 = vpack.c.bf16 %v4236, %v4232
        %v4921 = vpack.c.bf16 %v4237, %v4233
        %v4922 = vpack.c.bf16 %v4238, %v4234
        %v4923 = vpack.c.bf16 %v4243, %v4239
        %v4924 = vpack.c.bf16 %v4244, %v4240
        %v4925 = vpack.c.bf16 %v4245, %v4241
        %v4926 = vpack.c.bf16 %v4246, %v4242
        %v4927 = vpack.c.bf16 %v4251, %v4247
        %v4928 = vpack.c.bf16 %v4252, %v4248
        %v4929 = vpack.c.bf16 %v4253, %v4249
        %v4930 = vpack.c.bf16 %v4254, %v4250
        %v4931 = vpack.c.bf16 %v4259, %v4255
        %v4932 = vpack.c.bf16 %v4260, %v4256
        %v4933 = vpack.c.bf16 %v4261, %v4257
        %v4934 = vpack.c.bf16 %v4262, %v4258
        %v4935 = vpack.c.bf16 %v4267, %v4263
        %v4936 = vpack.c.bf16 %v4268, %v4264
        %v4937 = vpack.c.bf16 %v4269, %v4265
        %v4938 = vpack.c.bf16 %v4270, %v4266
        %v4939 = vpack.c.bf16 %v4275, %v4271
        %v4940 = vpack.c.bf16 %v4276, %v4272
        %v4941 = vpack.c.bf16 %v4277, %v4273
        %v4942 = vpack.c.bf16 %v4278, %v4274
        %v4943 = vpack.c.bf16 %v4283, %v4279
        %v4944 = vpack.c.bf16 %v4284, %v4280
        %v4945 = vpack.c.bf16 %v4285, %v4281
        %v4946 = vpack.c.bf16 %v4286, %v4282
        %v4947 = vpack.c.bf16 %v4291, %v4287
        %v4948 = vpack.c.bf16 %v4292, %v4288
        %v4949 = vpack.c.bf16 %v4293, %v4289
        %v4950 = vpack.c.bf16 %v4294, %v4290
        %v4951 = vpack.c.bf16 %v4299, %v4295
        %v4952 = vpack.c.bf16 %v4300, %v4296
        %v4953 = vpack.c.bf16 %v4301, %v4297
        %v4954 = vpack.c.bf16 %v4302, %v4298
        %v4955 = vpack.c.bf16 %v4307, %v4303
        %v4956 = vpack.c.bf16 %v4308, %v4304
        %v4957 = vpack.c.bf16 %v4309, %v4305
        %v4958 = vpack.c.bf16 %v4310, %v4306
        %v4959 = vpack.c.bf16 %v4315, %v4311
        %v4960 = vpack.c.bf16 %v4316, %v4312
        %v4961 = vpack.c.bf16 %v4317, %v4313
        %v4962 = vpack.c.bf16 %v4318, %v4314
        %v4963 = vpack.c.bf16 %v4323, %v4319
        %v4964 = vpack.c.bf16 %v4324, %v4320
        %v4965 = vpack.c.bf16 %v4325, %v4321
        %v4966 = vpack.c.bf16 %v4326, %v4322
        %v4967 = vpack.c.bf16 %v4331, %v4327
        %v4968 = vpack.c.bf16 %v4332, %v4328
        %v4969 = vpack.c.bf16 %v4333, %v4329
        %v4970 = vpack.c.bf16 %v4334, %v4330
        %v4971 = vpack.c.bf16 %v4339, %v4335
        %v4972 = vpack.c.bf16 %v4340, %v4336
        %v4973 = vpack.c.bf16 %v4341, %v4337
        %v4974 = vpack.c.bf16 %v4342, %v4338
        %v4975 = vpack.c.bf16 %v4347, %v4343
        %v4976 = vpack.c.bf16 %v4348, %v4344
        %v4977 = vpack.c.bf16 %v4349, %v4345
        %v4978 = vpack.c.bf16 %v4350, %v4346
        %v4979 = vpack.c.bf16 %v4355, %v4351
        %v4980 = vpack.c.bf16 %v4356, %v4352
        %v4981 = vpack.c.bf16 %v4357, %v4353
        %v4982 = vpack.c.bf16 %v4358, %v4354
        %v4983 = vpack.c.bf16 %v4363, %v4359
        %v4984 = vpack.c.bf16 %v4364, %v4360
        %v4985 = vpack.c.bf16 %v4365, %v4361
        %v4986 = vpack.c.bf16 %v4366, %v4362
        %v4987 = vpack.c.bf16 %v4371, %v4367
        %v4988 = vpack.c.bf16 %v4372, %v4368
        %v4989 = vpack.c.bf16 %v4373, %v4369
        %v4990 = vpack.c.bf16 %v4374, %v4370
        %v4991 = vpack.c.bf16 %v4379, %v4375
        %v4992 = vpack.c.bf16 %v4380, %v4376
        %v4993 = vpack.c.bf16 %v4381, %v4377
        %v4994 = vpack.c.bf16 %v4382, %v4378
        %v4995 = vpack.c.bf16 %v4387, %v4383
        %v4996 = vpack.c.bf16 %v4388, %v4384
        %v4997 = vpack.c.bf16 %v4389, %v4385
        %v4998 = vpack.c.bf16 %v4390, %v4386
        %v4999 = vpack.c.bf16 %v4395, %v4391
        %v5000 = vpack.c.bf16 %v4396, %v4392
        %v5001 = vpack.c.bf16 %v4397, %v4393
        %v5002 = vpack.c.bf16 %v4398, %v4394
        %v5003 = vpack.c.bf16 %v4403, %v4399
        %v5004 = vpack.c.bf16 %v4404, %v4400
        %v5005 = vpack.c.bf16 %v4405, %v4401
        %v5006 = vpack.c.bf16 %v4406, %v4402
        %v5007 = vpack.c.bf16 %v4411, %v4407
        %v5008 = vpack.c.bf16 %v4412, %v4408
        %v5009 = vpack.c.bf16 %v4413, %v4409
        %v5010 = vpack.c.bf16 %v4414, %v4410
        %v5011 = vpack.c.bf16 %v4419, %v4415
        %v5012 = vpack.c.bf16 %v4420, %v4416
        %v5013 = vpack.c.bf16 %v4421, %v4417
        %v5014 = vpack.c.bf16 %v4422, %v4418
        %v5015 = vpack.c.bf16 %v4427, %v4423
        %v5016 = vpack.c.bf16 %v4428, %v4424
        %v5017 = vpack.c.bf16 %v4429, %v4425
        %v5018 = vpack.c.bf16 %v4430, %v4426
        %v5019 = vpack.c.bf16 %v4435, %v4431
        %v5020 = vpack.c.bf16 %v4436, %v4432
        %v5021 = vpack.c.bf16 %v4437, %v4433
        %v5022 = vpack.c.bf16 %v4438, %v4434
        %v5023 = vpack.c.bf16 %v4443, %v4439
        %v5024 = vpack.c.bf16 %v4444, %v4440
        %v5025 = vpack.c.bf16 %v4445, %v4441
        %v5026 = vpack.c.bf16 %v4446, %v4442
        %v5027 = vpack.c.bf16 %v4451, %v4447
        %v5028 = vpack.c.bf16 %v4452, %v4448
        %v5029 = vpack.c.bf16 %v4453, %v4449
        %v5030 = vpack.c.bf16 %v4454, %v4450
        %v5031 = vpack.c.bf16 %v4459, %v4455
        %v5032 = vpack.c.bf16 %v4460, %v4456
        %v5033 = vpack.c.bf16 %v4461, %v4457
        %v5034 = vpack.c.bf16 %v4462, %v4458
        %v5035 = vpack.c.bf16 %v4467, %v4463
        %v5036 = vpack.c.bf16 %v4468, %v4464
        %v5037 = vpack.c.bf16 %v4469, %v4465
        %v5038 = vpack.c.bf16 %v4470, %v4466
        %v5039 = vpack.c.bf16 %v4475, %v4471
        %v5040 = vpack.c.bf16 %v4476, %v4472
        %v5041 = vpack.c.bf16 %v4477, %v4473
        %v5042 = vpack.c.bf16 %v4478, %v4474
        %v5043 = vpack.c.bf16 %v4483, %v4479
        %v5044 = vpack.c.bf16 %v4484, %v4480
        %v5045 = vpack.c.bf16 %v4485, %v4481
        %v5046 = vpack.c.bf16 %v4486, %v4482
        %v5047 = vpack.c.bf16 %v4491, %v4487
        %v5048 = vpack.c.bf16 %v4492, %v4488
        %v5049 = vpack.c.bf16 %v4493, %v4489
        %v5050 = vpack.c.bf16 %v4494, %v4490
        %v5051 = vpack.c.bf16 %v4499, %v4495
        %v5052 = vpack.c.bf16 %v4500, %v4496
        %v5053 = vpack.c.bf16 %v4501, %v4497
        %v5054 = vpack.c.bf16 %v4502, %v4498
        %v5055 = vpack.c.bf16 %v4507, %v4503
        %v5056 = vpack.c.bf16 %v4508, %v4504
        %v5057 = vpack.c.bf16 %v4509, %v4505
        %v5058 = vpack.c.bf16 %v4510, %v4506
        %v5059 = vpack.c.bf16 %v4515, %v4511
        %v5060 = vpack.c.bf16 %v4516, %v4512
        %v5061 = vpack.c.bf16 %v4517, %v4513
        %v5062 = vpack.c.bf16 %v4518, %v4514
        %v5063 = vpack.c.bf16 %v4523, %v4519
        %v5064 = vpack.c.bf16 %v4524, %v4520
        %v5065 = vpack.c.bf16 %v4525, %v4521
        %v5066 = vpack.c.bf16 %v4526, %v4522
        %v5067 = vpack.c.bf16 %v4531, %v4527
        %v5068 = vpack.c.bf16 %v4532, %v4528
        %v5069 = vpack.c.bf16 %v4533, %v4529
        %v5070 = vpack.c.bf16 %v4534, %v4530
        %v5071 = vpack.c.bf16 %v4539, %v4535
        %v5072 = vpack.c.bf16 %v4540, %v4536
        %v5073 = vpack.c.bf16 %v4541, %v4537
        %v5074 = vpack.c.bf16 %v4542, %v4538
        %v5075 = vpack.c.bf16 %v4547, %v4543
        %v5076 = vpack.c.bf16 %v4548, %v4544
        %v5077 = vpack.c.bf16 %v4549, %v4545
        %v5078 = vpack.c.bf16 %v4550, %v4546
        %v5079 = vpack.c.bf16 %v4555, %v4551
        %v5080 = vpack.c.bf16 %v4556, %v4552
        %v5081 = vpack.c.bf16 %v4557, %v4553
        %v5082 = vpack.c.bf16 %v4558, %v4554
        %v5083 = vpack.c.bf16 %v4563, %v4559
        %v5084 = vpack.c.bf16 %v4564, %v4560
        %v5085 = vpack.c.bf16 %v4565, %v4561
        %v5086 = vpack.c.bf16 %v4566, %v4562
        %v5087 = vpack.c.bf16 %v4571, %v4567
        %v5088 = vpack.c.bf16 %v4572, %v4568
        %v5089 = vpack.c.bf16 %v4573, %v4569
        %v5090 = vpack.c.bf16 %v4574, %v4570
        %v5091 = vpack.c.bf16 %v4579, %v4575
        %v5092 = vpack.c.bf16 %v4580, %v4576
        %v5093 = vpack.c.bf16 %v4581, %v4577
        %v5094 = vpack.c.bf16 %v4582, %v4578
        %v5095 = vld [vmem:[#allocation7] sm:$0xff]
        %v5096 = vld [vmem:[#allocation7 + $0x8] sm:$0xff]
        %v5097 = vld [vmem:[#allocation7 + $0x10] sm:$0xff]
        %v5098 = vld [vmem:[#allocation7 + $0x18] sm:$0xff]
        %v5099 = vld [vmem:[#allocation7 + $0x20] sm:$0xff]
        %v5100 = vld [vmem:[#allocation7 + $0x28] sm:$0xff]
        %v5101 = vld [vmem:[#allocation7 + $0x30] sm:$0xff]
        %v5102 = vld [vmem:[#allocation7 + $0x38] sm:$0xff]
        %v5111 = vunpack.c.l.b16 %v5095
        %v5112 = vunpack.c.h.b16 %v5095
        %v5113 = vunpack.c.l.b16 %v5096
        %v5114 = vunpack.c.h.b16 %v5096
        %v5115 = vunpack.c.l.b16 %v5097
        %v5116 = vunpack.c.h.b16 %v5097
        %v5117 = vunpack.c.l.b16 %v5098
        %v5118 = vunpack.c.h.b16 %v5098
        %v5119 = vunpack.c.l.b16 %v5099
        %v5120 = vunpack.c.h.b16 %v5099
        %v5121 = vunpack.c.l.b16 %v5100
        %v5122 = vunpack.c.h.b16 %v5100
        %v5123 = vunpack.c.l.b16 %v5101
        %v5124 = vunpack.c.h.b16 %v5101
        %v5125 = vunpack.c.l.b16 %v5102
        %v5126 = vunpack.c.h.b16 %v5102
        %v5127 = vpack.c.b16 %v5111, %v5111
        %v5128 = vpack.c.b16 %v5112, %v5112
        %v5129 = vpack.c.b16 %v5113, %v5113
        %v5130 = vpack.c.b16 %v5114, %v5114
        %v5131 = vpack.c.b16 %v5115, %v5115
        %v5132 = vpack.c.b16 %v5116, %v5116
        %v5133 = vpack.c.b16 %v5117, %v5117
        %v5134 = vpack.c.b16 %v5118, %v5118
        %v5135 = vpack.c.b16 %v5119, %v5119
        %v5136 = vpack.c.b16 %v5120, %v5120
        %v5137 = vpack.c.b16 %v5121, %v5121
        %v5138 = vpack.c.b16 %v5122, %v5122
        %v5139 = vpack.c.b16 %v5123, %v5123
        %v5140 = vpack.c.b16 %v5124, %v5124
        %v5141 = vpack.c.b16 %v5125, %v5125
        %v5142 = vpack.c.b16 %v5126, %v5126
        %5159 = vmatprep.subr.bf16.mxu0 %v4584
        %5160 = vmatpush1.bf16.msra.mxu0 %v4583
        %5161 = vmatprep.subr.bf16.mxu0 %v4588
        %5162 = vmatpush1.bf16.msra.mxu0 %v4587
        %5163 = vmatprep.subr.bf16.mxu0 %v4592
        %5164 = vmatpush1.bf16.msra.mxu0 %v4591
        %5165 = vmatprep.subr.bf16.mxu0 %v4596
        %5166 = vmatpush1.bf16.msra.mxu0 %v4595
        %5167 = vmatprep.subr.bf16.mxu0 %v4600
        %5168 = vmatpush1.bf16.msra.mxu0 %v4599
        %5169 = vmatprep.subr.bf16.mxu0 %v4604
        %5170 = vmatpush1.bf16.msra.mxu0 %v4603
        %5171 = vmatprep.subr.bf16.mxu0 %v4608
        %5172 = vmatpush1.bf16.msra.mxu0 %v4607
        %5173 = vmatprep.subr.bf16.mxu0 %v4612
        %5174 = vmatpush1.bf16.msra.mxu0 %v4611
        %5175 = vmatprep.subr.bf16.mxu0 %v4616
        %5176 = vmatpush1.bf16.msra.mxu0 %v4615
        %5177 = vmatprep.subr.bf16.mxu0 %v4620
        %5178 = vmatpush1.bf16.msra.mxu0 %v4619
        %5179 = vmatprep.subr.bf16.mxu0 %v4624
        %5180 = vmatpush1.bf16.msra.mxu0 %v4623
        %5181 = vmatprep.subr.bf16.mxu0 %v4628
        %5182 = vmatpush1.bf16.msra.mxu0 %v4627
        %5183 = vmatprep.subr.bf16.mxu0 %v4632
        %5184 = vmatpush1.bf16.msra.mxu0 %v4631
        %5185 = vmatprep.subr.bf16.mxu0 %v4636
        %5186 = vmatpush1.bf16.msra.mxu0 %v4635
        %5187 = vmatprep.subr.bf16.mxu0 %v4640
        %5188 = vmatpush1.bf16.msra.mxu0 %v4639
        %5189 = vmatprep.subr.bf16.mxu0 %v4644
        %5190 = vmatpush1.bf16.msra.mxu0 %v4643
        %5191 = vmatprep.mubr.bf16.mxu0 %v5128
        %5192 = vmatmul.mubr.bf16.gmra.mrb[0].mxu0 %v5127
        %v5193 = vpop.f32.mrb[0].mxu0
        %v5194 = vadd.f32 0.0, %v5193
        %v5195 = vpop.f32.mrb[0].mxu0
        %v5196 = vadd.f32 0.0, %v5195
        %v5197 = vpop.f32.mrb[0].mxu0
        %v5198 = vpop.f32.mrb[0].mxu0
        %5199 = vdwg.mxu0
        %5200 = vmatprep.subr.bf16.mxu0 %v4648
        %5201 = vmatpush1.bf16.msra.mxu0 %v4647
        %5202 = vmatprep.subr.bf16.mxu0 %v4652
        %5203 = vmatpush1.bf16.msra.mxu0 %v4651
        %5204 = vmatprep.subr.bf16.mxu0 %v4656
        %5205 = vmatpush1.bf16.msra.mxu0 %v4655
        %5206 = vmatprep.subr.bf16.mxu0 %v4660
        %5207 = vmatpush1.bf16.msra.mxu0 %v4659
        %5208 = vmatprep.subr.bf16.mxu0 %v4664
        %5209 = vmatpush1.bf16.msra.mxu0 %v4663
        %5210 = vmatprep.subr.bf16.mxu0 %v4668
        %5211 = vmatpush1.bf16.msra.mxu0 %v4667
        %5212 = vmatprep.subr.bf16.mxu0 %v4672
        %5213 = vmatpush1.bf16.msra.mxu0 %v4671
        %5214 = vmatprep.subr.bf16.mxu0 %v4676
        %5215 = vmatpush1.bf16.msra.mxu0 %v4675
        %5216 = vmatprep.subr.bf16.mxu0 %v4680
        %5217 = vmatpush1.bf16.msra.mxu0 %v4679
        %5218 = vmatprep.subr.bf16.mxu0 %v4684
        %5219 = vmatpush1.bf16.msra.mxu0 %v4683
        %5220 = vmatprep.subr.bf16.mxu0 %v4688
        %5221 = vmatpush1.bf16.msra.mxu0 %v4687
        %5222 = vmatprep.subr.bf16.mxu0 %v4692
        %5223 = vmatpush1.bf16.msra.mxu0 %v4691
        %5224 = vmatprep.subr.bf16.mxu0 %v4696
        %5225 = vmatpush1.bf16.msra.mxu0 %v4695
        %5226 = vmatprep.subr.bf16.mxu0 %v4700
        %5227 = vmatpush1.bf16.msra.mxu0 %v4699
        %5228 = vmatprep.subr.bf16.mxu0 %v4704
        %5229 = vmatpush1.bf16.msra.mxu0 %v4703
        %5230 = vmatprep.subr.bf16.mxu0 %v4708
        %5231 = vmatpush1.bf16.msra.mxu0 %v4707
        %5232 = vmatprep.mubr.bf16.mxu0 %v5130
        %5233 = vmatmul.mubr.bf16.gmra.mrb[0].mxu0 %v5129
        %v5234 = vpop.f32.mrb[0].mxu0
        %v5235 = vadd.f32 %v5194, %v5234
        %v5236 = vpop.f32.mrb[0].mxu0
        %v5237 = vadd.f32 %v5196, %v5236
        %v5238 = vpop.f32.mrb[0].mxu0
        %v5239 = vpop.f32.mrb[0].mxu0
        %5240 = vdwg.mxu0
        %5241 = vmatprep.subr.bf16.mxu0 %v4712
        %5242 = vmatpush1.bf16.msra.mxu0 %v4711
        %5243 = vmatprep.subr.bf16.mxu0 %v4716
        %5244 = vmatpush1.bf16.msra.mxu0 %v4715
        %5245 = vmatprep.subr.bf16.mxu0 %v4720
        %5246 = vmatpush1.bf16.msra.mxu0 %v4719
        %5247 = vmatprep.subr.bf16.mxu0 %v4724
        %5248 = vmatpush1.bf16.msra.mxu0 %v4723
        %5249 = vmatprep.subr.bf16.mxu0 %v4728
        %5250 = vmatpush1.bf16.msra.mxu0 %v4727
        %5251 = vmatprep.subr.bf16.mxu0 %v4732
        %5252 = vmatpush1.bf16.msra.mxu0 %v4731
        %5253 = vmatprep.subr.bf16.mxu0 %v4736
        %5254 = vmatpush1.bf16.msra.mxu0 %v4735
        %5255 = vmatprep.subr.bf16.mxu0 %v4740
        %5256 = vmatpush1.bf16.msra.mxu0 %v4739
        %5257 = vmatprep.subr.bf16.mxu0 %v4744
        %5258 = vmatpush1.bf16.msra.mxu0 %v4743
        %5259 = vmatprep.subr.bf16.mxu0 %v4748
        %5260 = vmatpush1.bf16.msra.mxu0 %v4747
        %5261 = vmatprep.subr.bf16.mxu0 %v4752
        %5262 = vmatpush1.bf16.msra.mxu0 %v4751
        %5263 = vmatprep.subr.bf16.mxu0 %v4756
        %5264 = vmatpush1.bf16.msra.mxu0 %v4755
        %5265 = vmatprep.subr.bf16.mxu0 %v4760
        %5266 = vmatpush1.bf16.msra.mxu0 %v4759
        %5267 = vmatprep.subr.bf16.mxu0 %v4764
        %5268 = vmatpush1.bf16.msra.mxu0 %v4763
        %5269 = vmatprep.subr.bf16.mxu0 %v4768
        %5270 = vmatpush1.bf16.msra.mxu0 %v4767
        %5271 = vmatprep.subr.bf16.mxu0 %v4772
        %5272 = vmatpush1.bf16.msra.mxu0 %v4771
        %5273 = vmatprep.mubr.bf16.mxu0 %v5132
        %5274 = vmatmul.mubr.bf16.gmra.mrb[0].mxu0 %v5131
        %v5275 = vpop.f32.mrb[0].mxu0
        %v5276 = vadd.f32 %v5235, %v5275
        %v5277 = vpop.f32.mrb[0].mxu0
        %v5278 = vadd.f32 %v5237, %v5277
        %v5279 = vpop.f32.mrb[0].mxu0
        %v5280 = vpop.f32.mrb[0].mxu0
        %5281 = vdwg.mxu0
        %5282 = vmatprep.subr.bf16.mxu0 %v4776
        %5283 = vmatpush1.bf16.msra.mxu0 %v4775
        %5284 = vmatprep.subr.bf16.mxu0 %v4780
        %5285 = vmatpush1.bf16.msra.mxu0 %v4779
        %5286 = vmatprep.subr.bf16.mxu0 %v4784
        %5287 = vmatpush1.bf16.msra.mxu0 %v4783
        %5288 = vmatprep.subr.bf16.mxu0 %v4788
        %5289 = vmatpush1.bf16.msra.mxu0 %v4787
        %5290 = vmatprep.subr.bf16.mxu0 %v4792
        %5291 = vmatpush1.bf16.msra.mxu0 %v4791
        %5292 = vmatprep.subr.bf16.mxu0 %v4796
        %5293 = vmatpush1.bf16.msra.mxu0 %v4795
        %5294 = vmatprep.subr.bf16.mxu0 %v4800
        %5295 = vmatpush1.bf16.msra.mxu0 %v4799
        %5296 = vmatprep.subr.bf16.mxu0 %v4804
        %5297 = vmatpush1.bf16.msra.mxu0 %v4803
        %5298 = vmatprep.subr.bf16.mxu0 %v4808
        %5299 = vmatpush1.bf16.msra.mxu0 %v4807
        %5300 = vmatprep.subr.bf16.mxu0 %v4812
        %5301 = vmatpush1.bf16.msra.mxu0 %v4811
        %5302 = vmatprep.subr.bf16.mxu0 %v4816
        %5303 = vmatpush1.bf16.msra.mxu0 %v4815
        %5304 = vmatprep.subr.bf16.mxu0 %v4820
        %5305 = vmatpush1.bf16.msra.mxu0 %v4819
        %5306 = vmatprep.subr.bf16.mxu0 %v4824
        %5307 = vmatpush1.bf16.msra.mxu0 %v4823
        %5308 = vmatprep.subr.bf16.mxu0 %v4828
        %5309 = vmatpush1.bf16.msra.mxu0 %v4827
        %5310 = vmatprep.subr.bf16.mxu0 %v4832
        %5311 = vmatpush1.bf16.msra.mxu0 %v4831
        %5312 = vmatprep.subr.bf16.mxu0 %v4836
        %5313 = vmatpush1.bf16.msra.mxu0 %v4835
        %5314 = vmatprep.mubr.bf16.mxu0 %v5134
        %5315 = vmatmul.mubr.bf16.gmra.mrb[0].mxu0 %v5133
        %v5316 = vpop.f32.mrb[0].mxu0
        %v5317 = vadd.f32 %v5276, %v5316
        %v5318 = vpop.f32.mrb[0].mxu0
        %v5319 = vadd.f32 %v5278, %v5318
        %v5320 = vpop.f32.mrb[0].mxu0
        %v5321 = vpop.f32.mrb[0].mxu0
        %5322 = vdwg.mxu0
        %5323 = vmatprep.subr.bf16.mxu0 %v4840
        %5324 = vmatpush1.bf16.msra.mxu0 %v4839
        %5325 = vmatprep.subr.bf16.mxu0 %v4844
        %5326 = vmatpush1.bf16.msra.mxu0 %v4843
        %5327 = vmatprep.subr.bf16.mxu0 %v4848
        %5328 = vmatpush1.bf16.msra.mxu0 %v4847
        %5329 = vmatprep.subr.bf16.mxu0 %v4852
        %5330 = vmatpush1.bf16.msra.mxu0 %v4851
        %5331 = vmatprep.subr.bf16.mxu0 %v4856
        %5332 = vmatpush1.bf16.msra.mxu0 %v4855
        %5333 = vmatprep.subr.bf16.mxu0 %v4860
        %5334 = vmatpush1.bf16.msra.mxu0 %v4859
        %5335 = vmatprep.subr.bf16.mxu0 %v4864
        %5336 = vmatpush1.bf16.msra.mxu0 %v4863
        %5337 = vmatprep.subr.bf16.mxu0 %v4868
        %5338 = vmatpush1.bf16.msra.mxu0 %v4867
        %5339 = vmatprep.subr.bf16.mxu0 %v4872
        %5340 = vmatpush1.bf16.msra.mxu0 %v4871
        %5341 = vmatprep.subr.bf16.mxu0 %v4876
        %5342 = vmatpush1.bf16.msra.mxu0 %v4875
        %5343 = vmatprep.subr.bf16.mxu0 %v4880
        %5344 = vmatpush1.bf16.msra.mxu0 %v4879
        %5345 = vmatprep.subr.bf16.mxu0 %v4884
        %5346 = vmatpush1.bf16.msra.mxu0 %v4883
        %5347 = vmatprep.subr.bf16.mxu0 %v4888
        %5348 = vmatpush1.bf16.msra.mxu0 %v4887
        %5349 = vmatprep.subr.bf16.mxu0 %v4892
        %5350 = vmatpush1.bf16.msra.mxu0 %v4891
        %5351 = vmatprep.subr.bf16.mxu0 %v4896
        %5352 = vmatpush1.bf16.msra.mxu0 %v4895
        %5353 = vmatprep.subr.bf16.mxu0 %v4900
        %5354 = vmatpush1.bf16.msra.mxu0 %v4899
        %5355 = vmatprep.mubr.bf16.mxu0 %v5136
        %5356 = vmatmul.mubr.bf16.gmra.mrb[0].mxu0 %v5135
        %v5357 = vpop.f32.mrb[0].mxu0
        %v5358 = vadd.f32 %v5317, %v5357
        %v5359 = vpop.f32.mrb[0].mxu0
        %v5360 = vadd.f32 %v5319, %v5359
        %v5361 = vpop.f32.mrb[0].mxu0
        %v5362 = vpop.f32.mrb[0].mxu0
        %5363 = vdwg.mxu0
        %5364 = vmatprep.subr.bf16.mxu0 %v4904
        %5365 = vmatpush1.bf16.msra.mxu0 %v4903
        %5366 = vmatprep.subr.bf16.mxu0 %v4908
        %5367 = vmatpush1.bf16.msra.mxu0 %v4907
        %5368 = vmatprep.subr.bf16.mxu0 %v4912
        %5369 = vmatpush1.bf16.msra.mxu0 %v4911
        %5370 = vmatprep.subr.bf16.mxu0 %v4916
        %5371 = vmatpush1.bf16.msra.mxu0 %v4915
        %5372 = vmatprep.subr.bf16.mxu0 %v4920
        %5373 = vmatpush1.bf16.msra.mxu0 %v4919
        %5374 = vmatprep.subr.bf16.mxu0 %v4924
        %5375 = vmatpush1.bf16.msra.mxu0 %v4923
        %5376 = vmatprep.subr.bf16.mxu0 %v4928
        %5377 = vmatpush1.bf16.msra.mxu0 %v4927
        %5378 = vmatprep.subr.bf16.mxu0 %v4932
        %5379 = vmatpush1.bf16.msra.mxu0 %v4931
        %5380 = vmatprep.subr.bf16.mxu0 %v4936
        %5381 = vmatpush1.bf16.msra.mxu0 %v4935
        %5382 = vmatprep.subr.bf16.mxu0 %v4940
        %5383 = vmatpush1.bf16.msra.mxu0 %v4939
        %5384 = vmatprep.subr.bf16.mxu0 %v4944
        %5385 = vmatpush1.bf16.msra.mxu0 %v4943
        %5386 = vmatprep.subr.bf16.mxu0 %v4948
        %5387 = vmatpush1.bf16.msra.mxu0 %v4947
        %5388 = vmatprep.subr.bf16.mxu0 %v4952
        %5389 = vmatpush1.bf16.msra.mxu0 %v4951
        %5390 = vmatprep.subr.bf16.mxu0 %v4956
        %5391 = vmatpush1.bf16.msra.mxu0 %v4955
        %5392 = vmatprep.subr.bf16.mxu0 %v4960
        %5393 = vmatpush1.bf16.msra.mxu0 %v4959
        %5394 = vmatprep.subr.bf16.mxu0 %v4964
        %5395 = vmatpush1.bf16.msra.mxu0 %v4963
        %5396 = vmatprep.mubr.bf16.mxu0 %v5138
        %5397 = vmatmul.mubr.bf16.gmra.mrb[0].mxu0 %v5137
        %v5398 = vpop.f32.mrb[0].mxu0
        %v5399 = vadd.f32 %v5358, %v5398
        %v5400 = vpop.f32.mrb[0].mxu0
        %v5401 = vadd.f32 %v5360, %v5400
        %v5402 = vpop.f32.mrb[0].mxu0
        %v5403 = vpop.f32.mrb[0].mxu0
        %5404 = vdwg.mxu0
        %5405 = vmatprep.subr.bf16.mxu0 %v4968
        %5406 = vmatpush1.bf16.msra.mxu0 %v4967
        %5407 = vmatprep.subr.bf16.mxu0 %v4972
        %5408 = vmatpush1.bf16.msra.mxu0 %v4971
        %5409 = vmatprep.subr.bf16.mxu0 %v4976
        %5410 = vmatpush1.bf16.msra.mxu0 %v4975
        %5411 = vmatprep.subr.bf16.mxu0 %v4980
        %5412 = vmatpush1.bf16.msra.mxu0 %v4979
        %5413 = vmatprep.subr.bf16.mxu0 %v4984
        %5414 = vmatpush1.bf16.msra.mxu0 %v4983
        %5415 = vmatprep.subr.bf16.mxu0 %v4988
        %5416 = vmatpush1.bf16.msra.mxu0 %v4987
        %5417 = vmatprep.subr.bf16.mxu0 %v4992
        %5418 = vmatpush1.bf16.msra.mxu0 %v4991
        %5419 = vmatprep.subr.bf16.mxu0 %v4996
        %5420 = vmatpush1.bf16.msra.mxu0 %v4995
        %5421 = vmatprep.subr.bf16.mxu0 %v5000
        %5422 = vmatpush1.bf16.msra.mxu0 %v4999
        %5423 = vmatprep.subr.bf16.mxu0 %v5004
        %5424 = vmatpush1.bf16.msra.mxu0 %v5003
        %5425 = vmatprep.subr.bf16.mxu0 %v5008
        %5426 = vmatpush1.bf16.msra.mxu0 %v5007
        %5427 = vmatprep.subr.bf16.mxu0 %v5012
        %5428 = vmatpush1.bf16.msra.mxu0 %v5011
        %5429 = vmatprep.subr.bf16.mxu0 %v5016
        %5430 = vmatpush1.bf16.msra.mxu0 %v5015
        %5431 = vmatprep.subr.bf16.mxu0 %v5020
        %5432 = vmatpush1.bf16.msra.mxu0 %v5019
        %5433 = vmatprep.subr.bf16.mxu0 %v5024
        %5434 = vmatpush1.bf16.msra.mxu0 %v5023
        %5435 = vmatprep.subr.bf16.mxu0 %v5028
        %5436 = vmatpush1.bf16.msra.mxu0 %v5027
        %5437 = vmatprep.mubr.bf16.mxu0 %v5140
        %5438 = vmatmul.mubr.bf16.gmra.mrb[0].mxu0 %v5139
        %v5439 = vpop.f32.mrb[0].mxu0
        %v5440 = vadd.f32 %v5399, %v5439
        %v5441 = vpop.f32.mrb[0].mxu0
        %v5442 = vadd.f32 %v5401, %v5441
        %v5443 = vpop.f32.mrb[0].mxu0
        %v5444 = vpop.f32.mrb[0].mxu0
        %5445 = vdwg.mxu0
        %5446 = vmatprep.subr.bf16.mxu0 %v5032
        %5447 = vmatpush1.bf16.msra.mxu0 %v5031
        %5448 = vmatprep.subr.bf16.mxu0 %v5036
        %5449 = vmatpush1.bf16.msra.mxu0 %v5035
        %5450 = vmatprep.subr.bf16.mxu0 %v5040
        %5451 = vmatpush1.bf16.msra.mxu0 %v5039
        %5452 = vmatprep.subr.bf16.mxu0 %v5044
        %5453 = vmatpush1.bf16.msra.mxu0 %v5043
        %5454 = vmatprep.subr.bf16.mxu0 %v5048
        %5455 = vmatpush1.bf16.msra.mxu0 %v5047
        %5456 = vmatprep.subr.bf16.mxu0 %v5052
        %5457 = vmatpush1.bf16.msra.mxu0 %v5051
        %5458 = vmatprep.subr.bf16.mxu0 %v5056
        %5459 = vmatpush1.bf16.msra.mxu0 %v5055
        %5460 = vmatprep.subr.bf16.mxu0 %v5060
        %5461 = vmatpush1.bf16.msra.mxu0 %v5059
        %5462 = vmatprep.subr.bf16.mxu0 %v5064
        %5463 = vmatpush1.bf16.msra.mxu0 %v5063
        %5464 = vmatprep.subr.bf16.mxu0 %v5068
        %5465 = vmatpush1.bf16.msra.mxu0 %v5067
        %5466 = vmatprep.subr.bf16.mxu0 %v5072
        %5467 = vmatpush1.bf16.msra.mxu0 %v5071
        %5468 = vmatprep.subr.bf16.mxu0 %v5076
        %5469 = vmatpush1.bf16.msra.mxu0 %v5075
        %5470 = vmatprep.subr.bf16.mxu0 %v5080
        %5471 = vmatpush1.bf16.msra.mxu0 %v5079
        %5472 = vmatprep.subr.bf16.mxu0 %v5084
        %5473 = vmatpush1.bf16.msra.mxu0 %v5083
        %5474 = vmatprep.subr.bf16.mxu0 %v5088
        %5475 = vmatpush1.bf16.msra.mxu0 %v5087
        %5476 = vmatprep.subr.bf16.mxu0 %v5092
        %5477 = vmatpush1.bf16.msra.mxu0 %v5091
        %5478 = vmatprep.mubr.bf16.mxu0 %v5142
        %5479 = vmatmul.mubr.bf16.gmra.mrb[0].mxu0 %v5141
        %v5480 = vpop.f32.mrb[0].mxu0
        %v5481 = vadd.f32 %v5440, %v5480
        %v5482 = vpop.f32.mrb[0].mxu0
        %v5483 = vadd.f32 %v5442, %v5482
        %v5484 = vpop.f32.mrb[0].mxu0
        %v5485 = vpop.f32.mrb[0].mxu0
        %5486 = vdwg.mxu0
        %5487 = vmatprep.subr.bf16.mxu0 %v4586
        %5488 = vmatpush1.bf16.msra.mxu0 %v4585
        %5489 = vmatprep.subr.bf16.mxu0 %v4590
        %5490 = vmatpush1.bf16.msra.mxu0 %v4589
        %5491 = vmatprep.subr.bf16.mxu0 %v4594
        %5492 = vmatpush1.bf16.msra.mxu0 %v4593
        %5493 = vmatprep.subr.bf16.mxu0 %v4598
        %5494 = vmatpush1.bf16.msra.mxu0 %v4597
        %5495 = vmatprep.subr.bf16.mxu0 %v4602
        %5496 = vmatpush1.bf16.msra.mxu0 %v4601
        %5497 = vmatprep.subr.bf16.mxu0 %v4606
        %5498 = vmatpush1.bf16.msra.mxu0 %v4605
        %5499 = vmatprep.subr.bf16.mxu0 %v4610
        %5500 = vmatpush1.bf16.msra.mxu0 %v4609
        %5501 = vmatprep.subr.bf16.mxu0 %v4614
        %5502 = vmatpush1.bf16.msra.mxu0 %v4613
        %5503 = vmatprep.subr.bf16.mxu0 %v4618
        %5504 = vmatpush1.bf16.msra.mxu0 %v4617
        %5505 = vmatprep.subr.bf16.mxu0 %v4622
        %5506 = vmatpush1.bf16.msra.mxu0 %v4621
        %5507 = vmatprep.subr.bf16.mxu0 %v4626
        %5508 = vmatpush1.bf16.msra.mxu0 %v4625
        %5509 = vmatprep.subr.bf16.mxu0 %v4630
        %5510 = vmatpush1.bf16.msra.mxu0 %v4629
        %5511 = vmatprep.subr.bf16.mxu0 %v4634
        %5512 = vmatpush1.bf16.msra.mxu0 %v4633
        %5513 = vmatprep.subr.bf16.mxu0 %v4638
        %5514 = vmatpush1.bf16.msra.mxu0 %v4637
        %5515 = vmatprep.subr.bf16.mxu0 %v4642
        %5516 = vmatpush1.bf16.msra.mxu0 %v4641
        %5517 = vmatprep.subr.bf16.mxu0 %v4646
        %5518 = vmatpush1.bf16.msra.mxu0 %v4645
        %5519 = vmatprep.mubr.bf16.mxu0 %v5128
        %5520 = vmatmul.mubr.bf16.gmra.mrb[0].mxu0 %v5127
        %v5521 = vpop.f32.mrb[0].mxu0
        %v5522 = vadd.f32 0.0, %v5521
        %v5523 = vpop.f32.mrb[0].mxu0
        %v5524 = vadd.f32 0.0, %v5523
        %v5525 = vpop.f32.mrb[0].mxu0
        %v5526 = vpop.f32.mrb[0].mxu0
        %5527 = vdwg.mxu0
        %5528 = vmatprep.subr.bf16.mxu0 %v4650
        %5529 = vmatpush1.bf16.msra.mxu0 %v4649
        %5530 = vmatprep.subr.bf16.mxu0 %v4654
        %5531 = vmatpush1.bf16.msra.mxu0 %v4653
        %5532 = vmatprep.subr.bf16.mxu0 %v4658
        %5533 = vmatpush1.bf16.msra.mxu0 %v4657
        %5534 = vmatprep.subr.bf16.mxu0 %v4662
        %5535 = vmatpush1.bf16.msra.mxu0 %v4661
        %5536 = vmatprep.subr.bf16.mxu0 %v4666
        %5537 = vmatpush1.bf16.msra.mxu0 %v4665
        %5538 = vmatprep.subr.bf16.mxu0 %v4670
        %5539 = vmatpush1.bf16.msra.mxu0 %v4669
        %5540 = vmatprep.subr.bf16.mxu0 %v4674
        %5541 = vmatpush1.bf16.msra.mxu0 %v4673
        %5542 = vmatprep.subr.bf16.mxu0 %v4678
        %5543 = vmatpush1.bf16.msra.mxu0 %v4677
        %5544 = vmatprep.subr.bf16.mxu0 %v4682
        %5545 = vmatpush1.bf16.msra.mxu0 %v4681
        %5546 = vmatprep.subr.bf16.mxu0 %v4686
        %5547 = vmatpush1.bf16.msra.mxu0 %v4685
        %5548 = vmatprep.subr.bf16.mxu0 %v4690
        %5549 = vmatpush1.bf16.msra.mxu0 %v4689
        %5550 = vmatprep.subr.bf16.mxu0 %v4694
        %5551 = vmatpush1.bf16.msra.mxu0 %v4693
        %5552 = vmatprep.subr.bf16.mxu0 %v4698
        %5553 = vmatpush1.bf16.msra.mxu0 %v4697
        %5554 = vmatprep.subr.bf16.mxu0 %v4702
        %5555 = vmatpush1.bf16.msra.mxu0 %v4701
        %5556 = vmatprep.subr.bf16.mxu0 %v4706
        %5557 = vmatpush1.bf16.msra.mxu0 %v4705
        %5558 = vmatprep.subr.bf16.mxu0 %v4710
        %5559 = vmatpush1.bf16.msra.mxu0 %v4709
        %5560 = vmatprep.mubr.bf16.mxu0 %v5130
        %5561 = vmatmul.mubr.bf16.gmra.mrb[0].mxu0 %v5129
        %v5562 = vpop.f32.mrb[0].mxu0
        %v5563 = vadd.f32 %v5522, %v5562
        %v5564 = vpop.f32.mrb[0].mxu0
        %v5565 = vadd.f32 %v5524, %v5564
        %v5566 = vpop.f32.mrb[0].mxu0
        %v5567 = vpop.f32.mrb[0].mxu0
        %5568 = vdwg.mxu0
        %5569 = vmatprep.subr.bf16.mxu0 %v4714
        %5570 = vmatpush1.bf16.msra.mxu0 %v4713
        %5571 = vmatprep.subr.bf16.mxu0 %v4718
        %5572 = vmatpush1.bf16.msra.mxu0 %v4717
        %5573 = vmatprep.subr.bf16.mxu0 %v4722
        %5574 = vmatpush1.bf16.msra.mxu0 %v4721
        %5575 = vmatprep.subr.bf16.mxu0 %v4726
        %5576 = vmatpush1.bf16.msra.mxu0 %v4725
        %5577 = vmatprep.subr.bf16.mxu0 %v4730
        %5578 = vmatpush1.bf16.msra.mxu0 %v4729
        %5579 = vmatprep.subr.bf16.mxu0 %v4734
        %5580 = vmatpush1.bf16.msra.mxu0 %v4733
        %5581 = vmatprep.subr.bf16.mxu0 %v4738
        %5582 = vmatpush1.bf16.msra.mxu0 %v4737
        %5583 = vmatprep.subr.bf16.mxu0 %v4742
        %5584 = vmatpush1.bf16.msra.mxu0 %v4741
        %5585 = vmatprep.subr.bf16.mxu0 %v4746
        %5586 = vmatpush1.bf16.msra.mxu0 %v4745
        %5587 = vmatprep.subr.bf16.mxu0 %v4750
        %5588 = vmatpush1.bf16.msra.mxu0 %v4749
        %5589 = vmatprep.subr.bf16.mxu0 %v4754
        %5590 = vmatpush1.bf16.msra.mxu0 %v4753
        %5591 = vmatprep.subr.bf16.mxu0 %v4758
        %5592 = vmatpush1.bf16.msra.mxu0 %v4757
        %5593 = vmatprep.subr.bf16.mxu0 %v4762
        %5594 = vmatpush1.bf16.msra.mxu0 %v4761
        %5595 = vmatprep.subr.bf16.mxu0 %v4766
        %5596 = vmatpush1.bf16.msra.mxu0 %v4765
        %5597 = vmatprep.subr.bf16.mxu0 %v4770
        %5598 = vmatpush1.bf16.msra.mxu0 %v4769
        %5599 = vmatprep.subr.bf16.mxu0 %v4774
        %5600 = vmatpush1.bf16.msra.mxu0 %v4773
        %5601 = vmatprep.mubr.bf16.mxu0 %v5132
        %5602 = vmatmul.mubr.bf16.gmra.mrb[0].mxu0 %v5131
        %v5603 = vpop.f32.mrb[0].mxu0
        %v5604 = vadd.f32 %v5563, %v5603
        %v5605 = vpop.f32.mrb[0].mxu0
        %v5606 = vadd.f32 %v5565, %v5605
        %v5607 = vpop.f32.mrb[0].mxu0
        %v5608 = vpop.f32.mrb[0].mxu0
        %5609 = vdwg.mxu0
        %5610 = vmatprep.subr.bf16.mxu0 %v4778
        %5611 = vmatpush1.bf16.msra.mxu0 %v4777
        %5612 = vmatprep.subr.bf16.mxu0 %v4782
        %5613 = vmatpush1.bf16.msra.mxu0 %v4781
        %5614 = vmatprep.subr.bf16.mxu0 %v4786
        %5615 = vmatpush1.bf16.msra.mxu0 %v4785
        %5616 = vmatprep.subr.bf16.mxu0 %v4790
        %5617 = vmatpush1.bf16.msra.mxu0 %v4789
        %5618 = vmatprep.subr.bf16.mxu0 %v4794
        %5619 = vmatpush1.bf16.msra.mxu0 %v4793
        %5620 = vmatprep.subr.bf16.mxu0 %v4798
        %5621 = vmatpush1.bf16.msra.mxu0 %v4797
        %5622 = vmatprep.subr.bf16.mxu0 %v4802
        %5623 = vmatpush1.bf16.msra.mxu0 %v4801
        %5624 = vmatprep.subr.bf16.mxu0 %v4806
        %5625 = vmatpush1.bf16.msra.mxu0 %v4805
        %5626 = vmatprep.subr.bf16.mxu0 %v4810
        %5627 = vmatpush1.bf16.msra.mxu0 %v4809
        %5628 = vmatprep.subr.bf16.mxu0 %v4814
        %5629 = vmatpush1.bf16.msra.mxu0 %v4813
        %5630 = vmatprep.subr.bf16.mxu0 %v4818
        %5631 = vmatpush1.bf16.msra.mxu0 %v4817
        %5632 = vmatprep.subr.bf16.mxu0 %v4822
        %5633 = vmatpush1.bf16.msra.mxu0 %v4821
        %5634 = vmatprep.subr.bf16.mxu0 %v4826
        %5635 = vmatpush1.bf16.msra.mxu0 %v4825
        %5636 = vmatprep.subr.bf16.mxu0 %v4830
        %5637 = vmatpush1.bf16.msra.mxu0 %v4829
        %5638 = vmatprep.subr.bf16.mxu0 %v4834
        %5639 = vmatpush1.bf16.msra.mxu0 %v4833
        %5640 = vmatprep.subr.bf16.mxu0 %v4838
        %5641 = vmatpush1.bf16.msra.mxu0 %v4837
        %5642 = vmatprep.mubr.bf16.mxu0 %v5134
        %5643 = vmatmul.mubr.bf16.gmra.mrb[0].mxu0 %v5133
        %v5644 = vpop.f32.mrb[0].mxu0
        %v5645 = vadd.f32 %v5604, %v5644
        %v5646 = vpop.f32.mrb[0].mxu0
        %v5647 = vadd.f32 %v5606, %v5646
        %v5648 = vpop.f32.mrb[0].mxu0
        %v5649 = vpop.f32.mrb[0].mxu0
        %5650 = vdwg.mxu0
        %5651 = vmatprep.subr.bf16.mxu0 %v4842
        %5652 = vmatpush1.bf16.msra.mxu0 %v4841
        %5653 = vmatprep.subr.bf16.mxu0 %v4846
        %5654 = vmatpush1.bf16.msra.mxu0 %v4845
        %5655 = vmatprep.subr.bf16.mxu0 %v4850
        %5656 = vmatpush1.bf16.msra.mxu0 %v4849
        %5657 = vmatprep.subr.bf16.mxu0 %v4854
        %5658 = vmatpush1.bf16.msra.mxu0 %v4853
        %5659 = vmatprep.subr.bf16.mxu0 %v4858
        %5660 = vmatpush1.bf16.msra.mxu0 %v4857
        %5661 = vmatprep.subr.bf16.mxu0 %v4862
        %5662 = vmatpush1.bf16.msra.mxu0 %v4861
        %5663 = vmatprep.subr.bf16.mxu0 %v4866
        %5664 = vmatpush1.bf16.msra.mxu0 %v4865
        %5665 = vmatprep.subr.bf16.mxu0 %v4870
        %5666 = vmatpush1.bf16.msra.mxu0 %v4869
        %5667 = vmatprep.subr.bf16.mxu0 %v4874
        %5668 = vmatpush1.bf16.msra.mxu0 %v4873
        %5669 = vmatprep.subr.bf16.mxu0 %v4878
        %5670 = vmatpush1.bf16.msra.mxu0 %v4877
        %5671 = vmatprep.subr.bf16.mxu0 %v4882
        %5672 = vmatpush1.bf16.msra.mxu0 %v4881
        %5673 = vmatprep.subr.bf16.mxu0 %v4886
        %5674 = vmatpush1.bf16.msra.mxu0 %v4885
        %5675 = vmatprep.subr.bf16.mxu0 %v4890
        %5676 = vmatpush1.bf16.msra.mxu0 %v4889
        %5677 = vmatprep.subr.bf16.mxu0 %v4894
        %5678 = vmatpush1.bf16.msra.mxu0 %v4893
        %5679 = vmatprep.subr.bf16.mxu0 %v4898
        %5680 = vmatpush1.bf16.msra.mxu0 %v4897
        %5681 = vmatprep.subr.bf16.mxu0 %v4902
        %5682 = vmatpush1.bf16.msra.mxu0 %v4901
        %5683 = vmatprep.mubr.bf16.mxu0 %v5136
        %5684 = vmatmul.mubr.bf16.gmra.mrb[0].mxu0 %v5135
        %v5685 = vpop.f32.mrb[0].mxu0
        %v5686 = vadd.f32 %v5645, %v5685
        %v5687 = vpop.f32.mrb[0].mxu0
        %v5688 = vadd.f32 %v5647, %v5687
        %v5689 = vpop.f32.mrb[0].mxu0
        %v5690 = vpop.f32.mrb[0].mxu0
        %5691 = vdwg.mxu0
        %5692 = vmatprep.subr.bf16.mxu0 %v4906
        %5693 = vmatpush1.bf16.msra.mxu0 %v4905
        %5694 = vmatprep.subr.bf16.mxu0 %v4910
        %5695 = vmatpush1.bf16.msra.mxu0 %v4909
        %5696 = vmatprep.subr.bf16.mxu0 %v4914
        %5697 = vmatpush1.bf16.msra.mxu0 %v4913
        %5698 = vmatprep.subr.bf16.mxu0 %v4918
        %5699 = vmatpush1.bf16.msra.mxu0 %v4917
        %5700 = vmatprep.subr.bf16.mxu0 %v4922
        %5701 = vmatpush1.bf16.msra.mxu0 %v4921
        %5702 = vmatprep.subr.bf16.mxu0 %v4926
        %5703 = vmatpush1.bf16.msra.mxu0 %v4925
        %5704 = vmatprep.subr.bf16.mxu0 %v4930
        %5705 = vmatpush1.bf16.msra.mxu0 %v4929
        %5706 = vmatprep.subr.bf16.mxu0 %v4934
        %5707 = vmatpush1.bf16.msra.mxu0 %v4933
        %5708 = vmatprep.subr.bf16.mxu0 %v4938
        %5709 = vmatpush1.bf16.msra.mxu0 %v4937
        %5710 = vmatprep.subr.bf16.mxu0 %v4942
        %5711 = vmatpush1.bf16.msra.mxu0 %v4941
        %5712 = vmatprep.subr.bf16.mxu0 %v4946
        %5713 = vmatpush1.bf16.msra.mxu0 %v4945
        %5714 = vmatprep.subr.bf16.mxu0 %v4950
        %5715 = vmatpush1.bf16.msra.mxu0 %v4949
        %5716 = vmatprep.subr.bf16.mxu0 %v4954
        %5717 = vmatpush1.bf16.msra.mxu0 %v4953
        %5718 = vmatprep.subr.bf16.mxu0 %v4958
        %5719 = vmatpush1.bf16.msra.mxu0 %v4957
        %5720 = vmatprep.subr.bf16.mxu0 %v4962
        %5721 = vmatpush1.bf16.msra.mxu0 %v4961
        %5722 = vmatprep.subr.bf16.mxu0 %v4966
        %5723 = vmatpush1.bf16.msra.mxu0 %v4965
        %5724 = vmatprep.mubr.bf16.mxu0 %v5138
        %5725 = vmatmul.mubr.bf16.gmra.mrb[0].mxu0 %v5137
        %v5726 = vpop.f32.mrb[0].mxu0
        %v5727 = vadd.f32 %v5686, %v5726
        %v5728 = vpop.f32.mrb[0].mxu0
        %v5729 = vadd.f32 %v5688, %v5728
        %v5730 = vpop.f32.mrb[0].mxu0
        %v5731 = vpop.f32.mrb[0].mxu0
        %5732 = vdwg.mxu0
        %5733 = vmatprep.subr.bf16.mxu0 %v4970
        %5734 = vmatpush1.bf16.msra.mxu0 %v4969
        %5735 = vmatprep.subr.bf16.mxu0 %v4974
        %5736 = vmatpush1.bf16.msra.mxu0 %v4973
        %5737 = vmatprep.subr.bf16.mxu0 %v4978
        %5738 = vmatpush1.bf16.msra.mxu0 %v4977
        %5739 = vmatprep.subr.bf16.mxu0 %v4982
        %5740 = vmatpush1.bf16.msra.mxu0 %v4981
        %5741 = vmatprep.subr.bf16.mxu0 %v4986
        %5742 = vmatpush1.bf16.msra.mxu0 %v4985
        %5743 = vmatprep.subr.bf16.mxu0 %v4990
        %5744 = vmatpush1.bf16.msra.mxu0 %v4989
        %5745 = vmatprep.subr.bf16.mxu0 %v4994
        %5746 = vmatpush1.bf16.msra.mxu0 %v4993
        %5747 = vmatprep.subr.bf16.mxu0 %v4998
        %5748 = vmatpush1.bf16.msra.mxu0 %v4997
        %5749 = vmatprep.subr.bf16.mxu0 %v5002
        %5750 = vmatpush1.bf16.msra.mxu0 %v5001
        %5751 = vmatprep.subr.bf16.mxu0 %v5006
        %5752 = vmatpush1.bf16.msra.mxu0 %v5005
        %5753 = vmatprep.subr.bf16.mxu0 %v5010
        %5754 = vmatpush1.bf16.msra.mxu0 %v5009
        %5755 = vmatprep.subr.bf16.mxu0 %v5014
        %5756 = vmatpush1.bf16.msra.mxu0 %v5013
        %5757 = vmatprep.subr.bf16.mxu0 %v5018
        %5758 = vmatpush1.bf16.msra.mxu0 %v5017
        %5759 = vmatprep.subr.bf16.mxu0 %v5022
        %5760 = vmatpush1.bf16.msra.mxu0 %v5021
        %5761 = vmatprep.subr.bf16.mxu0 %v5026
        %5762 = vmatpush1.bf16.msra.mxu0 %v5025
        %5763 = vmatprep.subr.bf16.mxu0 %v5030
        %5764 = vmatpush1.bf16.msra.mxu0 %v5029
        %5765 = vmatprep.mubr.bf16.mxu0 %v5140
        %5766 = vmatmul.mubr.bf16.gmra.mrb[0].mxu0 %v5139
        %v5767 = vpop.f32.mrb[0].mxu0
        %v5768 = vadd.f32 %v5727, %v5767
        %v5769 = vpop.f32.mrb[0].mxu0
        %v5770 = vadd.f32 %v5729, %v5769
        %v5771 = vpop.f32.mrb[0].mxu0
        %v5772 = vpop.f32.mrb[0].mxu0
        %5773 = vdwg.mxu0
        %5774 = vmatprep.subr.bf16.mxu0 %v5034
        %5775 = vmatpush1.bf16.msra.mxu0 %v5033
        %5776 = vmatprep.subr.bf16.mxu0 %v5038
        %5777 = vmatpush1.bf16.msra.mxu0 %v5037
        %5778 = vmatprep.subr.bf16.mxu0 %v5042
        %5779 = vmatpush1.bf16.msra.mxu0 %v5041
        %5780 = vmatprep.subr.bf16.mxu0 %v5046
        %5781 = vmatpush1.bf16.msra.mxu0 %v5045
        %5782 = vmatprep.subr.bf16.mxu0 %v5050
        %5783 = vmatpush1.bf16.msra.mxu0 %v5049
        %5784 = vmatprep.subr.bf16.mxu0 %v5054
        %5785 = vmatpush1.bf16.msra.mxu0 %v5053
        %5786 = vmatprep.subr.bf16.mxu0 %v5058
        %5787 = vmatpush1.bf16.msra.mxu0 %v5057
        %5788 = vmatprep.subr.bf16.mxu0 %v5062
        %5789 = vmatpush1.bf16.msra.mxu0 %v5061
        %5790 = vmatprep.subr.bf16.mxu0 %v5066
        %5791 = vmatpush1.bf16.msra.mxu0 %v5065
        %5792 = vmatprep.subr.bf16.mxu0 %v5070
        %5793 = vmatpush1.bf16.msra.mxu0 %v5069
        %5794 = vmatprep.subr.bf16.mxu0 %v5074
        %5795 = vmatpush1.bf16.msra.mxu0 %v5073
        %5796 = vmatprep.subr.bf16.mxu0 %v5078
        %5797 = vmatpush1.bf16.msra.mxu0 %v5077
        %5798 = vmatprep.subr.bf16.mxu0 %v5082
        %5799 = vmatpush1.bf16.msra.mxu0 %v5081
        %5800 = vmatprep.subr.bf16.mxu0 %v5086
        %5801 = vmatpush1.bf16.msra.mxu0 %v5085
        %5802 = vmatprep.subr.bf16.mxu0 %v5090
        %5803 = vmatpush1.bf16.msra.mxu0 %v5089
        %5804 = vmatprep.subr.bf16.mxu0 %v5094
        %5805 = vmatpush1.bf16.msra.mxu0 %v5093
        %5806 = vmatprep.mubr.bf16.mxu0 %v5142
        %5807 = vmatmul.mubr.bf16.gmra.mrb[0].mxu0 %v5141
        %v5808 = vpop.f32.mrb[0].mxu0
        %v5809 = vadd.f32 %v5768, %v5808
        %v5810 = vpop.f32.mrb[0].mxu0
        %v5811 = vadd.f32 %v5770, %v5810
        %v5812 = vpop.f32.mrb[0].mxu0
        %v5813 = vpop.f32.mrb[0].mxu0
        %5814 = vdwg.mxu0
        %v5815 = vld [vmem:[#allocation2] sm:$0xff]
        %v5816 = vpack.c.bf16 %v5481, %v5481
        %v5817 = vpack.c.bf16 %v5483, %v5483
        %v5818 = vpack.c.bf16 %v5809, %v5809
        %v5819 = vpack.c.bf16 %v5811, %v5811
        %v5820 = vld [vmem:[#allocation9] sm:$0xf]
        %v5821 = vld [vmem:[#allocation9 + $0x4] sm:$0xf]
        %v5822 = vld [vmem:[#allocation9 + $0x8] sm:$0xf]
        %v5823 = vld [vmem:[#allocation9 + $0xc] sm:$0xf]
        %v5824 = vld [vmem:[#allocation9 + $0x10] sm:$0xf]
        %v5825 = vld [vmem:[#allocation9 + $0x14] sm:$0xf]
        %v5826 = vld [vmem:[#allocation9 + $0x18] sm:$0xf]
        %v5827 = vld [vmem:[#allocation9 + $0x1c] sm:$0xf]
        %v5828 = vld [vmem:[#allocation9 + $0x20] sm:$0xf]
        %v5829 = vld [vmem:[#allocation9 + $0x24] sm:$0xf]
        %v5830 = vld [vmem:[#allocation9 + $0x28] sm:$0xf]
        %v5831 = vld [vmem:[#allocation9 + $0x2c] sm:$0xf]
        %v5832 = vld [vmem:[#allocation9 + $0x30] sm:$0xf]
        %v5833 = vld [vmem:[#allocation9 + $0x34] sm:$0xf]
        %v5834 = vld [vmem:[#allocation9 + $0x38] sm:$0xf]
        %v5835 = vld [vmem:[#allocation9 + $0x3c] sm:$0xf]
        %v5836 = vld [vmem:[#allocation9 + $0x40] sm:$0xf]
        %v5837 = vld [vmem:[#allocation9 + $0x44] sm:$0xf]
        %v5838 = vld [vmem:[#allocation9 + $0x48] sm:$0xf]
        %v5839 = vld [vmem:[#allocation9 + $0x4c] sm:$0xf]
        %v5840 = vld [vmem:[#allocation9 + $0x50] sm:$0xf]
        %v5841 = vld [vmem:[#allocation9 + $0x54] sm:$0xf]
        %v5842 = vld [vmem:[#allocation9 + $0x58] sm:$0xf]
        %v5843 = vld [vmem:[#allocation9 + $0x5c] sm:$0xf]
        %v5844 = vld [vmem:[#allocation9 + $0x60] sm:$0xf]
        %v5845 = vld [vmem:[#allocation9 + $0x64] sm:$0xf]
        %v5846 = vld [vmem:[#allocation9 + $0x68] sm:$0xf]
        %v5847 = vld [vmem:[#allocation9 + $0x6c] sm:$0xf]
        %v5848 = vld [vmem:[#allocation9 + $0x70] sm:$0xf]
        %v5849 = vld [vmem:[#allocation9 + $0x74] sm:$0xf]
        %v5850 = vld [vmem:[#allocation9 + $0x78] sm:$0xf]
        %v5851 = vld [vmem:[#allocation9 + $0x7c] sm:$0xf]
        %v5852 = vld [vmem:[#allocation9 + $0x80] sm:$0xf]
        %v5853 = vld [vmem:[#allocation9 + $0x84] sm:$0xf]
        %v5854 = vld [vmem:[#allocation9 + $0x88] sm:$0xf]
        %v5855 = vld [vmem:[#allocation9 + $0x8c] sm:$0xf]
        %v5856 = vld [vmem:[#allocation9 + $0x90] sm:$0xf]
        %v5857 = vld [vmem:[#allocation9 + $0x94] sm:$0xf]
        %v5858 = vld [vmem:[#allocation9 + $0x98] sm:$0xf]
        %v5859 = vld [vmem:[#allocation9 + $0x9c] sm:$0xf]
        %v5860 = vld [vmem:[#allocation9 + $0xa0] sm:$0xf]
        %v5861 = vld [vmem:[#allocation9 + $0xa4] sm:$0xf]
        %v5862 = vld [vmem:[#allocation9 + $0xa8] sm:$0xf]
        %v5863 = vld [vmem:[#allocation9 + $0xac] sm:$0xf]
        %v5864 = vld [vmem:[#allocation9 + $0xb0] sm:$0xf]
        %v5865 = vld [vmem:[#allocation9 + $0xb4] sm:$0xf]
        %v5866 = vld [vmem:[#allocation9 + $0xb8] sm:$0xf]
        %v5867 = vld [vmem:[#allocation9 + $0xbc] sm:$0xf]
        %v5868 = vld [vmem:[#allocation9 + $0xc0] sm:$0xf]
        %v5869 = vld [vmem:[#allocation9 + $0xc4] sm:$0xf]
        %v5870 = vld [vmem:[#allocation9 + $0xc8] sm:$0xf]
        %v5871 = vld [vmem:[#allocation9 + $0xcc] sm:$0xf]
        %v5872 = vld [vmem:[#allocation9 + $0xd0] sm:$0xf]
        %v5873 = vld [vmem:[#allocation9 + $0xd4] sm:$0xf]
        %v5874 = vld [vmem:[#allocation9 + $0xd8] sm:$0xf]
        %v5875 = vld [vmem:[#allocation9 + $0xdc] sm:$0xf]
        %v5876 = vld [vmem:[#allocation9 + $0xe0] sm:$0xf]
        %v5877 = vld [vmem:[#allocation9 + $0xe4] sm:$0xf]
        %v5878 = vld [vmem:[#allocation9 + $0xe8] sm:$0xf]
        %v5879 = vld [vmem:[#allocation9 + $0xec] sm:$0xf]
        %v5880 = vld [vmem:[#allocation9 + $0xf0] sm:$0xf]
        %v5881 = vld [vmem:[#allocation9 + $0xf4] sm:$0xf]
        %v5882 = vld [vmem:[#allocation9 + $0xf8] sm:$0xf]
        %v5883 = vld [vmem:[#allocation9 + $0xfc] sm:$0xf]
        %v5948 = vunpack.c.l.b16 %v5820
        %v5949 = vunpack.c.l.b16 %v5821
        %v5950 = vunpack.c.l.b16 %v5822
        %v5951 = vunpack.c.l.b16 %v5823
        %v5952 = vunpack.c.l.b16 %v5824
        %v5953 = vunpack.c.l.b16 %v5825
        %v5954 = vunpack.c.l.b16 %v5826
        %v5955 = vunpack.c.l.b16 %v5827
        %v5956 = vunpack.c.l.b16 %v5828
        %v5957 = vunpack.c.l.b16 %v5829
        %v5958 = vunpack.c.l.b16 %v5830
        %v5959 = vunpack.c.l.b16 %v5831
        %v5960 = vunpack.c.l.b16 %v5832
        %v5961 = vunpack.c.l.b16 %v5833
        %v5962 = vunpack.c.l.b16 %v5834
        %v5963 = vunpack.c.l.b16 %v5835
        %v5964 = vunpack.c.l.b16 %v5836
        %v5965 = vunpack.c.l.b16 %v5837
        %v5966 = vunpack.c.l.b16 %v5838
        %v5967 = vunpack.c.l.b16 %v5839
        %v5968 = vunpack.c.l.b16 %v5840
        %v5969 = vunpack.c.l.b16 %v5841
        %v5970 = vunpack.c.l.b16 %v5842
        %v5971 = vunpack.c.l.b16 %v5843
        %v5972 = vunpack.c.l.b16 %v5844
        %v5973 = vunpack.c.l.b16 %v5845
        %v5974 = vunpack.c.l.b16 %v5846
        %v5975 = vunpack.c.l.b16 %v5847
        %v5976 = vunpack.c.l.b16 %v5848
        %v5977 = vunpack.c.l.b16 %v5849
        %v5978 = vunpack.c.l.b16 %v5850
        %v5979 = vunpack.c.l.b16 %v5851
        %v5980 = vunpack.c.l.b16 %v5852
        %v5981 = vunpack.c.l.b16 %v5853
        %v5982 = vunpack.c.l.b16 %v5854
        %v5983 = vunpack.c.l.b16 %v5855
        %v5984 = vunpack.c.l.b16 %v5856
        %v5985 = vunpack.c.l.b16 %v5857
        %v5986 = vunpack.c.l.b16 %v5858
        %v5987 = vunpack.c.l.b16 %v5859
        %v5988 = vunpack.c.l.b16 %v5860
        %v5989 = vunpack.c.l.b16 %v5861
        %v5990 = vunpack.c.l.b16 %v5862
        %v5991 = vunpack.c.l.b16 %v5863
        %v5992 = vunpack.c.l.b16 %v5864
        %v5993 = vunpack.c.l.b16 %v5865
        %v5994 = vunpack.c.l.b16 %v5866
        %v5995 = vunpack.c.l.b16 %v5867
        %v5996 = vunpack.c.l.b16 %v5868
        %v5997 = vunpack.c.l.b16 %v5869
        %v5998 = vunpack.c.l.b16 %v5870
        %v5999 = vunpack.c.l.b16 %v5871
        %v6000 = vunpack.c.l.b16 %v5872
        %v6001 = vunpack.c.l.b16 %v5873
        %v6002 = vunpack.c.l.b16 %v5874
        %v6003 = vunpack.c.l.b16 %v5875
        %v6004 = vunpack.c.l.b16 %v5876
        %v6005 = vunpack.c.l.b16 %v5877
        %v6006 = vunpack.c.l.b16 %v5878
        %v6007 = vunpack.c.l.b16 %v5879
        %v6008 = vunpack.c.l.b16 %v5880
        %v6009 = vunpack.c.l.b16 %v5881
        %v6010 = vunpack.c.l.b16 %v5882
        %v6011 = vunpack.c.l.b16 %v5883
        %v6012 = vpack.c.b16 %v5949, %v5948
        %v6013 = vpack.c.b16 %v5951, %v5950
        %v6014 = vpack.c.b16 %v5953, %v5952
        %v6015 = vpack.c.b16 %v5955, %v5954
        %v6016 = vpack.c.b16 %v5957, %v5956
        %v6017 = vpack.c.b16 %v5959, %v5958
        %v6018 = vpack.c.b16 %v5961, %v5960
        %v6019 = vpack.c.b16 %v5963, %v5962
        %v6020 = vpack.c.b16 %v5965, %v5964
        %v6021 = vpack.c.b16 %v5967, %v5966
        %v6022 = vpack.c.b16 %v5969, %v5968
        %v6023 = vpack.c.b16 %v5971, %v5970
        %v6024 = vpack.c.b16 %v5973, %v5972
        %v6025 = vpack.c.b16 %v5975, %v5974
        %v6026 = vpack.c.b16 %v5977, %v5976
        %v6027 = vpack.c.b16 %v5979, %v5978
        %v6028 = vpack.c.b16 %v5981, %v5980
        %v6029 = vpack.c.b16 %v5983, %v5982
        %v6030 = vpack.c.b16 %v5985, %v5984
        %v6031 = vpack.c.b16 %v5987, %v5986
        %v6032 = vpack.c.b16 %v5989, %v5988
        %v6033 = vpack.c.b16 %v5991, %v5990
        %v6034 = vpack.c.b16 %v5993, %v5992
        %v6035 = vpack.c.b16 %v5995, %v5994
        %v6036 = vpack.c.b16 %v5997, %v5996
        %v6037 = vpack.c.b16 %v5999, %v5998
        %v6038 = vpack.c.b16 %v6001, %v6000
        %v6039 = vpack.c.b16 %v6003, %v6002
        %v6040 = vpack.c.b16 %v6005, %v6004
        %v6041 = vpack.c.b16 %v6007, %v6006
        %v6042 = vpack.c.b16 %v6009, %v6008
        %v6043 = vpack.c.b16 %v6011, %v6010
        %6076 = vmatprep.subr.bf16.mxu0 0
        %6077 = vmatpush1.bf16.msra.mxu0 %v6012
        %6078 = vmatprep.subr.bf16.mxu0 0
        %6079 = vmatpush1.bf16.msra.mxu0 %v6013
        %6080 = vmatprep.subr.bf16.mxu0 0
        %6081 = vmatpush1.bf16.msra.mxu0 %v6014
        %6082 = vmatprep.subr.bf16.mxu0 0
        %6083 = vmatpush1.bf16.msra.mxu0 %v6015
        %6084 = vmatprep.subr.bf16.mxu0 0
        %6085 = vmatpush1.bf16.msra.mxu0 %v6016
        %6086 = vmatprep.subr.bf16.mxu0 0
        %6087 = vmatpush1.bf16.msra.mxu0 %v6017
        %6088 = vmatprep.subr.bf16.mxu0 0
        %6089 = vmatpush1.bf16.msra.mxu0 %v6018
        %6090 = vmatprep.subr.bf16.mxu0 0
        %6091 = vmatpush1.bf16.msra.mxu0 %v6019
        %6092 = vmatprep.subr.bf16.mxu0 0
        %6093 = vmatpush1.bf16.msra.mxu0 %v6020
        %6094 = vmatprep.subr.bf16.mxu0 0
        %6095 = vmatpush1.bf16.msra.mxu0 %v6021
        %6096 = vmatprep.subr.bf16.mxu0 0
        %6097 = vmatpush1.bf16.msra.mxu0 %v6022
        %6098 = vmatprep.subr.bf16.mxu0 0
        %6099 = vmatpush1.bf16.msra.mxu0 %v6023
        %6100 = vmatprep.subr.bf16.mxu0 0
        %6101 = vmatpush1.bf16.msra.mxu0 %v6024
        %6102 = vmatprep.subr.bf16.mxu0 0
        %6103 = vmatpush1.bf16.msra.mxu0 %v6025
        %6104 = vmatprep.subr.bf16.mxu0 0
        %6105 = vmatpush1.bf16.msra.mxu0 %v6026
        %6106 = vmatprep.subr.bf16.mxu0 0
        %6107 = vmatpush1.bf16.msra.mxu0 %v6027
        %6108 = vmatprep.mubr.bf16.mxu0 %v5817
        %6109 = vmatmul.mubr.bf16.gmra.mrb[0].mxu0 %v5816
        %v6110 = vpop.f32.mrb[0].mxu0
        %v6111 = vadd.f32 0.0, %v6110
        %v6112 = vpop.f32.mrb[0].mxu0
        %v6113 = vpop.f32.mrb[0].mxu0
        %v6114 = vpop.f32.mrb[0].mxu0
        %6115 = vdwg.mxu0
        %6116 = vmatprep.subr.bf16.mxu0 0
        %6117 = vmatpush1.bf16.msra.mxu0 %v6028
        %6118 = vmatprep.subr.bf16.mxu0 0
        %6119 = vmatpush1.bf16.msra.mxu0 %v6029
        %6120 = vmatprep.subr.bf16.mxu0 0
        %6121 = vmatpush1.bf16.msra.mxu0 %v6030
        %6122 = vmatprep.subr.bf16.mxu0 0
        %6123 = vmatpush1.bf16.msra.mxu0 %v6031
        %6124 = vmatprep.subr.bf16.mxu0 0
        %6125 = vmatpush1.bf16.msra.mxu0 %v6032
        %6126 = vmatprep.subr.bf16.mxu0 0
        %6127 = vmatpush1.bf16.msra.mxu0 %v6033
        %6128 = vmatprep.subr.bf16.mxu0 0
        %6129 = vmatpush1.bf16.msra.mxu0 %v6034
        %6130 = vmatprep.subr.bf16.mxu0 0
        %6131 = vmatpush1.bf16.msra.mxu0 %v6035
        %6132 = vmatprep.subr.bf16.mxu0 0
        %6133 = vmatpush1.bf16.msra.mxu0 %v6036
        %6134 = vmatprep.subr.bf16.mxu0 0
        %6135 = vmatpush1.bf16.msra.mxu0 %v6037
        %6136 = vmatprep.subr.bf16.mxu0 0
        %6137 = vmatpush1.bf16.msra.mxu0 %v6038
        %6138 = vmatprep.subr.bf16.mxu0 0
        %6139 = vmatpush1.bf16.msra.mxu0 %v6039
        %6140 = vmatprep.subr.bf16.mxu0 0
        %6141 = vmatpush1.bf16.msra.mxu0 %v6040
        %6142 = vmatprep.subr.bf16.mxu0 0
        %6143 = vmatpush1.bf16.msra.mxu0 %v6041
        %6144 = vmatprep.subr.bf16.mxu0 0
        %6145 = vmatpush1.bf16.msra.mxu0 %v6042
        %6146 = vmatprep.subr.bf16.mxu0 0
        %6147 = vmatpush1.bf16.msra.mxu0 %v6043
        %6148 = vmatprep.mubr.bf16.mxu0 %v5819
        %6149 = vmatmul.mubr.bf16.gmra.mrb[0].mxu0 %v5818
        %v6150 = vpop.f32.mrb[0].mxu0
        %v6151 = vadd.f32 %v6111, %v6150
        %v6152 = vpop.f32.mrb[0].mxu0
        %v6153 = vpop.f32.mrb[0].mxu0
        %v6154 = vpop.f32.mrb[0].mxu0
        %6155 = vdwg.mxu0
        %v6156 = vadd.f32 %v5815, %v6151
        %6157 = vst [vmem:[#allocation2] sm:$0xff] %v6156
        %v6158 = vld [vmem:[#allocation3] sm:$0xff]
        %v6159 = vsel %vm431, 1, 0
        %v6160 = vsel %vm432, 1, 0
        %v6161 = vcvt.s32.f32 %v6159
        %v6162 = vcvt.s32.f32 %v6160
        %v6163 = vadd.f32 %v6161, %v6162
        %6164 = vadd.xlane.f32.xlu0 %v6163
        %v6165 = vpop.xlane.xlu0 %6164
        %v6166 = vadd.f32 %v6158, %v6165
        %vm6167 = vcmask 7168
        %6168 = vst.msk [vmem:[#allocation3] sm:$0xff] %vm6167, %v6166
        %p6169 = scmp.eq.s32.totalorder %s32, 1
        // Predicated region
        $region77: #{tpu_custom_call.1} parent=51 // pred_check
          %p6170 = pneg %p6169
        $region78: #{tpu_custom_call.1} parent=51 // pred_check_branch
          %6172 = sbr.rel (%p6170) target = $region80
        $region79: #{tpu_custom_call.1} parent=51 // pred_region
          %v6173 = vld [vmem:[#allocation3] sm:$0xff]
          %v6174 = vmax.f32 %v6173, 1.0
          %v6175 = vld [vmem:[#allocation2] sm:$0xff]
          %6177 = vset.pattern.permute.xlu0 0
          %6178 = vperm.xlu0 %6177, %v6174
          %v6179 = vpop.permute.xlu0 %6178
          %v6181 = vrcp.pop %v6179
          %v6182 = vmul.f32 %v6175, %v6181
          %v6183 = vld [vmem:[#allocation10] sm:$0xff]
          %v6184 = vld [vmem:[#allocation10 + $0x8] sm:$0xff]
          %v6185 = vld [vmem:[#allocation10 + $0x10] sm:$0xff]
          %v6186 = vld [vmem:[#allocation10 + $0x18] sm:$0xff]
          %v6187 = vld [vmem:[#allocation10 + $0x20] sm:$0xff]
          %v6188 = vld [vmem:[#allocation10 + $0x28] sm:$0xff]
          %v6189 = vld [vmem:[#allocation10 + $0x30] sm:$0xff]
          %v6190 = vld [vmem:[#allocation10 + $0x38] sm:$0xff]
          %v6191 = vld [vmem:[#allocation10 + $0x40] sm:$0xff]
          %v6192 = vld [vmem:[#allocation10 + $0x48] sm:$0xff]
          %v6193 = vld [vmem:[#allocation10 + $0x50] sm:$0xff]
          %v6194 = vld [vmem:[#allocation10 + $0x58] sm:$0xff]
          %v6195 = vld [vmem:[#allocation10 + $0x60] sm:$0xff]
          %v6196 = vld [vmem:[#allocation10 + $0x68] sm:$0xff]
          %v6197 = vld [vmem:[#allocation10 + $0x70] sm:$0xff]
          %v6198 = vld [vmem:[#allocation10 + $0x78] sm:$0xff]
          %v6199 = vld [vmem:[%s5] sm:$0x1]
          %v6201 = vlaneseq
          %v6202 = vshrl.u32 %v6201, 7
          %v6203 = vsub.s32 0, %v6202
          %v6204 = vrot.slane %v6199, %v6203
          %6206 = vmatprep.subr.mxu0 0.0
          %6207 = vmatpush1.msra.mxu0 %v6183
          %6208 = vmatprep.subr.mxu0 0.0
          %6209 = vmatpush1.msra.mxu0 %v6184
          %6210 = vmatprep.subr.mxu0 0.0
          %6211 = vmatpush1.msra.mxu0 %v6185
          %6212 = vmatprep.subr.mxu0 0.0
          %6213 = vmatpush1.msra.mxu0 %v6186
          %6214 = vmatprep.subr.mxu0 0.0
          %6215 = vmatpush1.msra.mxu0 %v6187
          %6216 = vmatprep.subr.mxu0 0.0
          %6217 = vmatpush1.msra.mxu0 %v6188
          %6218 = vmatprep.subr.mxu0 0.0
          %6219 = vmatpush1.msra.mxu0 %v6189
          %6220 = vmatprep.subr.mxu0 0.0
          %6221 = vmatpush1.msra.mxu0 %v6190
          %6222 = vmatprep.subr.mxu0 0.0
          %6223 = vmatpush1.msra.mxu0 %v6191
          %6224 = vmatprep.subr.mxu0 0.0
          %6225 = vmatpush1.msra.mxu0 %v6192
          %6226 = vmatprep.subr.mxu0 0.0
          %6227 = vmatpush1.msra.mxu0 %v6193
          %6228 = vmatprep.subr.mxu0 0.0
          %6229 = vmatpush1.msra.mxu0 %v6194
          %6230 = vmatprep.subr.mxu0 0.0
          %6231 = vmatpush1.msra.mxu0 %v6195
          %6232 = vmatprep.subr.mxu0 0.0
          %6233 = vmatpush1.msra.mxu0 %v6196
          %6234 = vmatprep.subr.mxu0 0.0
          %6235 = vmatpush1.msra.mxu0 %v6197
          %6236 = vmatprep.subr.mxu0 0.0
          %6237 = vmatpush1.msra.mxu0 %v6198
          %6238 = vmatprep.subr.mxu0 0.0
          %6239 = vmatpush1.msra.mxu0 0.0
          %6240 = vmatprep.subr.mxu0 0.0
          %6241 = vmatpush1.msra.mxu0 0.0
          %6242 = vmatprep.subr.mxu0 0.0
          %6243 = vmatpush1.msra.mxu0 0.0
          %6244 = vmatprep.subr.mxu0 0.0
          %6245 = vmatpush1.msra.mxu0 0.0
          %6246 = vmatprep.subr.mxu0 0.0
          %6247 = vmatpush1.msra.mxu0 0.0
          %6248 = vmatprep.subr.mxu0 0.0
          %6249 = vmatpush1.msra.mxu0 0.0
          %6250 = vmatprep.subr.mxu0 0.0
          %6251 = vmatpush1.msra.mxu0 0.0
          %6252 = vmatprep.subr.mxu0 0.0
          %6253 = vmatpush1.msra.mxu0 0.0
          %6254 = vmatprep.subr.mxu0 0.0
          %6255 = vmatpush1.msra.mxu0 0.0
          %6256 = vmatprep.subr.mxu0 0.0
          %6257 = vmatpush1.msra.mxu0 0.0
          %6258 = vmatprep.subr.mxu0 0.0
          %6259 = vmatpush1.msra.mxu0 0.0
          %6260 = vmatprep.subr.mxu0 0.0
          %6261 = vmatpush1.msra.mxu0 0.0
          %6262 = vmatprep.subr.mxu0 0.0
          %6263 = vmatpush1.msra.mxu0 0.0
          %6264 = vmatprep.subr.mxu0 0.0
          %6265 = vmatpush1.msra.mxu0 0.0
          %6266 = vmatprep.subr.mxu0 0.0
          %6267 = vmatpush1.msra.mxu0 0.0
          %6268 = vmatprep.subr.mxu0 0.0
          %6269 = vmatpush1.msra.mxu0 0.0
          %6270 = vmatprep.mubr.f32.mxu0 0.0
          %6271 = vmatmul.mubr.f32.gmra.mrb[0].mxu0 %v6182
          %v6272 = vpop.f32.mrb[0].mxu0
          %v6273 = vadd.f32 %v6204, %v6272
          %v6274 = vpop.f32.mrb[0].mxu0
          %6275 = vdwg.mxu0
          %v6276 = vtanh.pop %v6273
          %v6277 = vld [vmem:[#allocation12] sm:$0xff]
          %v6278 = vld [vmem:[#allocation12 + $0x8] sm:$0xff]
          %v6279 = vld [vmem:[#allocation12 + $0x10] sm:$0xff]
          %v6280 = vld [vmem:[#allocation12 + $0x18] sm:$0xff]
          %v6281 = vld [vmem:[#allocation12 + $0x20] sm:$0xff]
          %v6282 = vld [vmem:[#allocation12 + $0x28] sm:$0xff]
          %v6283 = vld [vmem:[#allocation12 + $0x30] sm:$0xff]
          %v6284 = vld [vmem:[#allocation12 + $0x38] sm:$0xff]
          %v6285 = vld [vmem:[#allocation12 + $0x40] sm:$0xff]
          %v6286 = vld [vmem:[#allocation12 + $0x48] sm:$0xff]
          %v6287 = vld [vmem:[#allocation12 + $0x50] sm:$0xff]
          %v6288 = vld [vmem:[#allocation12 + $0x58] sm:$0xff]
          %v6289 = vld [vmem:[#allocation12 + $0x60] sm:$0xff]
          %v6290 = vld [vmem:[#allocation12 + $0x68] sm:$0xff]
          %v6291 = vld [vmem:[#allocation12 + $0x70] sm:$0xff]
          %v6292 = vld [vmem:[#allocation12 + $0x78] sm:$0xff]
          %v6293 = vld [vmem:[%s7] sm:$0x1]
          %v6295 = vlaneseq
          %v6296 = vshrl.u32 %v6295, 7
          %v6297 = vsub.s32 0, %v6296
          %v6298 = vrot.slane %v6293, %v6297
          %6300 = vmatprep.subr.mxu0 0.0
          %6301 = vmatpush1.msra.mxu0 %v6277
          %6302 = vmatprep.subr.mxu0 0.0
          %6303 = vmatpush1.msra.mxu0 %v6278
          %6304 = vmatprep.subr.mxu0 0.0
          %6305 = vmatpush1.msra.mxu0 %v6279
          %6306 = vmatprep.subr.mxu0 0.0
          %6307 = vmatpush1.msra.mxu0 %v6280
          %6308 = vmatprep.subr.mxu0 0.0
          %6309 = vmatpush1.msra.mxu0 %v6281
          %6310 = vmatprep.subr.mxu0 0.0
          %6311 = vmatpush1.msra.mxu0 %v6282
          %6312 = vmatprep.subr.mxu0 0.0
          %6313 = vmatpush1.msra.mxu0 %v6283
          %6314 = vmatprep.subr.mxu0 0.0
          %6315 = vmatpush1.msra.mxu0 %v6284
          %6316 = vmatprep.subr.mxu0 0.0
          %6317 = vmatpush1.msra.mxu0 %v6285
          %6318 = vmatprep.subr.mxu0 0.0
          %6319 = vmatpush1.msra.mxu0 %v6286
          %6320 = vmatprep.subr.mxu0 0.0
          %6321 = vmatpush1.msra.mxu0 %v6287
          %6322 = vmatprep.subr.mxu0 0.0
          %6323 = vmatpush1.msra.mxu0 %v6288
          %6324 = vmatprep.subr.mxu0 0.0
          %6325 = vmatpush1.msra.mxu0 %v6289
          %6326 = vmatprep.subr.mxu0 0.0
          %6327 = vmatpush1.msra.mxu0 %v6290
          %6328 = vmatprep.subr.mxu0 0.0
          %6329 = vmatpush1.msra.mxu0 %v6291
          %6330 = vmatprep.subr.mxu0 0.0
          %6331 = vmatpush1.msra.mxu0 %v6292
          %6332 = vmatprep.subr.mxu0 0.0
          %6333 = vmatpush1.msra.mxu0 0.0
          %6334 = vmatprep.subr.mxu0 0.0
          %6335 = vmatpush1.msra.mxu0 0.0
          %6336 = vmatprep.subr.mxu0 0.0
          %6337 = vmatpush1.msra.mxu0 0.0
          %6338 = vmatprep.subr.mxu0 0.0
          %6339 = vmatpush1.msra.mxu0 0.0
          %6340 = vmatprep.subr.mxu0 0.0
          %6341 = vmatpush1.msra.mxu0 0.0
          %6342 = vmatprep.subr.mxu0 0.0
          %6343 = vmatpush1.msra.mxu0 0.0
          %6344 = vmatprep.subr.mxu0 0.0
          %6345 = vmatpush1.msra.mxu0 0.0
          %6346 = vmatprep.subr.mxu0 0.0
          %6347 = vmatpush1.msra.mxu0 0.0
          %6348 = vmatprep.subr.mxu0 0.0
          %6349 = vmatpush1.msra.mxu0 0.0
          %6350 = vmatprep.subr.mxu0 0.0
          %6351 = vmatpush1.msra.mxu0 0.0
          %6352 = vmatprep.subr.mxu0 0.0
          %6353 = vmatpush1.msra.mxu0 0.0
          %6354 = vmatprep.subr.mxu0 0.0
          %6355 = vmatpush1.msra.mxu0 0.0
          %6356 = vmatprep.subr.mxu0 0.0
          %6357 = vmatpush1.msra.mxu0 0.0
          %6358 = vmatprep.subr.mxu0 0.0
          %6359 = vmatpush1.msra.mxu0 0.0
          %6360 = vmatprep.subr.mxu0 0.0
          %6361 = vmatpush1.msra.mxu0 0.0
          %6362 = vmatprep.subr.mxu0 0.0
          %6363 = vmatpush1.msra.mxu0 0.0
          %6364 = vmatprep.mubr.f32.mxu0 0.0
          %6365 = vmatmul.mubr.f32.gmra.mrb[0].mxu0 %v6276
          %v6366 = vpop.f32.mrb[0].mxu0
          %v6367 = vadd.f32 %v6298, %v6366
          %v6368 = vpop.f32.mrb[0].mxu0
          %6369 = vdwg.mxu0
          %6370 = vst [vmem:[%s406] sm:$0xff] %v6367
        $region80: #{tpu_custom_call.1} parent=51 // pred_fallthru
          _
        %s6371 = sand.u32 %s227, 1
        %s6372 = scalar_lea.sflag [#allocation6], %s6371
        %s6373 = sand.u32 %s227, 1
        %s6374 = smul.addr %s6373, 8
        %s6375 = scalar_lea.vmem [#allocation13], %s6374
        // Predicated region
        $region81: #{tpu_custom_call.1} parent=51 // pred_check
          %p6376 = pneg %p237
        $region82: #{tpu_custom_call.1} parent=51 // pred_check_branch
          %6378 = sbr.rel (%p6376) target = $region84
        $region83: #{tpu_custom_call.1} parent=51 // pred_region
          %s6380 = ssub.s32 128, 128
          %6381 = vsyncadd %s6372, %s6380
          %s6382 = smul.addr %s31, 128
          %s6383 = scalar_lea.hbm %s8, %s6382
          %s6385 = sshll.u32 %s6375, 4
          %s6386 = int_to_ptr.vmem [resolvable:$true] %s6385
          %6388 = dma.vmem_to_hbm [thread:$0]  %s6386, 128, %s6383, %s6372
        $region84: #{tpu_custom_call.1} parent=51 // pred_fallthru
          _
      $region52: #{tpu_custom_call.1} parent=5 // pred_fallthru
        _
      %p6389 = scmp.le.s32.totalorder 2, %s22
      // Predicated region
      $region85: #{tpu_custom_call.1} parent=5 // pred_check
        %p6390 = pneg %p6389
      $region86: #{tpu_custom_call.1} parent=5 // pred_check_branch
        %6392 = sbr.rel (%p6390) target = $region88
      $region87: #{tpu_custom_call.1} parent=5 // pred_region
        %s6393 = ssub.s32 %s22, 2
        // Predicated region
        $region89: #{tpu_custom_call.1} parent=87 // pred_check
          %p6394 = pneg %p243
        $region90: #{tpu_custom_call.1} parent=87 // pred_check_branch
          %6396 = sbr.rel (%p6394) target = $region92
        $region91: #{tpu_custom_call.1} parent=87 // pred_region
          %s6397 = sand.u32 %s228, 1
          %s6398 = scalar_lea.sflag [#allocation6], %s6397
          %s6399 = sand.u32 %s228, 1
          %s6400 = smul.addr %s6399, 8
          %s6401 = scalar_lea.vmem [#allocation13], %s6400
          %6402 = dma.done %s6398, 128
        $region92: #{tpu_custom_call.1} parent=87 // pred_fallthru
          _
      $region88: #{tpu_custom_call.1} parent=5 // pred_fallthru
        _
    $region6: #{tpu_custom_call.1} parent=1 // loop_footer
      %s26 = sadd.s32 1, %s22
    $region7: #{tpu_custom_call.1} parent=1 // loop_footer_branch
      %21 = sbr.rel target = $region3
    $region8: #{tpu_custom_call.1} parent=1 // loop_exit
      _
    %6403 = vsyncpa [#allocation5], 1
    %s6404 = scalar_lea.sflag [#allocation5], 1
    %6405 = vsyncpa %s6404, 1
    %6406 = vsyncpa [#allocation8], 1
    %6407 = vsyncpa [#allocation11], 1
    %6408 = vsyncpa [#allocation6], 1
    %s6409 = scalar_lea.sflag [#allocation6], 1
    %6410 = vsyncpa %s6409, 1

</llo_original>
